<compile_context>
chip_gen: v7x
topology: tpu7x:2x2x1
jax: 0.10.0
libtpu: 0.0.40
codegen_flags: <defaults>
</compile_context>

<pallas_src>
import functools
import math

import jax
import jax.numpy as jnp
from jax.experimental import pallas as pl
from jax.experimental.pallas import tpu as pltpu


_VMEM_LIMIT = 48 * 1024 * 1024


# ----------------------------------------------------------------------------
# In-kernel helpers
# ----------------------------------------------------------------------------
def _zero_halo(pad_ref):
    """Zero only the 1-px halo strips of the (Hp, Wp, C) pad scratch."""
    Hp, Wp, C = pad_ref.shape
    pad_ref[pl.ds(0, 1), :, :] = jnp.zeros((1, Wp, C), jnp.float32)
    pad_ref[pl.ds(Hp - 1, 1), :, :] = jnp.zeros((1, Wp, C), jnp.float32)
    pad_ref[:, pl.ds(0, 1), :] = jnp.zeros((Hp, 1, C), jnp.float32)
    pad_ref[:, pl.ds(Wp - 1, 1), :] = jnp.zeros((Hp, 1, C), jnp.float32)


def _stage(pad_ref, H, W, c, val_hwc):
    """Write an (H, W, c) f32 activation into the pad scratch interior."""
    pad_ref[pl.ds(1, H), pl.ds(1, W), pl.ds(0, c)] = val_hwc


def _conv3x3(pad_ref, H, W, cin, wk, b):
    """3x3 'same' conv as 9 accumulated MXU matmuls (no im2col patch).

    pad_ref : (H+2, W+2, >=cin) f32 scratch, halo zeroed, activation in [0:cin).
    wk(k)   : returns bf16 (cin, cout) weight for tap k = dy*3 + dx.
    b       : f32 (1, cout) bias.
    Returns f32 (H*W, cout).
    """
    acc = None
    for k in range(9):
        dy, dx = divmod(k, 3)
        xt = pad_ref[pl.ds(dy, H), pl.ds(dx, W), pl.ds(0, cin)]
        xt = xt.astype(jnp.bfloat16).reshape(H * W, cin)
        p = jnp.dot(xt, wk(k), preferred_element_type=jnp.float32)
        acc = p if acc is None else acc + p
    return acc + b


# ----------------------------------------------------------------------------
# Fused kernels
# ----------------------------------------------------------------------------
def _branch1_kernel(x_ref, w1_ref, b1_ref, w2_ref, b2_ref, w3_ref, b3_ref,
                    o_ref, pad_ref):
    # Stand-in branch1 body: conv3x3+ReLU -> conv3x3+ReLU -> conv3x3 + residual.
    # TODO(synk): the real branch1 is VolFormer (SwinIR-style window attention,
    #   depths 8x[6], embed_dim 180) whose source is not provided; the
    #   (n_subs -> n_subs) interface is kept.
    _, H, W, ns = x_ref.shape
    c = w1_ref.shape[-1]

    _zero_halo(pad_ref)
    x_in = x_ref[0]                                                 # (H, W, ns) f32
    _stage(pad_ref, H, W, ns, x_in)

    t = jnp.maximum(_conv3x3(pad_ref, H, W, ns, lambda k: w1_ref[k], b1_ref[...]), 0.0)
    _stage(pad_ref, H, W, c, t.reshape(H, W, c))
    t = jnp.maximum(_conv3x3(pad_ref, H, W, c, lambda k: w2_ref[k], b2_ref[...]), 0.0)
    _stage(pad_ref, H, W, c, t.reshape(H, W, c))
    t = _conv3x3(pad_ref, H, W, c, lambda k: w3_ref[k], b3_ref[...])    # (H*W, ns)
    o_ref[0] = t.reshape(H, W, ns) + x_in                               # residual


def _trunk_kernel(x_ref, hw_ref, hb_ref,
                  aw1_ref, ab1_ref, aw2_ref, ab2_ref,
                  cw1_ref, cb1_ref, cw2_ref, cb2_ref,
                  cwd_ref, cbd_ref, cwu_ref, cbu_ref,
                  o_ref, pad_ref, *, res_scale):
    # BranchUnit (use_tail=False, up_scale=1): head conv + SSPN(3 x SSB) + res.
    _, H, W, cin = x_ref.shape
    nf = hw_ref.shape[-1]

    _zero_halo(pad_ref)
    _stage(pad_ref, H, W, cin, x_ref[0])

    # BranchUnit head conv (no activation).
    f = _conv3x3(pad_ref, H, W, cin, lambda k: hw_ref[k], hb_ref[...])   # (H*W, nf)
    head = f

    # SSPN = 3 x SSB, unrolled; per-SSB weights are stacked on axis 0.
    for s in range(3):
        # SSB.spa : ResBlock = (conv3x3 -> ReLU -> conv3x3) * res_scale + x
        _stage(pad_ref, H, W, nf, f.reshape(H, W, nf))
        t = jnp.maximum(
            _conv3x3(pad_ref, H, W, nf, lambda k, s=s: aw1_ref[s, k], ab1_ref[s]), 0.0)
        _stage(pad_ref, H, W, nf, t.reshape(H, W, nf))
        t = _conv3x3(pad_ref, H, W, nf, lambda k, s=s: aw2_ref[s, k], ab2_ref[s])
        r = t * res_scale + f
        # SSB.spc : ResAttentionBlock = (1x1 -> ReLU -> 1x1 -> CALayer)*rs + x
        u = jnp.dot(r.astype(jnp.bfloat16), cw1_ref[s],
                    preferred_element_type=jnp.float32) + cb1_ref[s]
        u = jnp.maximum(u, 0.0)
        u = jnp.dot(u.astype(jnp.bfloat16), cw2_ref[s],
                    preferred_element_type=jnp.float32) + cb2_ref[s]
        avg = jnp.mean(u, axis=0, keepdims=True)                    # CALayer pool
        h = jnp.maximum(
            jnp.dot(avg, cwd_ref[s], preferred_element_type=jnp.float32)
            + cbd_ref[s], 0.0)
        gate = jax.nn.sigmoid(
            jnp.dot(h, cwu_ref[s], preferred_element_type=jnp.float32)
            + cbu_ref[s])
        f = (u * gate) * res_scale + r

    f = f + head                                                    # SSPN residual
    o_ref[0] = f.reshape(H, W, nf)


def _tail_kernel(lms_ref, t_ref, sw_ref, sb_ref, fw_ref, fb_ref,
                 o_ref, pad_ref):
    # out = final_conv( trunk_out + skip_conv(lms) ) — two convs fused.
    _, H, W, cl = lms_ref.shape
    nf = sw_ref.shape[-1]
    cout = fw_ref.shape[-1]

    _zero_halo(pad_ref)
    _stage(pad_ref, H, W, cl, lms_ref[0])
    y = _conv3x3(pad_ref, H, W, cl, lambda k: sw_ref[k], sb_ref[...])   # skip_conv
    y = y.reshape(H, W, nf) + t_ref[0]                                  # + trunk out
    _stage(pad_ref, H, W, nf, y)
    out = _conv3x3(pad_ref, H, W, nf, lambda k: fw_ref[k], fb_ref[...]) # final conv
    o_ref[0] = out.reshape(H, W, cout)


# ----------------------------------------------------------------------------
# pallas_call wrappers
# ----------------------------------------------------------------------------
def _full(shape):
    return pl.BlockSpec(shape, lambda i, _n=len(shape): (0,) * _n)


def _cparams():
    return pltpu.CompilerParams(dimension_semantics=("parallel",),
                                vmem_limit_bytes=_VMEM_LIMIT)


def branch1_forward(x, p):
    """Stand-in for the VolFormer branch (pre-upsample), as ONE fused kernel."""
    B, H, W, ns = x.shape
    c = p['w1'].shape[-1]
    return pl.pallas_call(
        _branch1_kernel,
        out_shape=jax.ShapeDtypeStruct((B, H, W, ns), jnp.float32),
        grid=(B,),
        in_specs=[pl.BlockSpec((1, H, W, ns), lambda i: (i, 0, 0, 0)),
                  _full((9, ns, c)), _full((1, c)),
                  _full((9, c, c)), _full((1, c)),
                  _full((9, c, ns)), _full((1, ns))],
        out_specs=pl.BlockSpec((1, H, W, ns), lambda i: (i, 0, 0, 0)),
        scratch_shapes=[pltpu.VMEM((H + 2, W + 2, max(ns, c)), jnp.float32)],
        compiler_params=_cparams(),
    )(x, p['w1'], p['b1'], p['w2'], p['b2'], p['w3'], p['b3'])


def trunk_forward(x, p, res_scale):
    """BranchUnit (use_tail=False, up_scale=1): head conv + SSPN in one kernel."""
    B, H, W, cin = x.shape
    nf = p['head_w'].shape[-1]
    mid = p['cwd'].shape[-1]
    kernel = functools.partial(_trunk_kernel, res_scale=float(res_scale))
    return pl.pallas_call(
        kernel,
        out_shape=jax.ShapeDtypeStruct((B, H, W, nf), jnp.float32),
        grid=(B,),
        in_specs=[pl.BlockSpec((1, H, W, cin), lambda i: (i, 0, 0, 0)),
                  _full((9, cin, nf)), _full((1, nf)),
                  _full((3, 9, nf, nf)), _full((3, 1, nf)),
                  _full((3, 9, nf, nf)), _full((3, 1, nf)),
                  _full((3, nf, nf)), _full((3, 1, nf)),
                  _full((3, nf, nf)), _full((3, 1, nf)),
                  _full((3, nf, mid)), _full((3, 1, mid)),
                  _full((3, mid, nf)), _full((3, 1, nf))],
        out_specs=pl.BlockSpec((1, H, W, nf), lambda i: (i, 0, 0, 0)),
        scratch_shapes=[pltpu.VMEM((H + 2, W + 2, max(nf, cin)), jnp.float32)],
        compiler_params=_cparams(),
    )(x, p['head_w'], p['head_b'],
      p['aw1'], p['ab1'], p['aw2'], p['ab2'],
      p['cw1'], p['cb1'], p['cw2'], p['cb2'],
      p['cwd'], p['cbd'], p['cwu'], p['cbu'])


def tail_forward(lms, t, skip_w, skip_b, fin_w, fin_b):
    """out = final_conv(trunk_out + skip_conv(lms)) — fused into one kernel."""
    B, H, W, cl = lms.shape
    nf = t.shape[-1]
    cout = fin_w.shape[-1]
    return pl.pallas_call(
        _tail_kernel,
        out_shape=jax.ShapeDtypeStruct((B, H, W, cout), jnp.float32),
        grid=(B,),
        in_specs=[pl.BlockSpec((1, H, W, cl), lambda i: (i, 0, 0, 0)),
                  pl.BlockSpec((1, H, W, nf), lambda i: (i, 0, 0, 0)),
                  _full((9, cl, nf)), _full((1, nf)),
                  _full((9, nf, cout)), _full((1, cout))],
        out_specs=pl.BlockSpec((1, H, W, cout), lambda i: (i, 0, 0, 0)),
        scratch_shapes=[pltpu.VMEM((H + 2, W + 2, max(nf, cl)), jnp.float32)],
        compiler_params=_cparams(),
    )(lms, t, skip_w, skip_b, fin_w, fin_b)


# ----------------------------------------------------------------------------
# General_VolFormer forward
# ----------------------------------------------------------------------------
def general_volformer_forward(x_nchw, lms_nchw, modality, img_size, params, cfg):
    n_subs, n_ovls, n_colors = cfg['n_subs'], cfg['n_ovls'], cfg['n_colors']
    sca, res_scale = cfg['n_scale'], cfg['res_scale']
    del img_size                                     # unused by the stand-in branch1

    x = jnp.transpose(x_nchw, (0, 2, 3, 1)).astype(jnp.float32)      # NCHW -> NHWC
    lms = jnp.transpose(lms_nchw, (0, 2, 3, 1)).astype(jnp.float32)
    B, H, W, _ = x.shape

    def upsample(z):                                 # nearest-neighbour x`sca`
        # TODO(synk): fuse into the trunk's input staging (read at h//sca, w//sca)
        #   to avoid the HBM write+read of the upsampled tensor.
        return jnp.repeat(jnp.repeat(z, sca, axis=1), sca, axis=2)

    if modality == 'spectral':
        G = math.ceil((n_colors - n_ovls) / (n_subs - n_ovls))
        starts = []
        for g in range(G):
            sta = (n_subs - n_ovls) * g
            end = sta + n_subs
            if end > n_colors:
                end = n_colors
                sta = n_colors - n_subs
            starts.append(sta)
        # All G overlapping band groups in ONE branch1 call over a (G*B,) grid
        # (weights are shared across groups).
        xg = jnp.concatenate([x[..., s:s + n_subs] for s in starts], axis=0)
        yg = branch1_forward(xg, params['branch1'])
        yg = yg.reshape(G, B, H, W, n_subs)
        # Overlap-add + normalisation at LOW resolution (commutes with the
        # nearest-neighbour upsample), then a single upsample.
        y = jnp.zeros((B, H, W, n_colors), jnp.float32)
        counter = jnp.zeros((n_colors,), jnp.float32)
        for g, s in enumerate(starts):
            y = y.at[..., s:s + n_subs].add(yg[g])
            counter = counter.at[s:s + n_subs].add(1.0)
        y = upsample(y / counter[None, None, None, :])
        t = trunk_forward(y, params['trunk'], res_scale)
        out = tail_forward(lms, t, params['skip_w'], params['skip_b'],
                           params['final_w'], params['final_b'])
    elif modality == 'rgb':
        yb = upsample(branch1_forward(x, params['branch1']))
        t = trunk_forward(yb, params['trunk_rgb'], res_scale)
        out = tail_forward(lms, t, params['skip_rgb_w'], params['skip_rgb_b'],
                           params['final_rgb_w'], params['final_rgb_b'])
    else:
        raise ValueError('Not implemented!!!')

    return jnp.transpose(out, (0, 3, 1, 2))                           # NHWC -> NCHW


# ----------------------------------------------------------------------------
# Deterministic parameter init (3x3 weights in per-tap layout (9, Cin, Cout))
# ----------------------------------------------------------------------------
def init_params(key, cfg):
    nf, nc, ns, bfc = cfg['n_feats'], cfg['n_colors'], cfg['n_subs'], cfg['bf']
    mid = max(nf // 16, 1)                              # CALayer reduction=16
    keys = iter(jax.random.split(key, 256))

    def wmat(shape, dtype=jnp.bfloat16, scale=0.1):
        return (scale * jax.random.normal(next(keys), shape, jnp.float32)).astype(dtype)

    def bias(c, scale=0.01):
        return scale * jax.random.normal(next(keys), (1, c), jnp.float32)

    def conv_w(cin, cout):                              # per-tap layout, bf16
        return wmat((9, cin, cout))

    def ssb_p():
        return {'aw1': conv_w(nf, nf), 'ab1': bias(nf),
                'aw2': conv_w(nf, nf), 'ab2': bias(nf),
                'cw1': wmat((nf, nf)), 'cb1': bias(nf),
                'cw2': wmat((nf, nf)), 'cb2': bias(nf),
                'cwd': wmat((nf, mid), jnp.float32), 'cbd': bias(mid),
                'cwu': wmat((mid, nf), jnp.float32), 'cbu': bias(nf)}

    def trunk_p(cin):
        ssbs = [ssb_p() for _ in range(3)]
        out = {'head_w': conv_w(cin, nf), 'head_b': bias(nf)}
        for k in ('aw1', 'ab1', 'aw2', 'ab2', 'cw1', 'cb1', 'cw2', 'cb2',
                  'cwd', 'cbd', 'cwu', 'cbu'):
            out[k] = jnp.stack([s[k] for s in ssbs], axis=0)
        return out

    return {
        'branch1': {'w1': conv_w(ns, bfc), 'b1': bias(bfc),
                    'w2': conv_w(bfc, bfc), 'b2': bias(bfc),
                    'w3': conv_w(bfc, ns), 'b3': bias(ns)},
        'trunk': trunk_p(nc),
        'skip_w': conv_w(nc, nf), 'skip_b': bias(nf),
        'final_w': conv_w(nf, nc), 'final_b': bias(nc),
        'trunk_rgb': trunk_p(ns),
        'skip_rgb_w': conv_w(ns, nf), 'skip_rgb_b': bias(nf),
        'final_rgb_w': conv_w(nf, ns), 'final_rgb_b': bias(ns),
    }


# ----------------------------------------------------------------------------
if __name__ == "__main__":
    cfg = dict(n_subs=4, n_ovls=1, n_colors=8, n_feats=32,
               n_scale=2, res_scale=0.1, bf=16)
    B, H, W = 2, 8, 8

    key = jax.random.PRNGKey(0)
    kp, kx, kl, kxr, klr = jax.random.split(key, 5)
    params = init_params(kp, cfg)

    # spectral modality
    x = jax.random.normal(kx, (B, cfg['n_colors'], H, W), jnp.float32)
    lms = jax.random.normal(
        kl, (B, cfg['n_colors'], cfg['n_scale'] * H, cfg['n_scale'] * W), jnp.float32)
    y = general_volformer_forward(x, lms, 'spectral', (H, W), params, cfg)
    y = jax.block_until_ready(y)
    assert y.shape == (B, cfg['n_colors'], cfg['n_scale'] * H, cfg['n_scale'] * W)
    assert bool(jnp.all(jnp.isfinite(y)))

    # rgb modality
    x_rgb = jax.random.normal(kxr, (B, cfg['n_subs'], H, W), jnp.float32)
    lms_rgb = jax.random.normal(
        klr, (B, cfg['n_subs'], cfg['n_scale'] * H, cfg['n_scale'] * W), jnp.float32)
    y_rgb = general_volformer_forward(x_rgb, lms_rgb, 'rgb', (H, W), params, cfg)
    y_rgb = jax.block_until_ready(y_rgb)
    assert y_rgb.shape == (B, cfg['n_subs'], cfg['n_scale'] * H, cfg['n_scale'] * W)
    assert bool(jnp.all(jnp.isfinite(y_rgb)))

    print("KERNEL_OK")
</pallas_src>

<mosaic_0001>
module attributes {stable_mosaic.version = 11 : i64} {
  func.func @_branch1_kernel(%arg0: i32, %arg1: memref<1x8x8x4xf32, #tpu.memory_space<vmem>>, %arg2: memref<9x4x16xbf16, #tpu.memory_space<vmem>>, %arg3: memref<1x16xf32, #tpu.memory_space<vmem>>, %arg4: memref<9x16x16xbf16, #tpu.memory_space<vmem>>, %arg5: memref<1x16xf32, #tpu.memory_space<vmem>>, %arg6: memref<9x16x4xbf16, #tpu.memory_space<vmem>>, %arg7: memref<1x4xf32, #tpu.memory_space<vmem>>, %arg8: memref<1x8x8x4xf32, #tpu.memory_space<vmem>>, %arg9: memref<10x10x16xf32, #tpu.memory_space<vmem>>) attributes {dimension_semantics = [#tpu.dimension_semantics<parallel>], iteration_bounds = array<i64: 6>, scalar_prefetch = 0 : i64, scratch_operands = 1 : i64, tpu.core_type = #tpu.core_type<tc>, window_params = [{transform_indices = @transform_0, window_bounds = array<i64: 1, 8, 8, 4>}, {pipeline_mode = #tpu.pipeline_mode<synchronous>, transform_indices = @transform_1, window_bounds = array<i64: 9, 4, 16>}, {pipeline_mode = #tpu.pipeline_mode<synchronous>, transform_indices = @transform_2, window_bounds = array<i64: 1, 16>}, {pipeline_mode = #tpu.pipeline_mode<synchronous>, transform_indices = @transform_3, window_bounds = array<i64: 9, 16, 16>}, {pipeline_mode = #tpu.pipeline_mode<synchronous>, transform_indices = @transform_4, window_bounds = array<i64: 1, 16>}, {pipeline_mode = #tpu.pipeline_mode<synchronous>, transform_indices = @transform_5, window_bounds = array<i64: 9, 16, 4>}, {pipeline_mode = #tpu.pipeline_mode<synchronous>, transform_indices = @transform_6, window_bounds = array<i64: 1, 4>}, {transform_indices = @transform_7, window_bounds = array<i64: 1, 8, 8, 4>}]} {
    %cst = arith.constant 0.000000e+00 : f32
    %0 = vector.broadcast %cst : f32 to vector<1x10x16xf32>
    %c0 = arith.constant 0 : index
    %c0_0 = arith.constant 0 : index
    %c0_1 = arith.constant 0 : index
    %1 = vector.load %arg9[%c0, %c0_0, %c0_1] : memref<10x10x16xf32, #tpu.memory_space<vmem>>, vector<1x10x16xf32>
    tpu.vector_store %arg9[%c0, %c0_0, %c0_1], %0 {strides = array<i32>} : memref<10x10x16xf32, #tpu.memory_space<vmem>>, vector<1x10x16xf32>,
    %cst_2 = arith.constant 0.000000e+00 : f32
    %2 = vector.broadcast %cst_2 : f32 to vector<1x10x16xf32>
    %c9 = arith.constant 9 : index
    %c0_3 = arith.constant 0 : index
    %c0_4 = arith.constant 0 : index
    %3 = vector.load %arg9[%c9, %c0_3, %c0_4] : memref<10x10x16xf32, #tpu.memory_space<vmem>>, vector<1x10x16xf32>
    tpu.vector_store %arg9[%c9, %c0_3, %c0_4], %2 {strides = array<i32>} : memref<10x10x16xf32, #tpu.memory_space<vmem>>, vector<1x10x16xf32>,
    %cst_5 = arith.constant 0.000000e+00 : f32
    %4 = vector.broadcast %cst_5 : f32 to vector<10x1x16xf32>
    %c0_6 = arith.constant 0 : index
    %c0_7 = arith.constant 0 : index
    %c0_8 = arith.constant 0 : index
    %5 = vector.load %arg9[%c0_6, %c0_7, %c0_8] : memref<10x10x16xf32, #tpu.memory_space<vmem>>, vector<10x1x16xf32>
    tpu.vector_store %arg9[%c0_6, %c0_7, %c0_8], %4 {strides = array<i32>} : memref<10x10x16xf32, #tpu.memory_space<vmem>>, vector<10x1x16xf32>,
    %cst_9 = arith.constant 0.000000e+00 : f32
    %6 = vector.broadcast %cst_9 : f32 to vector<10x1x16xf32>
    %c0_10 = arith.constant 0 : index
    %c9_11 = arith.constant 9 : index
    %c0_12 = arith.constant 0 : index
    %7 = vector.load %arg9[%c0_10, %c9_11, %c0_12] : memref<10x10x16xf32, #tpu.memory_space<vmem>>, vector<10x1x16xf32>
    tpu.vector_store %arg9[%c0_10, %c9_11, %c0_12], %6 {strides = array<i32>} : memref<10x10x16xf32, #tpu.memory_space<vmem>>, vector<10x1x16xf32>,
    %c0_13 = arith.constant 0 : index
    %c0_14 = arith.constant 0 : index
    %c0_15 = arith.constant 0 : index
    %c0_16 = arith.constant 0 : index
    %8 = vector.load %arg1[%c0_13, %c0_14, %c0_15, %c0_16] : memref<1x8x8x4xf32, #tpu.memory_space<vmem>>, vector<1x8x8x4xf32>
    %9 = vector.shape_cast %8 : vector<1x8x8x4xf32> to vector<8x8x4xf32>
    %c1 = arith.constant 1 : index
    %c1_17 = arith.constant 1 : index
    %c0_18 = arith.constant 0 : index
    %10 = vector.load %arg9[%c1, %c1_17, %c0_18] : memref<10x10x16xf32, #tpu.memory_space<vmem>>, vector<8x8x4xf32>
    tpu.vector_store %arg9[%c1, %c1_17, %c0_18], %9 {strides = array<i32>} : memref<10x10x16xf32, #tpu.memory_space<vmem>>, vector<8x8x4xf32>,
    %c0_19 = arith.constant 0 : index
    %c0_20 = arith.constant 0 : index
    %11 = vector.load %arg3[%c0_19, %c0_20] : memref<1x16xf32, #tpu.memory_space<vmem>>, vector<1x16xf32>
    %c0_21 = arith.constant 0 : index
    %c0_22 = arith.constant 0 : index
    %c0_23 = arith.constant 0 : index
    %12 = vector.load %arg9[%c0_21, %c0_22, %c0_23] : memref<10x10x16xf32, #tpu.memory_space<vmem>>, vector<8x8x4xf32>
    %13 = arith.truncf %12 : vector<8x8x4xf32> to vector<8x8x4xbf16>
    %14 = vector.shape_cast %13 : vector<8x8x4xbf16> to vector<64x4xbf16>
    %c0_24 = arith.constant 0 : index
    %c0_25 = arith.constant 0 : index
    %c0_26 = arith.constant 0 : index
    %15 = vector.load %arg2[%c0_24, %c0_25, %c0_26] : memref<9x4x16xbf16, #tpu.memory_space<vmem>>, vector<1x4x16xbf16>
    %16 = vector.shape_cast %15 : vector<1x4x16xbf16> to vector<4x16xbf16>
    %cst_27 = arith.constant dense<0.000000e+00> : vector<64x16xf32>
    %17 = tpu.matmul %14, %16, %cst_27 {dimension_numbers = #tpu.dot_dimension_numbers<[1], [0], [0], [1], [0, 0, 1, 1], [], []>} : vector<64x4xbf16>, vector<4x16xbf16>, vector<64x16xf32> -> vector<64x16xf32>
    %c0_28 = arith.constant 0 : index
    %c1_29 = arith.constant 1 : index
    %c0_30 = arith.constant 0 : index
    %18 = vector.load %arg9[%c0_28, %c1_29, %c0_30] : memref<10x10x16xf32, #tpu.memory_space<vmem>>, vector<8x8x4xf32>
    %19 = arith.truncf %18 : vector<8x8x4xf32> to vector<8x8x4xbf16>
    %20 = vector.shape_cast %19 : vector<8x8x4xbf16> to vector<64x4xbf16>
    %c1_31 = arith.constant 1 : index
    %c0_32 = arith.constant 0 : index
    %c0_33 = arith.constant 0 : index
    %21 = vector.load %arg2[%c1_31, %c0_32, %c0_33] : memref<9x4x16xbf16, #tpu.memory_space<vmem>>, vector<1x4x16xbf16>
    %22 = vector.shape_cast %21 : vector<1x4x16xbf16> to vector<4x16xbf16>
    %cst_34 = arith.constant dense<0.000000e+00> : vector<64x16xf32>
    %23 = tpu.matmul %20, %22, %cst_34 {dimension_numbers = #tpu.dot_dimension_numbers<[1], [0], [0], [1], [0, 0, 1, 1], [], []>} : vector<64x4xbf16>, vector<4x16xbf16>, vector<64x16xf32> -> vector<64x16xf32>
    %24 = arith.addf %17, %23 : vector<64x16xf32>
    %c0_35 = arith.constant 0 : index
    %c2 = arith.constant 2 : index
    %c0_36 = arith.constant 0 : index
    %25 = vector.load %arg9[%c0_35, %c2, %c0_36] : memref<10x10x16xf32, #tpu.memory_space<vmem>>, vector<8x8x4xf32>
    %26 = arith.truncf %25 : vector<8x8x4xf32> to vector<8x8x4xbf16>
    %27 = vector.shape_cast %26 : vector<8x8x4xbf16> to vector<64x4xbf16>
    %c2_37 = arith.constant 2 : index
    %c0_38 = arith.constant 0 : index
    %c0_39 = arith.constant 0 : index
    %28 = vector.load %arg2[%c2_37, %c0_38, %c0_39] : memref<9x4x16xbf16, #tpu.memory_space<vmem>>, vector<1x4x16xbf16>
    %29 = vector.shape_cast %28 : vector<1x4x16xbf16> to vector<4x16xbf16>
    %cst_40 = arith.constant dense<0.000000e+00> : vector<64x16xf32>
    %30 = tpu.matmul %27, %29, %cst_40 {dimension_numbers = #tpu.dot_dimension_numbers<[1], [0], [0], [1], [0, 0, 1, 1], [], []>} : vector<64x4xbf16>, vector<4x16xbf16>, vector<64x16xf32> -> vector<64x16xf32>
    %31 = arith.addf %24, %30 : vector<64x16xf32>
    %c1_41 = arith.constant 1 : index
    %c0_42 = arith.constant 0 : index
    %c0_43 = arith.constant 0 : index
    %32 = vector.load %arg9[%c1_41, %c0_42, %c0_43] : memref<10x10x16xf32, #tpu.memory_space<vmem>>, vector<8x8x4xf32>
    %33 = arith.truncf %32 : vector<8x8x4xf32> to vector<8x8x4xbf16>
    %34 = vector.shape_cast %33 : vector<8x8x4xbf16> to vector<64x4xbf16>
    %c3 = arith.constant 3 : index
    %c0_44 = arith.constant 0 : index
    %c0_45 = arith.constant 0 : index
    %35 = vector.load %arg2[%c3, %c0_44, %c0_45] : memref<9x4x16xbf16, #tpu.memory_space<vmem>>, vector<1x4x16xbf16>
    %36 = vector.shape_cast %35 : vector<1x4x16xbf16> to vector<4x16xbf16>
    %cst_46 = arith.constant dense<0.000000e+00> : vector<64x16xf32>
    %37 = tpu.matmul %34, %36, %cst_46 {dimension_numbers = #tpu.dot_dimension_numbers<[1], [0], [0], [1], [0, 0, 1, 1], [], []>} : vector<64x4xbf16>, vector<4x16xbf16>, vector<64x16xf32> -> vector<64x16xf32>
    %38 = arith.addf %31, %37 : vector<64x16xf32>
    %c1_47 = arith.constant 1 : index
    %c1_48 = arith.constant 1 : index
    %c0_49 = arith.constant 0 : index
    %39 = vector.load %arg9[%c1_47, %c1_48, %c0_49] : memref<10x10x16xf32, #tpu.memory_space<vmem>>, vector<8x8x4xf32>
    %40 = arith.truncf %39 : vector<8x8x4xf32> to vector<8x8x4xbf16>
    %41 = vector.shape_cast %40 : vector<8x8x4xbf16> to vector<64x4xbf16>
    %c4 = arith.constant 4 : index
    %c0_50 = arith.constant 0 : index
    %c0_51 = arith.constant 0 : index
    %42 = vector.load %arg2[%c4, %c0_50, %c0_51] : memref<9x4x16xbf16, #tpu.memory_space<vmem>>, vector<1x4x16xbf16>
    %43 = vector.shape_cast %42 : vector<1x4x16xbf16> to vector<4x16xbf16>
    %cst_52 = arith.constant dense<0.000000e+00> : vector<64x16xf32>
    %44 = tpu.matmul %41, %43, %cst_52 {dimension_numbers = #tpu.dot_dimension_numbers<[1], [0], [0], [1], [0, 0, 1, 1], [], []>} : vector<64x4xbf16>, vector<4x16xbf16>, vector<64x16xf32> -> vector<64x16xf32>
    %45 = arith.addf %38, %44 : vector<64x16xf32>
    %c1_53 = arith.constant 1 : index
    %c2_54 = arith.constant 2 : index
    %c0_55 = arith.constant 0 : index
    %46 = vector.load %arg9[%c1_53, %c2_54, %c0_55] : memref<10x10x16xf32, #tpu.memory_space<vmem>>, vector<8x8x4xf32>
    %47 = arith.truncf %46 : vector<8x8x4xf32> to vector<8x8x4xbf16>
    %48 = vector.shape_cast %47 : vector<8x8x4xbf16> to vector<64x4xbf16>
    %c5 = arith.constant 5 : index
    %c0_56 = arith.constant 0 : index
    %c0_57 = arith.constant 0 : index
    %49 = vector.load %arg2[%c5, %c0_56, %c0_57] : memref<9x4x16xbf16, #tpu.memory_space<vmem>>, vector<1x4x16xbf16>
    %50 = vector.shape_cast %49 : vector<1x4x16xbf16> to vector<4x16xbf16>
    %cst_58 = arith.constant dense<0.000000e+00> : vector<64x16xf32>
    %51 = tpu.matmul %48, %50, %cst_58 {dimension_numbers = #tpu.dot_dimension_numbers<[1], [0], [0], [1], [0, 0, 1, 1], [], []>} : vector<64x4xbf16>, vector<4x16xbf16>, vector<64x16xf32> -> vector<64x16xf32>
    %52 = arith.addf %45, %51 : vector<64x16xf32>
    %c2_59 = arith.constant 2 : index
    %c0_60 = arith.constant 0 : index
    %c0_61 = arith.constant 0 : index
    %53 = vector.load %arg9[%c2_59, %c0_60, %c0_61] : memref<10x10x16xf32, #tpu.memory_space<vmem>>, vector<8x8x4xf32>
    %54 = arith.truncf %53 : vector<8x8x4xf32> to vector<8x8x4xbf16>
    %55 = vector.shape_cast %54 : vector<8x8x4xbf16> to vector<64x4xbf16>
    %c6 = arith.constant 6 : index
    %c0_62 = arith.constant 0 : index
    %c0_63 = arith.constant 0 : index
    %56 = vector.load %arg2[%c6, %c0_62, %c0_63] : memref<9x4x16xbf16, #tpu.memory_space<vmem>>, vector<1x4x16xbf16>
    %57 = vector.shape_cast %56 : vector<1x4x16xbf16> to vector<4x16xbf16>
    %cst_64 = arith.constant dense<0.000000e+00> : vector<64x16xf32>
    %58 = tpu.matmul %55, %57, %cst_64 {dimension_numbers = #tpu.dot_dimension_numbers<[1], [0], [0], [1], [0, 0, 1, 1], [], []>} : vector<64x4xbf16>, vector<4x16xbf16>, vector<64x16xf32> -> vector<64x16xf32>
    %59 = arith.addf %52, %58 : vector<64x16xf32>
    %c2_65 = arith.constant 2 : index
    %c1_66 = arith.constant 1 : index
    %c0_67 = arith.constant 0 : index
    %60 = vector.load %arg9[%c2_65, %c1_66, %c0_67] : memref<10x10x16xf32, #tpu.memory_space<vmem>>, vector<8x8x4xf32>
    %61 = arith.truncf %60 : vector<8x8x4xf32> to vector<8x8x4xbf16>
    %62 = vector.shape_cast %61 : vector<8x8x4xbf16> to vector<64x4xbf16>
    %c7 = arith.constant 7 : index
    %c0_68 = arith.constant 0 : index
    %c0_69 = arith.constant 0 : index
    %63 = vector.load %arg2[%c7, %c0_68, %c0_69] : memref<9x4x16xbf16, #tpu.memory_space<vmem>>, vector<1x4x16xbf16>
    %64 = vector.shape_cast %63 : vector<1x4x16xbf16> to vector<4x16xbf16>
    %cst_70 = arith.constant dense<0.000000e+00> : vector<64x16xf32>
    %65 = tpu.matmul %62, %64, %cst_70 {dimension_numbers = #tpu.dot_dimension_numbers<[1], [0], [0], [1], [0, 0, 1, 1], [], []>} : vector<64x4xbf16>, vector<4x16xbf16>, vector<64x16xf32> -> vector<64x16xf32>
    %66 = arith.addf %59, %65 : vector<64x16xf32>
    %c2_71 = arith.constant 2 : index
    %c2_72 = arith.constant 2 : index
    %c0_73 = arith.constant 0 : index
    %67 = vector.load %arg9[%c2_71, %c2_72, %c0_73] : memref<10x10x16xf32, #tpu.memory_space<vmem>>, vector<8x8x4xf32>
    %68 = arith.truncf %67 : vector<8x8x4xf32> to vector<8x8x4xbf16>
    %69 = vector.shape_cast %68 : vector<8x8x4xbf16> to vector<64x4xbf16>
    %c8 = arith.constant 8 : index
    %c0_74 = arith.constant 0 : index
    %c0_75 = arith.constant 0 : index
    %70 = vector.load %arg2[%c8, %c0_74, %c0_75] : memref<9x4x16xbf16, #tpu.memory_space<vmem>>, vector<1x4x16xbf16>
    %71 = vector.shape_cast %70 : vector<1x4x16xbf16> to vector<4x16xbf16>
    %cst_76 = arith.constant dense<0.000000e+00> : vector<64x16xf32>
    %72 = tpu.matmul %69, %71, %cst_76 {dimension_numbers = #tpu.dot_dimension_numbers<[1], [0], [0], [1], [0, 0, 1, 1], [], []>} : vector<64x4xbf16>, vector<4x16xbf16>, vector<64x16xf32> -> vector<64x16xf32>
    %73 = arith.addf %66, %72 : vector<64x16xf32>
    %74 = vector.broadcast %11 : vector<1x16xf32> to vector<64x16xf32>
    %75 = arith.addf %73, %74 : vector<64x16xf32>
    %cst_77 = arith.constant 0.000000e+00 : f32
    %76 = vector.broadcast %cst_77 : f32 to vector<64x16xf32>
    %77 = arith.maximumf %75, %76 : vector<64x16xf32>
    %78 = vector.shape_cast %77 : vector<64x16xf32> to vector<8x8x16xf32>
    %c1_78 = arith.constant 1 : index
    %c1_79 = arith.constant 1 : index
    %c0_80 = arith.constant 0 : index
    %79 = vector.load %arg9[%c1_78, %c1_79, %c0_80] : memref<10x10x16xf32, #tpu.memory_space<vmem>>, vector<8x8x16xf32>
    tpu.vector_store %arg9[%c1_78, %c1_79, %c0_80], %78 {strides = array<i32>} : memref<10x10x16xf32, #tpu.memory_space<vmem>>, vector<8x8x16xf32>,
    %c0_81 = arith.constant 0 : index
    %c0_82 = arith.constant 0 : index
    %80 = vector.load %arg5[%c0_81, %c0_82] : memref<1x16xf32, #tpu.memory_space<vmem>>, vector<1x16xf32>
    %c0_83 = arith.constant 0 : index
    %c0_84 = arith.constant 0 : index
    %c0_85 = arith.constant 0 : index
    %81 = vector.load %arg9[%c0_83, %c0_84, %c0_85] : memref<10x10x16xf32, #tpu.memory_space<vmem>>, vector<8x8x16xf32>
    %82 = arith.truncf %81 : vector<8x8x16xf32> to vector<8x8x16xbf16>
    %83 = vector.shape_cast %82 : vector<8x8x16xbf16> to vector<64x16xbf16>
    %c0_86 = arith.constant 0 : index
    %c0_87 = arith.constant 0 : index
    %c0_88 = arith.constant 0 : index
    %84 = vector.load %arg4[%c0_86, %c0_87, %c0_88] : memref<9x16x16xbf16, #tpu.memory_space<vmem>>, vector<1x16x16xbf16>
    %85 = vector.shape_cast %84 : vector<1x16x16xbf16> to vector<16x16xbf16>
    %cst_89 = arith.constant dense<0.000000e+00> : vector<64x16xf32>
    %86 = tpu.matmul %83, %85, %cst_89 {dimension_numbers = #tpu.dot_dimension_numbers<[1], [0], [0], [1], [0, 0, 1, 1], [], []>} : vector<64x16xbf16>, vector<16x16xbf16>, vector<64x16xf32> -> vector<64x16xf32>
    %c0_90 = arith.constant 0 : index
    %c1_91 = arith.constant 1 : index
    %c0_92 = arith.constant 0 : index
    %87 = vector.load %arg9[%c0_90, %c1_91, %c0_92] : memref<10x10x16xf32, #tpu.memory_space<vmem>>, vector<8x8x16xf32>
    %88 = arith.truncf %87 : vector<8x8x16xf32> to vector<8x8x16xbf16>
    %89 = vector.shape_cast %88 : vector<8x8x16xbf16> to vector<64x16xbf16>
    %c1_93 = arith.constant 1 : index
    %c0_94 = arith.constant 0 : index
    %c0_95 = arith.constant 0 : index
    %90 = vector.load %arg4[%c1_93, %c0_94, %c0_95] : memref<9x16x16xbf16, #tpu.memory_space<vmem>>, vector<1x16x16xbf16>
    %91 = vector.shape_cast %90 : vector<1x16x16xbf16> to vector<16x16xbf16>
    %cst_96 = arith.constant dense<0.000000e+00> : vector<64x16xf32>
    %92 = tpu.matmul %89, %91, %cst_96 {dimension_numbers = #tpu.dot_dimension_numbers<[1], [0], [0], [1], [0, 0, 1, 1], [], []>} : vector<64x16xbf16>, vector<16x16xbf16>, vector<64x16xf32> -> vector<64x16xf32>
    %93 = arith.addf %86, %92 : vector<64x16xf32>
    %c0_97 = arith.constant 0 : index
    %c2_98 = arith.constant 2 : index
    %c0_99 = arith.constant 0 : index
    %94 = vector.load %arg9[%c0_97, %c2_98, %c0_99] : memref<10x10x16xf32, #tpu.memory_space<vmem>>, vector<8x8x16xf32>
    %95 = arith.truncf %94 : vector<8x8x16xf32> to vector<8x8x16xbf16>
    %96 = vector.shape_cast %95 : vector<8x8x16xbf16> to vector<64x16xbf16>
    %c2_100 = arith.constant 2 : index
    %c0_101 = arith.constant 0 : index
    %c0_102 = arith.constant 0 : index
    %97 = vector.load %arg4[%c2_100, %c0_101, %c0_102] : memref<9x16x16xbf16, #tpu.memory_space<vmem>>, vector<1x16x16xbf16>
    %98 = vector.shape_cast %97 : vector<1x16x16xbf16> to vector<16x16xbf16>
    %cst_103 = arith.constant dense<0.000000e+00> : vector<64x16xf32>
    %99 = tpu.matmul %96, %98, %cst_103 {dimension_numbers = #tpu.dot_dimension_numbers<[1], [0], [0], [1], [0, 0, 1, 1], [], []>} : vector<64x16xbf16>, vector<16x16xbf16>, vector<64x16xf32> -> vector<64x16xf32>
    %100 = arith.addf %93, %99 : vector<64x16xf32>
    %c1_104 = arith.constant 1 : index
    %c0_105 = arith.constant 0 : index
    %c0_106 = arith.constant 0 : index
    %101 = vector.load %arg9[%c1_104, %c0_105, %c0_106] : memref<10x10x16xf32, #tpu.memory_space<vmem>>, vector<8x8x16xf32>
    %102 = arith.truncf %101 : vector<8x8x16xf32> to vector<8x8x16xbf16>
    %103 = vector.shape_cast %102 : vector<8x8x16xbf16> to vector<64x16xbf16>
    %c3_107 = arith.constant 3 : index
    %c0_108 = arith.constant 0 : index
    %c0_109 = arith.constant 0 : index
    %104 = vector.load %arg4[%c3_107, %c0_108, %c0_109] : memref<9x16x16xbf16, #tpu.memory_space<vmem>>, vector<1x16x16xbf16>
    %105 = vector.shape_cast %104 : vector<1x16x16xbf16> to vector<16x16xbf16>
    %cst_110 = arith.constant dense<0.000000e+00> : vector<64x16xf32>
    %106 = tpu.matmul %103, %105, %cst_110 {dimension_numbers = #tpu.dot_dimension_numbers<[1], [0], [0], [1], [0, 0, 1, 1], [], []>} : vector<64x16xbf16>, vector<16x16xbf16>, vector<64x16xf32> -> vector<64x16xf32>
    %107 = arith.addf %100, %106 : vector<64x16xf32>
    %c1_111 = arith.constant 1 : index
    %c1_112 = arith.constant 1 : index
    %c0_113 = arith.constant 0 : index
    %108 = vector.load %arg9[%c1_111, %c1_112, %c0_113] : memref<10x10x16xf32, #tpu.memory_space<vmem>>, vector<8x8x16xf32>
    %109 = arith.truncf %108 : vector<8x8x16xf32> to vector<8x8x16xbf16>
    %110 = vector.shape_cast %109 : vector<8x8x16xbf16> to vector<64x16xbf16>
    %c4_114 = arith.constant 4 : index
    %c0_115 = arith.constant 0 : index
    %c0_116 = arith.constant 0 : index
    %111 = vector.load %arg4[%c4_114, %c0_115, %c0_116] : memref<9x16x16xbf16, #tpu.memory_space<vmem>>, vector<1x16x16xbf16>
    %112 = vector.shape_cast %111 : vector<1x16x16xbf16> to vector<16x16xbf16>
    %cst_117 = arith.constant dense<0.000000e+00> : vector<64x16xf32>
    %113 = tpu.matmul %110, %112, %cst_117 {dimension_numbers = #tpu.dot_dimension_numbers<[1], [0], [0], [1], [0, 0, 1, 1], [], []>} : vector<64x16xbf16>, vector<16x16xbf16>, vector<64x16xf32> -> vector<64x16xf32>
    %114 = arith.addf %107, %113 : vector<64x16xf32>
    %c1_118 = arith.constant 1 : index
    %c2_119 = arith.constant 2 : index
    %c0_120 = arith.constant 0 : index
    %115 = vector.load %arg9[%c1_118, %c2_119, %c0_120] : memref<10x10x16xf32, #tpu.memory_space<vmem>>, vector<8x8x16xf32>
    %116 = arith.truncf %115 : vector<8x8x16xf32> to vector<8x8x16xbf16>
    %117 = vector.shape_cast %116 : vector<8x8x16xbf16> to vector<64x16xbf16>
    %c5_121 = arith.constant 5 : index
    %c0_122 = arith.constant 0 : index
    %c0_123 = arith.constant 0 : index
    %118 = vector.load %arg4[%c5_121, %c0_122, %c0_123] : memref<9x16x16xbf16, #tpu.memory_space<vmem>>, vector<1x16x16xbf16>
    %119 = vector.shape_cast %118 : vector<1x16x16xbf16> to vector<16x16xbf16>
    %cst_124 = arith.constant dense<0.000000e+00> : vector<64x16xf32>
    %120 = tpu.matmul %117, %119, %cst_124 {dimension_numbers = #tpu.dot_dimension_numbers<[1], [0], [0], [1], [0, 0, 1, 1], [], []>} : vector<64x16xbf16>, vector<16x16xbf16>, vector<64x16xf32> -> vector<64x16xf32>
    %121 = arith.addf %114, %120 : vector<64x16xf32>
    %c2_125 = arith.constant 2 : index
    %c0_126 = arith.constant 0 : index
    %c0_127 = arith.constant 0 : index
    %122 = vector.load %arg9[%c2_125, %c0_126, %c0_127] : memref<10x10x16xf32, #tpu.memory_space<vmem>>, vector<8x8x16xf32>
    %123 = arith.truncf %122 : vector<8x8x16xf32> to vector<8x8x16xbf16>
    %124 = vector.shape_cast %123 : vector<8x8x16xbf16> to vector<64x16xbf16>
    %c6_128 = arith.constant 6 : index
    %c0_129 = arith.constant 0 : index
    %c0_130 = arith.constant 0 : index
    %125 = vector.load %arg4[%c6_128, %c0_129, %c0_130] : memref<9x16x16xbf16, #tpu.memory_space<vmem>>, vector<1x16x16xbf16>
    %126 = vector.shape_cast %125 : vector<1x16x16xbf16> to vector<16x16xbf16>
    %cst_131 = arith.constant dense<0.000000e+00> : vector<64x16xf32>
    %127 = tpu.matmul %124, %126, %cst_131 {dimension_numbers = #tpu.dot_dimension_numbers<[1], [0], [0], [1], [0, 0, 1, 1], [], []>} : vector<64x16xbf16>, vector<16x16xbf16>, vector<64x16xf32> -> vector<64x16xf32>
    %128 = arith.addf %121, %127 : vector<64x16xf32>
    %c2_132 = arith.constant 2 : index
    %c1_133 = arith.constant 1 : index
    %c0_134 = arith.constant 0 : index
    %129 = vector.load %arg9[%c2_132, %c1_133, %c0_134] : memref<10x10x16xf32, #tpu.memory_space<vmem>>, vector<8x8x16xf32>
    %130 = arith.truncf %129 : vector<8x8x16xf32> to vector<8x8x16xbf16>
    %131 = vector.shape_cast %130 : vector<8x8x16xbf16> to vector<64x16xbf16>
    %c7_135 = arith.constant 7 : index
    %c0_136 = arith.constant 0 : index
    %c0_137 = arith.constant 0 : index
    %132 = vector.load %arg4[%c7_135, %c0_136, %c0_137] : memref<9x16x16xbf16, #tpu.memory_space<vmem>>, vector<1x16x16xbf16>
    %133 = vector.shape_cast %132 : vector<1x16x16xbf16> to vector<16x16xbf16>
    %cst_138 = arith.constant dense<0.000000e+00> : vector<64x16xf32>
    %134 = tpu.matmul %131, %133, %cst_138 {dimension_numbers = #tpu.dot_dimension_numbers<[1], [0], [0], [1], [0, 0, 1, 1], [], []>} : vector<64x16xbf16>, vector<16x16xbf16>, vector<64x16xf32> -> vector<64x16xf32>
    %135 = arith.addf %128, %134 : vector<64x16xf32>
    %c2_139 = arith.constant 2 : index
    %c2_140 = arith.constant 2 : index
    %c0_141 = arith.constant 0 : index
    %136 = vector.load %arg9[%c2_139, %c2_140, %c0_141] : memref<10x10x16xf32, #tpu.memory_space<vmem>>, vector<8x8x16xf32>
    %137 = arith.truncf %136 : vector<8x8x16xf32> to vector<8x8x16xbf16>
    %138 = vector.shape_cast %137 : vector<8x8x16xbf16> to vector<64x16xbf16>
    %c8_142 = arith.constant 8 : index
    %c0_143 = arith.constant 0 : index
    %c0_144 = arith.constant 0 : index
    %139 = vector.load %arg4[%c8_142, %c0_143, %c0_144] : memref<9x16x16xbf16, #tpu.memory_space<vmem>>, vector<1x16x16xbf16>
    %140 = vector.shape_cast %139 : vector<1x16x16xbf16> to vector<16x16xbf16>
    %cst_145 = arith.constant dense<0.000000e+00> : vector<64x16xf32>
    %141 = tpu.matmul %138, %140, %cst_145 {dimension_numbers = #tpu.dot_dimension_numbers<[1], [0], [0], [1], [0, 0, 1, 1], [], []>} : vector<64x16xbf16>, vector<16x16xbf16>, vector<64x16xf32> -> vector<64x16xf32>
    %142 = arith.addf %135, %141 : vector<64x16xf32>
    %143 = vector.broadcast %80 : vector<1x16xf32> to vector<64x16xf32>
    %144 = arith.addf %142, %143 : vector<64x16xf32>
    %cst_146 = arith.constant 0.000000e+00 : f32
    %145 = vector.broadcast %cst_146 : f32 to vector<64x16xf32>
    %146 = arith.maximumf %144, %145 : vector<64x16xf32>
    %147 = vector.shape_cast %146 : vector<64x16xf32> to vector<8x8x16xf32>
    %c1_147 = arith.constant 1 : index
    %c1_148 = arith.constant 1 : index
    %c0_149 = arith.constant 0 : index
    %148 = vector.load %arg9[%c1_147, %c1_148, %c0_149] : memref<10x10x16xf32, #tpu.memory_space<vmem>>, vector<8x8x16xf32>
    tpu.vector_store %arg9[%c1_147, %c1_148, %c0_149], %147 {strides = array<i32>} : memref<10x10x16xf32, #tpu.memory_space<vmem>>, vector<8x8x16xf32>,
    %c0_150 = arith.constant 0 : index
    %c0_151 = arith.constant 0 : index
    %149 = vector.load %arg7[%c0_150, %c0_151] : memref<1x4xf32, #tpu.memory_space<vmem>>, vector<1x4xf32>
    %c0_152 = arith.constant 0 : index
    %c0_153 = arith.constant 0 : index
    %c0_154 = arith.constant 0 : index
    %150 = vector.load %arg9[%c0_152, %c0_153, %c0_154] : memref<10x10x16xf32, #tpu.memory_space<vmem>>, vector<8x8x16xf32>
    %151 = arith.truncf %150 : vector<8x8x16xf32> to vector<8x8x16xbf16>
    %152 = vector.shape_cast %151 : vector<8x8x16xbf16> to vector<64x16xbf16>
    %c0_155 = arith.constant 0 : index
    %c0_156 = arith.constant 0 : index
    %c0_157 = arith.constant 0 : index
    %153 = vector.load %arg6[%c0_155, %c0_156, %c0_157] : memref<9x16x4xbf16, #tpu.memory_space<vmem>>, vector<1x16x4xbf16>
    %154 = vector.shape_cast %153 : vector<1x16x4xbf16> to vector<16x4xbf16>
    %cst_158 = arith.constant dense<0.000000e+00> : vector<64x4xf32>
    %155 = tpu.matmul %152, %154, %cst_158 {dimension_numbers = #tpu.dot_dimension_numbers<[1], [0], [0], [1], [0, 0, 1, 1], [], []>} : vector<64x16xbf16>, vector<16x4xbf16>, vector<64x4xf32> -> vector<64x4xf32>
    %c0_159 = arith.constant 0 : index
    %c1_160 = arith.constant 1 : index
    %c0_161 = arith.constant 0 : index
    %156 = vector.load %arg9[%c0_159, %c1_160, %c0_161] : memref<10x10x16xf32, #tpu.memory_space<vmem>>, vector<8x8x16xf32>
    %157 = arith.truncf %156 : vector<8x8x16xf32> to vector<8x8x16xbf16>
    %158 = vector.shape_cast %157 : vector<8x8x16xbf16> to vector<64x16xbf16>
    %c1_162 = arith.constant 1 : index
    %c0_163 = arith.constant 0 : index
    %c0_164 = arith.constant 0 : index
    %159 = vector.load %arg6[%c1_162, %c0_163, %c0_164] : memref<9x16x4xbf16, #tpu.memory_space<vmem>>, vector<1x16x4xbf16>
    %160 = vector.shape_cast %159 : vector<1x16x4xbf16> to vector<16x4xbf16>
    %cst_165 = arith.constant dense<0.000000e+00> : vector<64x4xf32>
    %161 = tpu.matmul %158, %160, %cst_165 {dimension_numbers = #tpu.dot_dimension_numbers<[1], [0], [0], [1], [0, 0, 1, 1], [], []>} : vector<64x16xbf16>, vector<16x4xbf16>, vector<64x4xf32> -> vector<64x4xf32>
    %162 = arith.addf %155, %161 : vector<64x4xf32>
    %c0_166 = arith.constant 0 : index
    %c2_167 = arith.constant 2 : index
    %c0_168 = arith.constant 0 : index
    %163 = vector.load %arg9[%c0_166, %c2_167, %c0_168] : memref<10x10x16xf32, #tpu.memory_space<vmem>>, vector<8x8x16xf32>
    %164 = arith.truncf %163 : vector<8x8x16xf32> to vector<8x8x16xbf16>
    %165 = vector.shape_cast %164 : vector<8x8x16xbf16> to vector<64x16xbf16>
    %c2_169 = arith.constant 2 : index
    %c0_170 = arith.constant 0 : index
    %c0_171 = arith.constant 0 : index
    %166 = vector.load %arg6[%c2_169, %c0_170, %c0_171] : memref<9x16x4xbf16, #tpu.memory_space<vmem>>, vector<1x16x4xbf16>
    %167 = vector.shape_cast %166 : vector<1x16x4xbf16> to vector<16x4xbf16>
    %cst_172 = arith.constant dense<0.000000e+00> : vector<64x4xf32>
    %168 = tpu.matmul %165, %167, %cst_172 {dimension_numbers = #tpu.dot_dimension_numbers<[1], [0], [0], [1], [0, 0, 1, 1], [], []>} : vector<64x16xbf16>, vector<16x4xbf16>, vector<64x4xf32> -> vector<64x4xf32>
    %169 = arith.addf %162, %168 : vector<64x4xf32>
    %c1_173 = arith.constant 1 : index
    %c0_174 = arith.constant 0 : index
    %c0_175 = arith.constant 0 : index
    %170 = vector.load %arg9[%c1_173, %c0_174, %c0_175] : memref<10x10x16xf32, #tpu.memory_space<vmem>>, vector<8x8x16xf32>
    %171 = arith.truncf %170 : vector<8x8x16xf32> to vector<8x8x16xbf16>
    %172 = vector.shape_cast %171 : vector<8x8x16xbf16> to vector<64x16xbf16>
    %c3_176 = arith.constant 3 : index
    %c0_177 = arith.constant 0 : index
    %c0_178 = arith.constant 0 : index
    %173 = vector.load %arg6[%c3_176, %c0_177, %c0_178] : memref<9x16x4xbf16, #tpu.memory_space<vmem>>, vector<1x16x4xbf16>
    %174 = vector.shape_cast %173 : vector<1x16x4xbf16> to vector<16x4xbf16>
    %cst_179 = arith.constant dense<0.000000e+00> : vector<64x4xf32>
    %175 = tpu.matmul %172, %174, %cst_179 {dimension_numbers = #tpu.dot_dimension_numbers<[1], [0], [0], [1], [0, 0, 1, 1], [], []>} : vector<64x16xbf16>, vector<16x4xbf16>, vector<64x4xf32> -> vector<64x4xf32>
    %176 = arith.addf %169, %175 : vector<64x4xf32>
    %c1_180 = arith.constant 1 : index
    %c1_181 = arith.constant 1 : index
    %c0_182 = arith.constant 0 : index
    %177 = vector.load %arg9[%c1_180, %c1_181, %c0_182] : memref<10x10x16xf32, #tpu.memory_space<vmem>>, vector<8x8x16xf32>
    %178 = arith.truncf %177 : vector<8x8x16xf32> to vector<8x8x16xbf16>
    %179 = vector.shape_cast %178 : vector<8x8x16xbf16> to vector<64x16xbf16>
    %c4_183 = arith.constant 4 : index
    %c0_184 = arith.constant 0 : index
    %c0_185 = arith.constant 0 : index
    %180 = vector.load %arg6[%c4_183, %c0_184, %c0_185] : memref<9x16x4xbf16, #tpu.memory_space<vmem>>, vector<1x16x4xbf16>
    %181 = vector.shape_cast %180 : vector<1x16x4xbf16> to vector<16x4xbf16>
    %cst_186 = arith.constant dense<0.000000e+00> : vector<64x4xf32>
    %182 = tpu.matmul %179, %181, %cst_186 {dimension_numbers = #tpu.dot_dimension_numbers<[1], [0], [0], [1], [0, 0, 1, 1], [], []>} : vector<64x16xbf16>, vector<16x4xbf16>, vector<64x4xf32> -> vector<64x4xf32>
    %183 = arith.addf %176, %182 : vector<64x4xf32>
    %c1_187 = arith.constant 1 : index
    %c2_188 = arith.constant 2 : index
    %c0_189 = arith.constant 0 : index
    %184 = vector.load %arg9[%c1_187, %c2_188, %c0_189] : memref<10x10x16xf32, #tpu.memory_space<vmem>>, vector<8x8x16xf32>
    %185 = arith.truncf %184 : vector<8x8x16xf32> to vector<8x8x16xbf16>
    %186 = vector.shape_cast %185 : vector<8x8x16xbf16> to vector<64x16xbf16>
    %c5_190 = arith.constant 5 : index
    %c0_191 = arith.constant 0 : index
    %c0_192 = arith.constant 0 : index
    %187 = vector.load %arg6[%c5_190, %c0_191, %c0_192] : memref<9x16x4xbf16, #tpu.memory_space<vmem>>, vector<1x16x4xbf16>
    %188 = vector.shape_cast %187 : vector<1x16x4xbf16> to vector<16x4xbf16>
    %cst_193 = arith.constant dense<0.000000e+00> : vector<64x4xf32>
    %189 = tpu.matmul %186, %188, %cst_193 {dimension_numbers = #tpu.dot_dimension_numbers<[1], [0], [0], [1], [0, 0, 1, 1], [], []>} : vector<64x16xbf16>, vector<16x4xbf16>, vector<64x4xf32> -> vector<64x4xf32>
    %190 = arith.addf %183, %189 : vector<64x4xf32>
    %c2_194 = arith.constant 2 : index
    %c0_195 = arith.constant 0 : index
    %c0_196 = arith.constant 0 : index
    %191 = vector.load %arg9[%c2_194, %c0_195, %c0_196] : memref<10x10x16xf32, #tpu.memory_space<vmem>>, vector<8x8x16xf32>
    %192 = arith.truncf %191 : vector<8x8x16xf32> to vector<8x8x16xbf16>
    %193 = vector.shape_cast %192 : vector<8x8x16xbf16> to vector<64x16xbf16>
    %c6_197 = arith.constant 6 : index
    %c0_198 = arith.constant 0 : index
    %c0_199 = arith.constant 0 : index
    %194 = vector.load %arg6[%c6_197, %c0_198, %c0_199] : memref<9x16x4xbf16, #tpu.memory_space<vmem>>, vector<1x16x4xbf16>
    %195 = vector.shape_cast %194 : vector<1x16x4xbf16> to vector<16x4xbf16>
    %cst_200 = arith.constant dense<0.000000e+00> : vector<64x4xf32>
    %196 = tpu.matmul %193, %195, %cst_200 {dimension_numbers = #tpu.dot_dimension_numbers<[1], [0], [0], [1], [0, 0, 1, 1], [], []>} : vector<64x16xbf16>, vector<16x4xbf16>, vector<64x4xf32> -> vector<64x4xf32>
    %197 = arith.addf %190, %196 : vector<64x4xf32>
    %c2_201 = arith.constant 2 : index
    %c1_202 = arith.constant 1 : index
    %c0_203 = arith.constant 0 : index
    %198 = vector.load %arg9[%c2_201, %c1_202, %c0_203] : memref<10x10x16xf32, #tpu.memory_space<vmem>>, vector<8x8x16xf32>
    %199 = arith.truncf %198 : vector<8x8x16xf32> to vector<8x8x16xbf16>
    %200 = vector.shape_cast %199 : vector<8x8x16xbf16> to vector<64x16xbf16>
    %c7_204 = arith.constant 7 : index
    %c0_205 = arith.constant 0 : index
    %c0_206 = arith.constant 0 : index
    %201 = vector.load %arg6[%c7_204, %c0_205, %c0_206] : memref<9x16x4xbf16, #tpu.memory_space<vmem>>, vector<1x16x4xbf16>
    %202 = vector.shape_cast %201 : vector<1x16x4xbf16> to vector<16x4xbf16>
    %cst_207 = arith.constant dense<0.000000e+00> : vector<64x4xf32>
    %203 = tpu.matmul %200, %202, %cst_207 {dimension_numbers = #tpu.dot_dimension_numbers<[1], [0], [0], [1], [0, 0, 1, 1], [], []>} : vector<64x16xbf16>, vector<16x4xbf16>, vector<64x4xf32> -> vector<64x4xf32>
    %204 = arith.addf %197, %203 : vector<64x4xf32>
    %c2_208 = arith.constant 2 : index
    %c2_209 = arith.constant 2 : index
    %c0_210 = arith.constant 0 : index
    %205 = vector.load %arg9[%c2_208, %c2_209, %c0_210] : memref<10x10x16xf32, #tpu.memory_space<vmem>>, vector<8x8x16xf32>
    %206 = arith.truncf %205 : vector<8x8x16xf32> to vector<8x8x16xbf16>
    %207 = vector.shape_cast %206 : vector<8x8x16xbf16> to vector<64x16xbf16>
    %c8_211 = arith.constant 8 : index
    %c0_212 = arith.constant 0 : index
    %c0_213 = arith.constant 0 : index
    %208 = vector.load %arg6[%c8_211, %c0_212, %c0_213] : memref<9x16x4xbf16, #tpu.memory_space<vmem>>, vector<1x16x4xbf16>
    %209 = vector.shape_cast %208 : vector<1x16x4xbf16> to vector<16x4xbf16>
    %cst_214 = arith.constant dense<0.000000e+00> : vector<64x4xf32>
    %210 = tpu.matmul %207, %209, %cst_214 {dimension_numbers = #tpu.dot_dimension_numbers<[1], [0], [0], [1], [0, 0, 1, 1], [], []>} : vector<64x16xbf16>, vector<16x4xbf16>, vector<64x4xf32> -> vector<64x4xf32>
    %211 = arith.addf %204, %210 : vector<64x4xf32>
    %212 = vector.broadcast %149 : vector<1x4xf32> to vector<64x4xf32>
    %213 = arith.addf %211, %212 : vector<64x4xf32>
    %214 = vector.shape_cast %213 : vector<64x4xf32> to vector<8x8x4xf32>
    %215 = arith.addf %214, %9 : vector<8x8x4xf32>
    %c0_215 = arith.constant 0 : index
    %c0_216 = arith.constant 0 : index
    %c0_217 = arith.constant 0 : index
    %c0_218 = arith.constant 0 : index
    %216 = vector.load %arg8[%c0_215, %c0_216, %c0_217, %c0_218] : memref<1x8x8x4xf32, #tpu.memory_space<vmem>>, vector<1x8x8x4xf32>
    %217 = vector.shape_cast %216 : vector<1x8x8x4xf32> to vector<8x8x4xf32>
    %218 = vector.shape_cast %215 : vector<8x8x4xf32> to vector<1x8x8x4xf32>
    tpu.vector_store %arg8[%c0_215, %c0_216, %c0_217, %c0_218], %218 {strides = array<i32>} : memref<1x8x8x4xf32, #tpu.memory_space<vmem>>, vector<1x8x8x4xf32>,
    return
  }
  func.func @transform_0(%arg0: i32) -> (i32, i32, i32, i32) {
    %c0_i32 = arith.constant 0 : i32
    %c0_i32_0 = arith.constant 0 : i32
    %c0_i32_1 = arith.constant 0 : i32
    %c0_i32_2 = arith.constant 0 : i32
    return %arg0, %c0_i32, %c0_i32_0, %c0_i32_1 : i32, i32, i32, i32
  }
  func.func @transform_1(%arg0: i32) -> (i32, i32, i32) {
    %c0_i32 = arith.constant 0 : i32
    %c0_i32_0 = arith.constant 0 : i32
    %c0_i32_1 = arith.constant 0 : i32
    %c0_i32_2 = arith.constant 0 : i32
    return %c0_i32, %c0_i32_0, %c0_i32_1 : i32, i32, i32
  }
  func.func @transform_2(%arg0: i32) -> (i32, i32) {
    %c0_i32 = arith.constant 0 : i32
    %c0_i32_0 = arith.constant 0 : i32
    %c0_i32_1 = arith.constant 0 : i32
    return %c0_i32, %c0_i32_0 : i32, i32
  }
  func.func @transform_3(%arg0: i32) -> (i32, i32, i32) {
    %c0_i32 = arith.constant 0 : i32
    %c0_i32_0 = arith.constant 0 : i32
    %c0_i32_1 = arith.constant 0 : i32
    %c0_i32_2 = arith.constant 0 : i32
    return %c0_i32, %c0_i32_0, %c0_i32_1 : i32, i32, i32
  }
  func.func @transform_4(%arg0: i32) -> (i32, i32) {
    %c0_i32 = arith.constant 0 : i32
    %c0_i32_0 = arith.constant 0 : i32
    %c0_i32_1 = arith.constant 0 : i32
    return %c0_i32, %c0_i32_0 : i32, i32
  }
  func.func @transform_5(%arg0: i32) -> (i32, i32, i32) {
    %c0_i32 = arith.constant 0 : i32
    %c0_i32_0 = arith.constant 0 : i32
    %c0_i32_1 = arith.constant 0 : i32
    %c0_i32_2 = arith.constant 0 : i32
    return %c0_i32, %c0_i32_0, %c0_i32_1 : i32, i32, i32
  }
  func.func @transform_6(%arg0: i32) -> (i32, i32) {
    %c0_i32 = arith.constant 0 : i32
    %c0_i32_0 = arith.constant 0 : i32
    %c0_i32_1 = arith.constant 0 : i32
    return %c0_i32, %c0_i32_0 : i32, i32
  }
  func.func @transform_7(%arg0: i32) -> (i32, i32, i32, i32) {
    %c0_i32 = arith.constant 0 : i32
    %c0_i32_0 = arith.constant 0 : i32
    %c0_i32_1 = arith.constant 0 : i32
    %c0_i32_2 = arith.constant 0 : i32
    return %arg0, %c0_i32, %c0_i32_0, %c0_i32_1 : i32, i32, i32, i32
  }
}

</mosaic_0001>

<llo_original>
// kernel: tpu_custom_call.1
$region0: #{tpu_custom_call.1}
  #allocation0 [shape = 'u32[]', space=smem, size = 0x4, offset = 0x4, fixed_abs, tag = 'smem constant byte address 0x4 - core index']
  #allocation1 [shape = 'u32[144,128]{1,0:T(1,128)}', space=vmem, size = 0x12000, scoped, tag = 'internal scratch']
  #allocation2 [shape = 'f32[10,10,16]{2,1,0:T(8,128)}', space=vmem, size = 0x14000, scoped, tag = 'scratch operand']
  %s0 = inlined_call_operand.vmem [shape: f32[6,8,8,4], index: 0, kind: input, shape index: {}]
  %s1 = inlined_call_operand.vmem [shape: bf16[9,4,16], index: 1, kind: input, shape index: {}]
  %s2 = inlined_call_operand.vmem [shape: f32[1,16], index: 2, kind: input, shape index: {}]
  %s3 = inlined_call_operand.vmem [shape: bf16[9,16,16], index: 3, kind: input, shape index: {}]
  %s4 = inlined_call_operand.vmem [shape: f32[1,16], index: 4, kind: input, shape index: {}]
  %s5 = inlined_call_operand.vmem [shape: bf16[9,16,4], index: 5, kind: input, shape index: {}]
  %s6 = inlined_call_operand.vmem [shape: f32[1,4], index: 6, kind: input, shape index: {}]
  %s7 = inlined_call_operand.vmem [shape: f32[6,8,8,4], index: 7, kind: output, shape index: {}]
  %s8 = sld [smem:[#allocation0]]
  $region61: #{tpu_custom_call.1} parent=0
    _
  %s10 = ssub.s32 1, %s8
  %s11 = scalar_select 0, %s10, %s8
  loop: start=0, step=1, limit=8
  $region2: #{tpu_custom_call.1} parent=0 // loop_pre_header
    _
  $region3: #{tpu_custom_call.1} parent=0 // loop_header
    %s13 = sphi 0, %s17
    %p14 = scmp.ge.s32.totalorder %s13, 8
    %s23 = sphi 0, %s25
    %s26 = sphi 0, %s23
    %s27 = sphi 0, %s26
    %s43 = sphi 0, %s27
    %s47 = sphi 0, %s47
    %s49 = sphi 0, %s47
    %s50 = sphi 0, %s49
    %s64 = sphi 0, %s50
    %s68 = sphi 0, %s68
    %s70 = sphi 0, %s68
    %s71 = sphi 0, %s70
    %s85 = sphi 0, %s71
    %s89 = sphi 0, %s89
    %s91 = sphi 0, %s89
    %s92 = sphi 0, %s91
    %s106 = sphi 0, %s92
    %s110 = sphi 0, %s110
    %s112 = sphi 0, %s110
    %s113 = sphi 0, %s112
    %s127 = sphi 0, %s113
    %s131 = sphi 0, %s131
    %s133 = sphi 0, %s131
    %s134 = sphi 0, %s133
    %s148 = sphi 0, %s134
    %s152 = sphi 0, %s152
    %s154 = sphi 0, %s152
    %s155 = sphi 0, %s154
    %s169 = sphi 0, %s155
    %s175 = sphi 0, %s177
    %s178 = sphi 0, %s175
    %s179 = sphi 0, %s178
    %s195 = sphi 0, %s179
  $region4: #{tpu_custom_call.1} parent=0 // loop_header_branch
    %16 = sbr.rel (%p14) target = $region8
  $region5: #{tpu_custom_call.1} parent=0 // loop_body
    %s18 = ssub.s32 %s13, 1
    %s19 = ssub.s32 %s13, 2
    %s20 = sadd.s32 %s13, 1
    %s21 = ssub.s32 %s13, %s20
    %p22 = scmp.eq.s32.totalorder %s21, 0
    %s24 = sadd.s32 %s23, 1
    %s25 = scalar_select %p22, %s23, %s24
    %p28 = pneg %p22
    %p29 = scmp.eq.s32.totalorder %s13, 5
    %p30 = por %p28, %p29
    %p31 = scmp.ne.s32.totalorder %s23, %s26
    %p32 = scmp.eq.s32.totalorder %s13, 0
    %p33 = por %p31, %p32
    %p34 = scmp.ne.s32.totalorder %s23, %s26
    %p35 = scmp.eq.s32.totalorder %s18, 5
    %p36 = por %p34, %p35
    %p37 = scmp.ne.s32.totalorder %s26, %s27
    %p38 = scmp.eq.s32.totalorder %s18, 0
    %p39 = por %p37, %p38
    %p40 = scmp.ne.s32.totalorder %s26, %s27
    %p41 = scmp.eq.s32.totalorder %s19, 5
    %p42 = por %p40, %p41
    %p44 = scmp.ne.s32.totalorder %s27, %s43
    %p45 = scmp.eq.s32.totalorder %s19, 0
    %p46 = por %p44, %p45
    %s48 = sadd.s32 %s47, 1
    %p51 = scmp.eq.s32.totalorder %s13, 5
    %p52 = scmp.ne.s32.totalorder %s47, %s49
    %p53 = scmp.eq.s32.totalorder %s13, 0
    %p54 = por %p52, %p53
    %p55 = scmp.ne.s32.totalorder %s47, %s49
    %p56 = scmp.eq.s32.totalorder %s18, 5
    %p57 = por %p55, %p56
    %p58 = scmp.ne.s32.totalorder %s49, %s50
    %p59 = scmp.eq.s32.totalorder %s18, 0
    %p60 = por %p58, %p59
    %p61 = scmp.ne.s32.totalorder %s49, %s50
    %p62 = scmp.eq.s32.totalorder %s19, 5
    %p63 = por %p61, %p62
    %p65 = scmp.ne.s32.totalorder %s50, %s64
    %p66 = scmp.eq.s32.totalorder %s19, 0
    %p67 = por %p65, %p66
    %s69 = sadd.s32 %s68, 1
    %p72 = scmp.eq.s32.totalorder %s13, 5
    %p73 = scmp.ne.s32.totalorder %s68, %s70
    %p74 = scmp.eq.s32.totalorder %s13, 0
    %p75 = por %p73, %p74
    %p76 = scmp.ne.s32.totalorder %s68, %s70
    %p77 = scmp.eq.s32.totalorder %s18, 5
    %p78 = por %p76, %p77
    %p79 = scmp.ne.s32.totalorder %s70, %s71
    %p80 = scmp.eq.s32.totalorder %s18, 0
    %p81 = por %p79, %p80
    %p82 = scmp.ne.s32.totalorder %s70, %s71
    %p83 = scmp.eq.s32.totalorder %s19, 5
    %p84 = por %p82, %p83
    %p86 = scmp.ne.s32.totalorder %s71, %s85
    %p87 = scmp.eq.s32.totalorder %s19, 0
    %p88 = por %p86, %p87
    %s90 = sadd.s32 %s89, 1
    %p93 = scmp.eq.s32.totalorder %s13, 5
    %p94 = scmp.ne.s32.totalorder %s89, %s91
    %p95 = scmp.eq.s32.totalorder %s13, 0
    %p96 = por %p94, %p95
    %p97 = scmp.ne.s32.totalorder %s89, %s91
    %p98 = scmp.eq.s32.totalorder %s18, 5
    %p99 = por %p97, %p98
    %p100 = scmp.ne.s32.totalorder %s91, %s92
    %p101 = scmp.eq.s32.totalorder %s18, 0
    %p102 = por %p100, %p101
    %p103 = scmp.ne.s32.totalorder %s91, %s92
    %p104 = scmp.eq.s32.totalorder %s19, 5
    %p105 = por %p103, %p104
    %p107 = scmp.ne.s32.totalorder %s92, %s106
    %p108 = scmp.eq.s32.totalorder %s19, 0
    %p109 = por %p107, %p108
    %s111 = sadd.s32 %s110, 1
    %p114 = scmp.eq.s32.totalorder %s13, 5
    %p115 = scmp.ne.s32.totalorder %s110, %s112
    %p116 = scmp.eq.s32.totalorder %s13, 0
    %p117 = por %p115, %p116
    %p118 = scmp.ne.s32.totalorder %s110, %s112
    %p119 = scmp.eq.s32.totalorder %s18, 5
    %p120 = por %p118, %p119
    %p121 = scmp.ne.s32.totalorder %s112, %s113
    %p122 = scmp.eq.s32.totalorder %s18, 0
    %p123 = por %p121, %p122
    %p124 = scmp.ne.s32.totalorder %s112, %s113
    %p125 = scmp.eq.s32.totalorder %s19, 5
    %p126 = por %p124, %p125
    %p128 = scmp.ne.s32.totalorder %s113, %s127
    %p129 = scmp.eq.s32.totalorder %s19, 0
    %p130 = por %p128, %p129
    %s132 = sadd.s32 %s131, 1
    %p135 = scmp.eq.s32.totalorder %s13, 5
    %p136 = scmp.ne.s32.totalorder %s131, %s133
    %p137 = scmp.eq.s32.totalorder %s13, 0
    %p138 = por %p136, %p137
    %p139 = scmp.ne.s32.totalorder %s131, %s133
    %p140 = scmp.eq.s32.totalorder %s18, 5
    %p141 = por %p139, %p140
    %p142 = scmp.ne.s32.totalorder %s133, %s134
    %p143 = scmp.eq.s32.totalorder %s18, 0
    %p144 = por %p142, %p143
    %p145 = scmp.ne.s32.totalorder %s133, %s134
    %p146 = scmp.eq.s32.totalorder %s19, 5
    %p147 = por %p145, %p146
    %p149 = scmp.ne.s32.totalorder %s134, %s148
    %p150 = scmp.eq.s32.totalorder %s19, 0
    %p151 = por %p149, %p150
    %s153 = sadd.s32 %s152, 1
    %p156 = scmp.eq.s32.totalorder %s13, 5
    %p157 = scmp.ne.s32.totalorder %s152, %s154
    %p158 = scmp.eq.s32.totalorder %s13, 0
    %p159 = por %p157, %p158
    %p160 = scmp.ne.s32.totalorder %s152, %s154
    %p161 = scmp.eq.s32.totalorder %s18, 5
    %p162 = por %p160, %p161
    %p163 = scmp.ne.s32.totalorder %s154, %s155
    %p164 = scmp.eq.s32.totalorder %s18, 0
    %p165 = por %p163, %p164
    %p166 = scmp.ne.s32.totalorder %s154, %s155
    %p167 = scmp.eq.s32.totalorder %s19, 5
    %p168 = por %p166, %p167
    %p170 = scmp.ne.s32.totalorder %s155, %s169
    %p171 = scmp.eq.s32.totalorder %s19, 0
    %p172 = por %p170, %p171
    %s173 = ssub.s32 %s13, %s20
    %p174 = scmp.eq.s32.totalorder %s173, 0
    %s176 = sadd.s32 %s175, 1
    %s177 = scalar_select %p174, %s175, %s176
    %p180 = pneg %p174
    %p181 = scmp.eq.s32.totalorder %s13, 5
    %p182 = por %p180, %p181
    %p183 = scmp.ne.s32.totalorder %s175, %s178
    %p184 = scmp.eq.s32.totalorder %s13, 0
    %p185 = por %p183, %p184
    %p186 = scmp.ne.s32.totalorder %s175, %s178
    %p187 = scmp.eq.s32.totalorder %s18, 5
    %p188 = por %p186, %p187
    %p189 = scmp.ne.s32.totalorder %s178, %s179
    %p190 = scmp.eq.s32.totalorder %s18, 0
    %p191 = por %p189, %p190
    %p192 = scmp.ne.s32.totalorder %s178, %s179
    %p193 = scmp.eq.s32.totalorder %s19, 5
    %p194 = por %p192, %p193
    %p196 = scmp.ne.s32.totalorder %s179, %s195
    %p197 = scmp.eq.s32.totalorder %s19, 0
    %p198 = por %p196, %p197
    %p199 = scmp.le.s32.totalorder 1, %s13
    %p200 = scmp.lt.s32.totalorder %s13, 7
    %p201 = pnand %p199, %p200
    %p202 = pneg %p201
    // Predicated region
    $region9: #{tpu_custom_call.1} parent=5 // pred_check
      _
    $region10: #{tpu_custom_call.1} parent=5 // pred_check_branch
      %204 = sbr.rel (%p201) target = $region12
    $region11: #{tpu_custom_call.1} parent=5 // pred_region
      %s205 = ssub.s32 %s13, 1
      // Predicated region
      $region13: #{tpu_custom_call.1} parent=11 // pred_check
        %p206 = pneg %p60
      $region14: #{tpu_custom_call.1} parent=11 // pred_check_branch
        %208 = sbr.rel (%p206) target = $region16
      $region15: #{tpu_custom_call.1} parent=11 // pred_region
        _
      $region16: #{tpu_custom_call.1} parent=11 // pred_fallthru
        _
      // Predicated region
      $region17: #{tpu_custom_call.1} parent=11 // pred_check
        %p209 = pneg %p81
      $region18: #{tpu_custom_call.1} parent=11 // pred_check_branch
        %211 = sbr.rel (%p209) target = $region20
      $region19: #{tpu_custom_call.1} parent=11 // pred_region
        _
      $region20: #{tpu_custom_call.1} parent=11 // pred_fallthru
        _
      // Predicated region
      $region21: #{tpu_custom_call.1} parent=11 // pred_check
        %p212 = pneg %p102
      $region22: #{tpu_custom_call.1} parent=11 // pred_check_branch
        %214 = sbr.rel (%p212) target = $region24
      $region23: #{tpu_custom_call.1} parent=11 // pred_region
        _
      $region24: #{tpu_custom_call.1} parent=11 // pred_fallthru
        _
      // Predicated region
      $region25: #{tpu_custom_call.1} parent=11 // pred_check
        %p215 = pneg %p123
      $region26: #{tpu_custom_call.1} parent=11 // pred_check_branch
        %217 = sbr.rel (%p215) target = $region28
      $region27: #{tpu_custom_call.1} parent=11 // pred_region
        _
      $region28: #{tpu_custom_call.1} parent=11 // pred_fallthru
        _
      // Predicated region
      $region29: #{tpu_custom_call.1} parent=11 // pred_check
        %p218 = pneg %p144
      $region30: #{tpu_custom_call.1} parent=11 // pred_check_branch
        %220 = sbr.rel (%p218) target = $region32
      $region31: #{tpu_custom_call.1} parent=11 // pred_region
        _
      $region32: #{tpu_custom_call.1} parent=11 // pred_fallthru
        _
      // Predicated region
      $region33: #{tpu_custom_call.1} parent=11 // pred_check
        %p221 = pneg %p165
      $region34: #{tpu_custom_call.1} parent=11 // pred_check_branch
        %223 = sbr.rel (%p221) target = $region36
      $region35: #{tpu_custom_call.1} parent=11 // pred_region
        _
      $region36: #{tpu_custom_call.1} parent=11 // pred_fallthru
        _
    $region12: #{tpu_custom_call.1} parent=5 // pred_fallthru
      _
    %p224 = scmp.lt.s32.totalorder %s13, 6
    // Predicated region
    $region37: #{tpu_custom_call.1} parent=5 // pred_check
      %p225 = pneg %p224
    $region38: #{tpu_custom_call.1} parent=5 // pred_check_branch
      %227 = sbr.rel (%p225) target = $region40
    $region39: #{tpu_custom_call.1} parent=5 // pred_region
      // Predicated region
      $region41: #{tpu_custom_call.1} parent=39 // pred_check
        %p228 = pneg %p33
      $region42: #{tpu_custom_call.1} parent=39 // pred_check_branch
        %230 = sbr.rel (%p228) target = $region44
      $region43: #{tpu_custom_call.1} parent=39 // pred_region
        %p231 = scmp.lt.s32.totalorder %s13, 5
        %s232 = scalar_select %p231, %s13, 5
        %s233 = smul.addr %s232, 8
        %s234 = smul.addr %s233, 8
        %s235 = scalar_lea.vmem %s0, %s234
      $region44: #{tpu_custom_call.1} parent=39 // pred_fallthru
        _
    $region40: #{tpu_custom_call.1} parent=5 // pred_fallthru
      _
    %p236 = scmp.le.s32.totalorder 1, %s13
    %p237 = scmp.lt.s32.totalorder %s13, 7
    %p238 = pnand %p236, %p237
    %p239 = pneg %p238
    // Predicated region
    $region45: #{tpu_custom_call.1} parent=5 // pred_check
      _
    $region46: #{tpu_custom_call.1} parent=5 // pred_check_branch
      %241 = sbr.rel (%p238) target = $region48
    $region47: #{tpu_custom_call.1} parent=5 // pred_region
      %s242 = ssub.s32 %s13, 1
      %p243 = scmp.lt.s32.totalorder %s18, 5
      %s244 = scalar_select %p243, %s18, 5
      %s245 = smul.addr %s244, 8
      %s246 = smul.addr %s245, 8
      %s247 = scalar_lea.vmem %s0, %s246
      %p248 = pneg %p39
      %p249 = pneg %p36
      %p250 = pneg %p60
      %p251 = pneg %p57
      %p252 = pneg %p81
      %p253 = pneg %p78
      %p254 = pneg %p102
      %p255 = pneg %p99
      %p256 = pneg %p123
      %p257 = pneg %p120
      %p258 = pneg %p144
      %p259 = pneg %p141
      %p260 = pneg %p165
      %p261 = pneg %p162
      %p262 = pneg %p191
      %p263 = pneg %p188
      %p264 = scmp.lt.s32.totalorder %s18, 5
      %s265 = scalar_select %p264, %s18, 5
      %s266 = smul.addr %s265, 8
      %s267 = smul.addr %s266, 8
      %s268 = scalar_lea.vmem %s7, %s267
      %p269 = scmp.lt.s32.totalorder %s18, 5
      %s270 = scalar_select %p269, %s18, 5
      %s271 = smul.addr %s270, 8
      %s272 = smul.addr %s271, 8
      %s273 = scalar_lea.vmem %s0, %s272
      %p274 = scmp.lt.s32.totalorder %s18, 5
      %s275 = scalar_select %p274, %s18, 5
      %s276 = smul.addr %s275, 8
      %s277 = smul.addr %s276, 8
      %s278 = scalar_lea.vmem %s7, %s277
      %vm280 = vcmask 130048
      %281 = vst.msk [vmem:[#allocation2] sm:$0xff] %vm280, 0.0
      %vm282 = vcmask 123904
      %283 = vst.msk [vmem:[#allocation2 + $0x8] sm:$0x3] %vm282, 0.0
      %s284 = scalar_lea.vmem [#allocation2], 144
      %285 = vst.msk [vmem:[%s284] sm:$0xff] %vm280, 0.0
      %286 = vst.msk [vmem:[%s284 + $0x8] sm:$0x3] %vm282, 0.0
      %vm287 = vcmask 122880
      %288 = vst.msk [vmem:[#allocation2] sm:$0x1] %vm287, 0.0
      %289 = vst.msk [vmem:[#allocation2 + $0x10] sm:$0x1] %vm287, 0.0
      %290 = vst.msk [vmem:[#allocation2 + $0x20] sm:$0x1] %vm287, 0.0
      %291 = vst.msk [vmem:[#allocation2 + $0x30] sm:$0x1] %vm287, 0.0
      %292 = vst.msk [vmem:[#allocation2 + $0x40] sm:$0x1] %vm287, 0.0
      %293 = vst.msk [vmem:[#allocation2 + $0x50] sm:$0x1] %vm287, 0.0
      %294 = vst.msk [vmem:[#allocation2 + $0x60] sm:$0x1] %vm287, 0.0
      %295 = vst.msk [vmem:[#allocation2 + $0x70] sm:$0x1] %vm287, 0.0
      %296 = vst.msk [vmem:[#allocation2 + $0x80] sm:$0x1] %vm287, 0.0
      %297 = vst.msk [vmem:[#allocation2 + $0x90] sm:$0x1] %vm287, 0.0
      %298 = vst.msk [vmem:[#allocation2 + $0x9] sm:$0x1] %vm287, 0.0
      %299 = vst.msk [vmem:[#allocation2 + $0x19] sm:$0x1] %vm287, 0.0
      %300 = vst.msk [vmem:[#allocation2 + $0x29] sm:$0x1] %vm287, 0.0
      %301 = vst.msk [vmem:[#allocation2 + $0x39] sm:$0x1] %vm287, 0.0
      %302 = vst.msk [vmem:[#allocation2 + $0x49] sm:$0x1] %vm287, 0.0
      %303 = vst.msk [vmem:[#allocation2 + $0x59] sm:$0x1] %vm287, 0.0
      %304 = vst.msk [vmem:[#allocation2 + $0x69] sm:$0x1] %vm287, 0.0
      %305 = vst.msk [vmem:[#allocation2 + $0x79] sm:$0x1] %vm287, 0.0
      %306 = vst.msk [vmem:[#allocation2 + $0x89] sm:$0x1] %vm287, 0.0
      %307 = vst.msk [vmem:[#allocation2 + $0x99] sm:$0x1] %vm287, 0.0
      %v308 = vld [vmem:[%s273] sm:$0xff]
      %v309 = vld [vmem:[%s273 + $0x8] sm:$0xff]
      %v310 = vld [vmem:[%s273 + $0x10] sm:$0xff]
      %v311 = vld [vmem:[%s273 + $0x18] sm:$0xff]
      %v312 = vld [vmem:[%s273 + $0x20] sm:$0xff]
      %v313 = vld [vmem:[%s273 + $0x28] sm:$0xff]
      %v314 = vld [vmem:[%s273 + $0x30] sm:$0xff]
      %v315 = vld [vmem:[%s273 + $0x38] sm:$0xff]
      %s316 = scalar_lea.vmem [#allocation2], 16
      %vm317 = vcmask 31744
      %318 = vst.msk [vmem:[%s316 + $0x1] sm:$0xff] %vm317, %v308
      %319 = vst.msk [vmem:[%s316 + $0x11] sm:$0xff] %vm317, %v309
      %320 = vst.msk [vmem:[%s316 + $0x21] sm:$0xff] %vm317, %v310
      %321 = vst.msk [vmem:[%s316 + $0x31] sm:$0xff] %vm317, %v311
      %322 = vst.msk [vmem:[%s316 + $0x41] sm:$0xff] %vm317, %v312
      %323 = vst.msk [vmem:[%s316 + $0x51] sm:$0xff] %vm317, %v313
      %324 = vst.msk [vmem:[%s316 + $0x61] sm:$0xff] %vm317, %v314
      %325 = vst.msk [vmem:[%s316 + $0x71] sm:$0xff] %vm317, %v315
      %v326 = vld [vmem:[%s2] sm:$0x1]
      %v327 = vld [vmem:[#allocation2] sm:$0xff]
      %v328 = vld [vmem:[#allocation2 + $0x10] sm:$0xff]
      %v329 = vld [vmem:[#allocation2 + $0x20] sm:$0xff]
      %v330 = vld [vmem:[#allocation2 + $0x30] sm:$0xff]
      %v331 = vld [vmem:[#allocation2 + $0x40] sm:$0xff]
      %v332 = vld [vmem:[#allocation2 + $0x50] sm:$0xff]
      %v333 = vld [vmem:[#allocation2 + $0x60] sm:$0xff]
      %v334 = vld [vmem:[#allocation2 + $0x70] sm:$0xff]
      %v335 = vpack.c.bf16 %v327, %v327
      %v336 = vpack.c.bf16 %v328, %v328
      %v337 = vpack.c.bf16 %v329, %v329
      %v338 = vpack.c.bf16 %v330, %v330
      %v339 = vpack.c.bf16 %v331, %v331
      %v340 = vpack.c.bf16 %v332, %v332
      %v341 = vpack.c.bf16 %v333, %v333
      %v342 = vpack.c.bf16 %v334, %v334
      %v343 = vld [vmem:[%s1] sm:$0x3]
      %v344 = vld [vmem:[#allocation2 + $0x1] sm:$0xff]
      %v345 = vld [vmem:[#allocation2 + $0x11] sm:$0xff]
      %v346 = vld [vmem:[#allocation2 + $0x21] sm:$0xff]
      %v347 = vld [vmem:[#allocation2 + $0x31] sm:$0xff]
      %v348 = vld [vmem:[#allocation2 + $0x41] sm:$0xff]
      %v349 = vld [vmem:[#allocation2 + $0x51] sm:$0xff]
      %v350 = vld [vmem:[#allocation2 + $0x61] sm:$0xff]
      %v351 = vld [vmem:[#allocation2 + $0x71] sm:$0xff]
      %v352 = vpack.c.bf16 %v344, %v344
      %v353 = vpack.c.bf16 %v345, %v345
      %v354 = vpack.c.bf16 %v346, %v346
      %v355 = vpack.c.bf16 %v347, %v347
      %v356 = vpack.c.bf16 %v348, %v348
      %v357 = vpack.c.bf16 %v349, %v349
      %v358 = vpack.c.bf16 %v350, %v350
      %v359 = vpack.c.bf16 %v351, %v351
      %s360 = scalar_lea.vmem %s1, 2
      %v361 = vld [vmem:[%s360] sm:$0x3]
      %v370 = vunpack.c.l.b16 %v352
      %v371 = vunpack.c.l.b16 %v353
      %v372 = vunpack.c.l.b16 %v354
      %v373 = vunpack.c.l.b16 %v355
      %v374 = vunpack.c.l.b16 %v356
      %v375 = vunpack.c.l.b16 %v357
      %v376 = vunpack.c.l.b16 %v358
      %v377 = vunpack.c.l.b16 %v359
      %v378 = vpack.c.b16 %v371, %v370
      %v379 = vpack.c.b16 %v373, %v372
      %v380 = vpack.c.b16 %v375, %v374
      %v381 = vpack.c.b16 %v377, %v376
      %v383 = vsel %vm317, %v378, 0
      %v386 = vsel %vm317, %v379, 0
      %v389 = vsel %vm317, %v380, 0
      %v392 = vsel %vm317, %v381, 0
      %vm394 = vcmask 1041408
      %v396 = vsel %vm394, %v361, 0
      %398 = vmatprep.subr.bf16.mxu0 0
      %399 = vmatpush1.bf16.msra.mxu0 %v396
      %400 = vmatprep.subr.bf16.mxu0 0
      %401 = vmatpush1.bf16.msra.mxu0 0
      %402 = vmatprep.subr.bf16.mxu0 0
      %403 = vmatpush1.bf16.msra.mxu0 0
      %404 = vmatprep.subr.bf16.mxu0 0
      %405 = vmatpush1.bf16.msra.mxu0 0
      %406 = vmatprep.subr.bf16.mxu0 0
      %407 = vmatpush1.bf16.msra.mxu0 0
      %408 = vmatprep.subr.bf16.mxu0 0
      %409 = vmatpush1.bf16.msra.mxu0 0
      %410 = vmatprep.subr.bf16.mxu0 0
      %411 = vmatpush1.bf16.msra.mxu0 0
      %412 = vmatprep.subr.bf16.mxu0 0
      %413 = vmatpush1.bf16.msra.mxu0 0
      %414 = vmatprep.subr.bf16.mxu0 0
      %415 = vmatpush1.bf16.msra.mxu0 0
      %416 = vmatprep.subr.bf16.mxu0 0
      %417 = vmatpush1.bf16.msra.mxu0 0
      %418 = vmatprep.subr.bf16.mxu0 0
      %419 = vmatpush1.bf16.msra.mxu0 0
      %420 = vmatprep.subr.bf16.mxu0 0
      %421 = vmatpush1.bf16.msra.mxu0 0
      %422 = vmatprep.subr.bf16.mxu0 0
      %423 = vmatpush1.bf16.msra.mxu0 0
      %424 = vmatprep.subr.bf16.mxu0 0
      %425 = vmatpush1.bf16.msra.mxu0 0
      %426 = vmatprep.subr.bf16.mxu0 0
      %427 = vmatpush1.bf16.msra.mxu0 0
      %428 = vmatprep.subr.bf16.mxu0 0
      %429 = vmatpush1.bf16.msra.mxu0 0
      %430 = vmatprep.mubr.bf16.mxu0 0
      %431 = vmatmul.mubr.bf16.gmra.mrb[0].mxu0 %v383
      %v432 = vpop.f32.mrb[0].mxu0
      %v433 = vadd.f32 0.0, %v432
      %v434 = vpop.f32.mrb[0].mxu0
      %v435 = vpop.f32.mrb[0].mxu0
      %v436 = vadd.f32 0.0, %v435
      %v437 = vpop.f32.mrb[0].mxu0
      %438 = vmatprep.mubr.bf16.mxu0 0
      %439 = vmatmul.mubr.bf16.gmra.mrb[0].mxu0 %v386
      %v440 = vpop.f32.mrb[0].mxu0
      %v441 = vadd.f32 0.0, %v440
      %v442 = vpop.f32.mrb[0].mxu0
      %v443 = vpop.f32.mrb[0].mxu0
      %v444 = vadd.f32 0.0, %v443
      %v445 = vpop.f32.mrb[0].mxu0
      %446 = vmatprep.mubr.bf16.mxu0 0
      %447 = vmatmul.mubr.bf16.gmra.mrb[0].mxu0 %v389
      %v448 = vpop.f32.mrb[0].mxu0
      %v449 = vadd.f32 0.0, %v448
      %v450 = vpop.f32.mrb[0].mxu0
      %v451 = vpop.f32.mrb[0].mxu0
      %v452 = vadd.f32 0.0, %v451
      %v453 = vpop.f32.mrb[0].mxu0
      %454 = vmatprep.mubr.bf16.mxu0 0
      %455 = vmatmul.mubr.bf16.gmra.mrb[0].mxu0 %v392
      %v456 = vpop.f32.mrb[0].mxu0
      %v457 = vadd.f32 0.0, %v456
      %v458 = vpop.f32.mrb[0].mxu0
      %v459 = vpop.f32.mrb[0].mxu0
      %v460 = vadd.f32 0.0, %v459
      %v461 = vpop.f32.mrb[0].mxu0
      %462 = vdwg.mxu0
      %v471 = vunpack.c.l.b16 %v335
      %v472 = vunpack.c.l.b16 %v336
      %v473 = vunpack.c.l.b16 %v337
      %v474 = vunpack.c.l.b16 %v338
      %v475 = vunpack.c.l.b16 %v339
      %v476 = vunpack.c.l.b16 %v340
      %v477 = vunpack.c.l.b16 %v341
      %v478 = vunpack.c.l.b16 %v342
      %v479 = vpack.c.b16 %v472, %v471
      %v480 = vpack.c.b16 %v474, %v473
      %v481 = vpack.c.b16 %v476, %v475
      %v482 = vpack.c.b16 %v478, %v477
      %v484 = vsel %vm317, %v479, 0
      %v487 = vsel %vm317, %v480, 0
      %v490 = vsel %vm317, %v481, 0
      %v493 = vsel %vm317, %v482, 0
      %v496 = vsel %vm394, %v343, 0
      %498 = vmatprep.subr.bf16.mxu0 0
      %499 = vmatpush1.bf16.msra.mxu0 %v496
      %500 = vmatprep.subr.bf16.mxu0 0
      %501 = vmatpush1.bf16.msra.mxu0 0
      %502 = vmatprep.subr.bf16.mxu0 0
      %503 = vmatpush1.bf16.msra.mxu0 0
      %504 = vmatprep.subr.bf16.mxu0 0
      %505 = vmatpush1.bf16.msra.mxu0 0
      %506 = vmatprep.subr.bf16.mxu0 0
      %507 = vmatpush1.bf16.msra.mxu0 0
      %508 = vmatprep.subr.bf16.mxu0 0
      %509 = vmatpush1.bf16.msra.mxu0 0
      %510 = vmatprep.subr.bf16.mxu0 0
      %511 = vmatpush1.bf16.msra.mxu0 0
      %512 = vmatprep.subr.bf16.mxu0 0
      %513 = vmatpush1.bf16.msra.mxu0 0
      %514 = vmatprep.subr.bf16.mxu0 0
      %515 = vmatpush1.bf16.msra.mxu0 0
      %516 = vmatprep.subr.bf16.mxu0 0
      %517 = vmatpush1.bf16.msra.mxu0 0
      %518 = vmatprep.subr.bf16.mxu0 0
      %519 = vmatpush1.bf16.msra.mxu0 0
      %520 = vmatprep.subr.bf16.mxu0 0
      %521 = vmatpush1.bf16.msra.mxu0 0
      %522 = vmatprep.subr.bf16.mxu0 0
      %523 = vmatpush1.bf16.msra.mxu0 0
      %524 = vmatprep.subr.bf16.mxu0 0
      %525 = vmatpush1.bf16.msra.mxu0 0
      %526 = vmatprep.subr.bf16.mxu0 0
      %527 = vmatpush1.bf16.msra.mxu0 0
      %528 = vmatprep.subr.bf16.mxu0 0
      %529 = vmatpush1.bf16.msra.mxu0 0
      %530 = vmatprep.mubr.bf16.mxu0 0
      %531 = vmatmul.mubr.bf16.gmra.mrb[0].mxu0 %v484
      %v532 = vpop.f32.mrb[0].mxu0
      %v533 = vadd.f32 %v433, %v532
      %v534 = vpop.f32.mrb[0].mxu0
      %v535 = vpop.f32.mrb[0].mxu0
      %v536 = vadd.f32 %v436, %v535
      %v537 = vpop.f32.mrb[0].mxu0
      %538 = vmatprep.mubr.bf16.mxu0 0
      %539 = vmatmul.mubr.bf16.gmra.mrb[0].mxu0 %v487
      %v540 = vpop.f32.mrb[0].mxu0
      %v541 = vadd.f32 %v441, %v540
      %v542 = vpop.f32.mrb[0].mxu0
      %v543 = vpop.f32.mrb[0].mxu0
      %v544 = vadd.f32 %v444, %v543
      %v545 = vpop.f32.mrb[0].mxu0
      %546 = vmatprep.mubr.bf16.mxu0 0
      %547 = vmatmul.mubr.bf16.gmra.mrb[0].mxu0 %v490
      %v548 = vpop.f32.mrb[0].mxu0
      %v549 = vadd.f32 %v449, %v548
      %v550 = vpop.f32.mrb[0].mxu0
      %v551 = vpop.f32.mrb[0].mxu0
      %v552 = vadd.f32 %v452, %v551
      %v553 = vpop.f32.mrb[0].mxu0
      %554 = vmatprep.mubr.bf16.mxu0 0
      %555 = vmatmul.mubr.bf16.gmra.mrb[0].mxu0 %v493
      %v556 = vpop.f32.mrb[0].mxu0
      %v557 = vadd.f32 %v457, %v556
      %v558 = vpop.f32.mrb[0].mxu0
      %v559 = vpop.f32.mrb[0].mxu0
      %v560 = vadd.f32 %v460, %v559
      %v561 = vpop.f32.mrb[0].mxu0
      %562 = vdwg.mxu0
      %v563 = vld [vmem:[#allocation2 + $0x2] sm:$0xff]
      %v564 = vld [vmem:[#allocation2 + $0x12] sm:$0xff]
      %v565 = vld [vmem:[#allocation2 + $0x22] sm:$0xff]
      %v566 = vld [vmem:[#allocation2 + $0x32] sm:$0xff]
      %v567 = vld [vmem:[#allocation2 + $0x42] sm:$0xff]
      %v568 = vld [vmem:[#allocation2 + $0x52] sm:$0xff]
      %v569 = vld [vmem:[#allocation2 + $0x62] sm:$0xff]
      %v570 = vld [vmem:[#allocation2 + $0x72] sm:$0xff]
      %v571 = vpack.c.bf16 %v563, %v563
      %v572 = vpack.c.bf16 %v564, %v564
      %v573 = vpack.c.bf16 %v565, %v565
      %v574 = vpack.c.bf16 %v566, %v566
      %v575 = vpack.c.bf16 %v567, %v567
      %v576 = vpack.c.bf16 %v568, %v568
      %v577 = vpack.c.bf16 %v569, %v569
      %v578 = vpack.c.bf16 %v570, %v570
      %s579 = scalar_lea.vmem %s1, 4
      %v580 = vld [vmem:[%s579] sm:$0x3]
      %v589 = vunpack.c.l.b16 %v571
      %v590 = vunpack.c.l.b16 %v572
      %v591 = vunpack.c.l.b16 %v573
      %v592 = vunpack.c.l.b16 %v574
      %v593 = vunpack.c.l.b16 %v575
      %v594 = vunpack.c.l.b16 %v576
      %v595 = vunpack.c.l.b16 %v577
      %v596 = vunpack.c.l.b16 %v578
      %v597 = vpack.c.b16 %v590, %v589
      %v598 = vpack.c.b16 %v592, %v591
      %v599 = vpack.c.b16 %v594, %v593
      %v600 = vpack.c.b16 %v596, %v595
      %v602 = vsel %vm317, %v597, 0
      %v605 = vsel %vm317, %v598, 0
      %v608 = vsel %vm317, %v599, 0
      %v611 = vsel %vm317, %v600, 0
      %v614 = vsel %vm394, %v580, 0
      %616 = vmatprep.subr.bf16.mxu0 0
      %617 = vmatpush1.bf16.msra.mxu0 %v614
      %618 = vmatprep.subr.bf16.mxu0 0
      %619 = vmatpush1.bf16.msra.mxu0 0
      %620 = vmatprep.subr.bf16.mxu0 0
      %621 = vmatpush1.bf16.msra.mxu0 0
      %622 = vmatprep.subr.bf16.mxu0 0
      %623 = vmatpush1.bf16.msra.mxu0 0
      %624 = vmatprep.subr.bf16.mxu0 0
      %625 = vmatpush1.bf16.msra.mxu0 0
      %626 = vmatprep.subr.bf16.mxu0 0
      %627 = vmatpush1.bf16.msra.mxu0 0
      %628 = vmatprep.subr.bf16.mxu0 0
      %629 = vmatpush1.bf16.msra.mxu0 0
      %630 = vmatprep.subr.bf16.mxu0 0
      %631 = vmatpush1.bf16.msra.mxu0 0
      %632 = vmatprep.subr.bf16.mxu0 0
      %633 = vmatpush1.bf16.msra.mxu0 0
      %634 = vmatprep.subr.bf16.mxu0 0
      %635 = vmatpush1.bf16.msra.mxu0 0
      %636 = vmatprep.subr.bf16.mxu0 0
      %637 = vmatpush1.bf16.msra.mxu0 0
      %638 = vmatprep.subr.bf16.mxu0 0
      %639 = vmatpush1.bf16.msra.mxu0 0
      %640 = vmatprep.subr.bf16.mxu0 0
      %641 = vmatpush1.bf16.msra.mxu0 0
      %642 = vmatprep.subr.bf16.mxu0 0
      %643 = vmatpush1.bf16.msra.mxu0 0
      %644 = vmatprep.subr.bf16.mxu0 0
      %645 = vmatpush1.bf16.msra.mxu0 0
      %646 = vmatprep.subr.bf16.mxu0 0
      %647 = vmatpush1.bf16.msra.mxu0 0
      %648 = vmatprep.mubr.bf16.mxu0 0
      %649 = vmatmul.mubr.bf16.gmra.mrb[0].mxu0 %v602
      %v650 = vpop.f32.mrb[0].mxu0
      %v651 = vadd.f32 0.0, %v650
      %v652 = vpop.f32.mrb[0].mxu0
      %v653 = vpop.f32.mrb[0].mxu0
      %v654 = vadd.f32 0.0, %v653
      %v655 = vpop.f32.mrb[0].mxu0
      %656 = vmatprep.mubr.bf16.mxu0 0
      %657 = vmatmul.mubr.bf16.gmra.mrb[0].mxu0 %v605
      %v658 = vpop.f32.mrb[0].mxu0
      %v659 = vadd.f32 0.0, %v658
      %v660 = vpop.f32.mrb[0].mxu0
      %v661 = vpop.f32.mrb[0].mxu0
      %v662 = vadd.f32 0.0, %v661
      %v663 = vpop.f32.mrb[0].mxu0
      %664 = vmatprep.mubr.bf16.mxu0 0
      %665 = vmatmul.mubr.bf16.gmra.mrb[0].mxu0 %v608
      %v666 = vpop.f32.mrb[0].mxu0
      %v667 = vadd.f32 0.0, %v666
      %v668 = vpop.f32.mrb[0].mxu0
      %v669 = vpop.f32.mrb[0].mxu0
      %v670 = vadd.f32 0.0, %v669
      %v671 = vpop.f32.mrb[0].mxu0
      %672 = vmatprep.mubr.bf16.mxu0 0
      %673 = vmatmul.mubr.bf16.gmra.mrb[0].mxu0 %v611
      %v674 = vpop.f32.mrb[0].mxu0
      %v675 = vadd.f32 0.0, %v674
      %v676 = vpop.f32.mrb[0].mxu0
      %v677 = vpop.f32.mrb[0].mxu0
      %v678 = vadd.f32 0.0, %v677
      %v679 = vpop.f32.mrb[0].mxu0
      %680 = vdwg.mxu0
      %v681 = vadd.f32 %v533, %v651
      %v682 = vadd.f32 %v536, %v654
      %v683 = vadd.f32 %v541, %v659
      %v684 = vadd.f32 %v544, %v662
      %v685 = vadd.f32 %v549, %v667
      %v686 = vadd.f32 %v552, %v670
      %v687 = vadd.f32 %v557, %v675
      %v688 = vadd.f32 %v560, %v678
      %v689 = vld [vmem:[%s316] sm:$0xff]
      %v690 = vld [vmem:[%s316 + $0x10] sm:$0xff]
      %v691 = vld [vmem:[%s316 + $0x20] sm:$0xff]
      %v692 = vld [vmem:[%s316 + $0x30] sm:$0xff]
      %v693 = vld [vmem:[%s316 + $0x40] sm:$0xff]
      %v694 = vld [vmem:[%s316 + $0x50] sm:$0xff]
      %v695 = vld [vmem:[%s316 + $0x60] sm:$0xff]
      %v696 = vld [vmem:[%s316 + $0x70] sm:$0xff]
      %v697 = vpack.c.bf16 %v689, %v689
      %v698 = vpack.c.bf16 %v690, %v690
      %v699 = vpack.c.bf16 %v691, %v691
      %v700 = vpack.c.bf16 %v692, %v692
      %v701 = vpack.c.bf16 %v693, %v693
      %v702 = vpack.c.bf16 %v694, %v694
      %v703 = vpack.c.bf16 %v695, %v695
      %v704 = vpack.c.bf16 %v696, %v696
      %s705 = scalar_lea.vmem %s1, 6
      %v706 = vld [vmem:[%s705] sm:$0x3]
      %v715 = vunpack.c.l.b16 %v697
      %v716 = vunpack.c.l.b16 %v698
      %v717 = vunpack.c.l.b16 %v699
      %v718 = vunpack.c.l.b16 %v700
      %v719 = vunpack.c.l.b16 %v701
      %v720 = vunpack.c.l.b16 %v702
      %v721 = vunpack.c.l.b16 %v703
      %v722 = vunpack.c.l.b16 %v704
      %v723 = vpack.c.b16 %v716, %v715
      %v724 = vpack.c.b16 %v718, %v717
      %v725 = vpack.c.b16 %v720, %v719
      %v726 = vpack.c.b16 %v722, %v721
      %v728 = vsel %vm317, %v723, 0
      %v731 = vsel %vm317, %v724, 0
      %v734 = vsel %vm317, %v725, 0
      %v737 = vsel %vm317, %v726, 0
      %v740 = vsel %vm394, %v706, 0
      %742 = vmatprep.subr.bf16.mxu0 0
      %743 = vmatpush1.bf16.msra.mxu0 %v740
      %744 = vmatprep.subr.bf16.mxu0 0
      %745 = vmatpush1.bf16.msra.mxu0 0
      %746 = vmatprep.subr.bf16.mxu0 0
      %747 = vmatpush1.bf16.msra.mxu0 0
      %748 = vmatprep.subr.bf16.mxu0 0
      %749 = vmatpush1.bf16.msra.mxu0 0
      %750 = vmatprep.subr.bf16.mxu0 0
      %751 = vmatpush1.bf16.msra.mxu0 0
      %752 = vmatprep.subr.bf16.mxu0 0
      %753 = vmatpush1.bf16.msra.mxu0 0
      %754 = vmatprep.subr.bf16.mxu0 0
      %755 = vmatpush1.bf16.msra.mxu0 0
      %756 = vmatprep.subr.bf16.mxu0 0
      %757 = vmatpush1.bf16.msra.mxu0 0
      %758 = vmatprep.subr.bf16.mxu0 0
      %759 = vmatpush1.bf16.msra.mxu0 0
      %760 = vmatprep.subr.bf16.mxu0 0
      %761 = vmatpush1.bf16.msra.mxu0 0
      %762 = vmatprep.subr.bf16.mxu0 0
      %763 = vmatpush1.bf16.msra.mxu0 0
      %764 = vmatprep.subr.bf16.mxu0 0
      %765 = vmatpush1.bf16.msra.mxu0 0
      %766 = vmatprep.subr.bf16.mxu0 0
      %767 = vmatpush1.bf16.msra.mxu0 0
      %768 = vmatprep.subr.bf16.mxu0 0
      %769 = vmatpush1.bf16.msra.mxu0 0
      %770 = vmatprep.subr.bf16.mxu0 0
      %771 = vmatpush1.bf16.msra.mxu0 0
      %772 = vmatprep.subr.bf16.mxu0 0
      %773 = vmatpush1.bf16.msra.mxu0 0
      %774 = vmatprep.mubr.bf16.mxu0 0
      %775 = vmatmul.mubr.bf16.gmra.mrb[0].mxu0 %v728
      %v776 = vpop.f32.mrb[0].mxu0
      %v777 = vadd.f32 0.0, %v776
      %v778 = vpop.f32.mrb[0].mxu0
      %v779 = vpop.f32.mrb[0].mxu0
      %v780 = vadd.f32 0.0, %v779
      %v781 = vpop.f32.mrb[0].mxu0
      %782 = vmatprep.mubr.bf16.mxu0 0
      %783 = vmatmul.mubr.bf16.gmra.mrb[0].mxu0 %v731
      %v784 = vpop.f32.mrb[0].mxu0
      %v785 = vadd.f32 0.0, %v784
      %v786 = vpop.f32.mrb[0].mxu0
      %v787 = vpop.f32.mrb[0].mxu0
      %v788 = vadd.f32 0.0, %v787
      %v789 = vpop.f32.mrb[0].mxu0
      %790 = vmatprep.mubr.bf16.mxu0 0
      %791 = vmatmul.mubr.bf16.gmra.mrb[0].mxu0 %v734
      %v792 = vpop.f32.mrb[0].mxu0
      %v793 = vadd.f32 0.0, %v792
      %v794 = vpop.f32.mrb[0].mxu0
      %v795 = vpop.f32.mrb[0].mxu0
      %v796 = vadd.f32 0.0, %v795
      %v797 = vpop.f32.mrb[0].mxu0
      %798 = vmatprep.mubr.bf16.mxu0 0
      %799 = vmatmul.mubr.bf16.gmra.mrb[0].mxu0 %v737
      %v800 = vpop.f32.mrb[0].mxu0
      %v801 = vadd.f32 0.0, %v800
      %v802 = vpop.f32.mrb[0].mxu0
      %v803 = vpop.f32.mrb[0].mxu0
      %v804 = vadd.f32 0.0, %v803
      %v805 = vpop.f32.mrb[0].mxu0
      %806 = vdwg.mxu0
      %v807 = vadd.f32 %v681, %v777
      %v808 = vadd.f32 %v682, %v780
      %v809 = vadd.f32 %v683, %v785
      %v810 = vadd.f32 %v684, %v788
      %v811 = vadd.f32 %v685, %v793
      %v812 = vadd.f32 %v686, %v796
      %v813 = vadd.f32 %v687, %v801
      %v814 = vadd.f32 %v688, %v804
      %v815 = vld [vmem:[%s316 + $0x1] sm:$0xff]
      %v816 = vld [vmem:[%s316 + $0x11] sm:$0xff]
      %v817 = vld [vmem:[%s316 + $0x21] sm:$0xff]
      %v818 = vld [vmem:[%s316 + $0x31] sm:$0xff]
      %v819 = vld [vmem:[%s316 + $0x41] sm:$0xff]
      %v820 = vld [vmem:[%s316 + $0x51] sm:$0xff]
      %v821 = vld [vmem:[%s316 + $0x61] sm:$0xff]
      %v822 = vld [vmem:[%s316 + $0x71] sm:$0xff]
      %v823 = vpack.c.bf16 %v815, %v815
      %v824 = vpack.c.bf16 %v816, %v816
      %v825 = vpack.c.bf16 %v817, %v817
      %v826 = vpack.c.bf16 %v818, %v818
      %v827 = vpack.c.bf16 %v819, %v819
      %v828 = vpack.c.bf16 %v820, %v820
      %v829 = vpack.c.bf16 %v821, %v821
      %v830 = vpack.c.bf16 %v822, %v822
      %s831 = scalar_lea.vmem %s1, 8
      %v832 = vld [vmem:[%s831] sm:$0x3]
      %v841 = vunpack.c.l.b16 %v823
      %v842 = vunpack.c.l.b16 %v824
      %v843 = vunpack.c.l.b16 %v825
      %v844 = vunpack.c.l.b16 %v826
      %v845 = vunpack.c.l.b16 %v827
      %v846 = vunpack.c.l.b16 %v828
      %v847 = vunpack.c.l.b16 %v829
      %v848 = vunpack.c.l.b16 %v830
      %v849 = vpack.c.b16 %v842, %v841
      %v850 = vpack.c.b16 %v844, %v843
      %v851 = vpack.c.b16 %v846, %v845
      %v852 = vpack.c.b16 %v848, %v847
      %v854 = vsel %vm317, %v849, 0
      %v857 = vsel %vm317, %v850, 0
      %v860 = vsel %vm317, %v851, 0
      %v863 = vsel %vm317, %v852, 0
      %v866 = vsel %vm394, %v832, 0
      %868 = vmatprep.subr.bf16.mxu0 0
      %869 = vmatpush1.bf16.msra.mxu0 %v866
      %870 = vmatprep.subr.bf16.mxu0 0
      %871 = vmatpush1.bf16.msra.mxu0 0
      %872 = vmatprep.subr.bf16.mxu0 0
      %873 = vmatpush1.bf16.msra.mxu0 0
      %874 = vmatprep.subr.bf16.mxu0 0
      %875 = vmatpush1.bf16.msra.mxu0 0
      %876 = vmatprep.subr.bf16.mxu0 0
      %877 = vmatpush1.bf16.msra.mxu0 0
      %878 = vmatprep.subr.bf16.mxu0 0
      %879 = vmatpush1.bf16.msra.mxu0 0
      %880 = vmatprep.subr.bf16.mxu0 0
      %881 = vmatpush1.bf16.msra.mxu0 0
      %882 = vmatprep.subr.bf16.mxu0 0
      %883 = vmatpush1.bf16.msra.mxu0 0
      %884 = vmatprep.subr.bf16.mxu0 0
      %885 = vmatpush1.bf16.msra.mxu0 0
      %886 = vmatprep.subr.bf16.mxu0 0
      %887 = vmatpush1.bf16.msra.mxu0 0
      %888 = vmatprep.subr.bf16.mxu0 0
      %889 = vmatpush1.bf16.msra.mxu0 0
      %890 = vmatprep.subr.bf16.mxu0 0
      %891 = vmatpush1.bf16.msra.mxu0 0
      %892 = vmatprep.subr.bf16.mxu0 0
      %893 = vmatpush1.bf16.msra.mxu0 0
      %894 = vmatprep.subr.bf16.mxu0 0
      %895 = vmatpush1.bf16.msra.mxu0 0
      %896 = vmatprep.subr.bf16.mxu0 0
      %897 = vmatpush1.bf16.msra.mxu0 0
      %898 = vmatprep.subr.bf16.mxu0 0
      %899 = vmatpush1.bf16.msra.mxu0 0
      %900 = vmatprep.mubr.bf16.mxu0 0
      %901 = vmatmul.mubr.bf16.gmra.mrb[0].mxu0 %v854
      %v902 = vpop.f32.mrb[0].mxu0
      %v903 = vadd.f32 0.0, %v902
      %v904 = vpop.f32.mrb[0].mxu0
      %v905 = vpop.f32.mrb[0].mxu0
      %v906 = vadd.f32 0.0, %v905
      %v907 = vpop.f32.mrb[0].mxu0
      %908 = vmatprep.mubr.bf16.mxu0 0
      %909 = vmatmul.mubr.bf16.gmra.mrb[0].mxu0 %v857
      %v910 = vpop.f32.mrb[0].mxu0
      %v911 = vadd.f32 0.0, %v910
      %v912 = vpop.f32.mrb[0].mxu0
      %v913 = vpop.f32.mrb[0].mxu0
      %v914 = vadd.f32 0.0, %v913
      %v915 = vpop.f32.mrb[0].mxu0
      %916 = vmatprep.mubr.bf16.mxu0 0
      %917 = vmatmul.mubr.bf16.gmra.mrb[0].mxu0 %v860
      %v918 = vpop.f32.mrb[0].mxu0
      %v919 = vadd.f32 0.0, %v918
      %v920 = vpop.f32.mrb[0].mxu0
      %v921 = vpop.f32.mrb[0].mxu0
      %v922 = vadd.f32 0.0, %v921
      %v923 = vpop.f32.mrb[0].mxu0
      %924 = vmatprep.mubr.bf16.mxu0 0
      %925 = vmatmul.mubr.bf16.gmra.mrb[0].mxu0 %v863
      %v926 = vpop.f32.mrb[0].mxu0
      %v927 = vadd.f32 0.0, %v926
      %v928 = vpop.f32.mrb[0].mxu0
      %v929 = vpop.f32.mrb[0].mxu0
      %v930 = vadd.f32 0.0, %v929
      %v931 = vpop.f32.mrb[0].mxu0
      %932 = vdwg.mxu0
      %v933 = vadd.f32 %v807, %v903
      %v934 = vadd.f32 %v808, %v906
      %v935 = vadd.f32 %v809, %v911
      %v936 = vadd.f32 %v810, %v914
      %v937 = vadd.f32 %v811, %v919
      %v938 = vadd.f32 %v812, %v922
      %v939 = vadd.f32 %v813, %v927
      %v940 = vadd.f32 %v814, %v930
      %v941 = vld [vmem:[%s316 + $0x2] sm:$0xff]
      %v942 = vld [vmem:[%s316 + $0x12] sm:$0xff]
      %v943 = vld [vmem:[%s316 + $0x22] sm:$0xff]
      %v944 = vld [vmem:[%s316 + $0x32] sm:$0xff]
      %v945 = vld [vmem:[%s316 + $0x42] sm:$0xff]
      %v946 = vld [vmem:[%s316 + $0x52] sm:$0xff]
      %v947 = vld [vmem:[%s316 + $0x62] sm:$0xff]
      %v948 = vld [vmem:[%s316 + $0x72] sm:$0xff]
      %v949 = vpack.c.bf16 %v941, %v941
      %v950 = vpack.c.bf16 %v942, %v942
      %v951 = vpack.c.bf16 %v943, %v943
      %v952 = vpack.c.bf16 %v944, %v944
      %v953 = vpack.c.bf16 %v945, %v945
      %v954 = vpack.c.bf16 %v946, %v946
      %v955 = vpack.c.bf16 %v947, %v947
      %v956 = vpack.c.bf16 %v948, %v948
      %s957 = scalar_lea.vmem %s1, 10
      %v958 = vld [vmem:[%s957] sm:$0x3]
      %v967 = vunpack.c.l.b16 %v949
      %v968 = vunpack.c.l.b16 %v950
      %v969 = vunpack.c.l.b16 %v951
      %v970 = vunpack.c.l.b16 %v952
      %v971 = vunpack.c.l.b16 %v953
      %v972 = vunpack.c.l.b16 %v954
      %v973 = vunpack.c.l.b16 %v955
      %v974 = vunpack.c.l.b16 %v956
      %v975 = vpack.c.b16 %v968, %v967
      %v976 = vpack.c.b16 %v970, %v969
      %v977 = vpack.c.b16 %v972, %v971
      %v978 = vpack.c.b16 %v974, %v973
      %v980 = vsel %vm317, %v975, 0
      %v983 = vsel %vm317, %v976, 0
      %v986 = vsel %vm317, %v977, 0
      %v989 = vsel %vm317, %v978, 0
      %v992 = vsel %vm394, %v958, 0
      %994 = vmatprep.subr.bf16.mxu0 0
      %995 = vmatpush1.bf16.msra.mxu0 %v992
      %996 = vmatprep.subr.bf16.mxu0 0
      %997 = vmatpush1.bf16.msra.mxu0 0
      %998 = vmatprep.subr.bf16.mxu0 0
      %999 = vmatpush1.bf16.msra.mxu0 0
      %1000 = vmatprep.subr.bf16.mxu0 0
      %1001 = vmatpush1.bf16.msra.mxu0 0
      %1002 = vmatprep.subr.bf16.mxu0 0
      %1003 = vmatpush1.bf16.msra.mxu0 0
      %1004 = vmatprep.subr.bf16.mxu0 0
      %1005 = vmatpush1.bf16.msra.mxu0 0
      %1006 = vmatprep.subr.bf16.mxu0 0
      %1007 = vmatpush1.bf16.msra.mxu0 0
      %1008 = vmatprep.subr.bf16.mxu0 0
      %1009 = vmatpush1.bf16.msra.mxu0 0
      %1010 = vmatprep.subr.bf16.mxu0 0
      %1011 = vmatpush1.bf16.msra.mxu0 0
      %1012 = vmatprep.subr.bf16.mxu0 0
      %1013 = vmatpush1.bf16.msra.mxu0 0
      %1014 = vmatprep.subr.bf16.mxu0 0
      %1015 = vmatpush1.bf16.msra.mxu0 0
      %1016 = vmatprep.subr.bf16.mxu0 0
      %1017 = vmatpush1.bf16.msra.mxu0 0
      %1018 = vmatprep.subr.bf16.mxu0 0
      %1019 = vmatpush1.bf16.msra.mxu0 0
      %1020 = vmatprep.subr.bf16.mxu0 0
      %1021 = vmatpush1.bf16.msra.mxu0 0
      %1022 = vmatprep.subr.bf16.mxu0 0
      %1023 = vmatpush1.bf16.msra.mxu0 0
      %1024 = vmatprep.subr.bf16.mxu0 0
      %1025 = vmatpush1.bf16.msra.mxu0 0
      %1026 = vmatprep.mubr.bf16.mxu0 0
      %1027 = vmatmul.mubr.bf16.gmra.mrb[0].mxu0 %v980
      %v1028 = vpop.f32.mrb[0].mxu0
      %v1029 = vadd.f32 0.0, %v1028
      %v1030 = vpop.f32.mrb[0].mxu0
      %v1031 = vpop.f32.mrb[0].mxu0
      %v1032 = vadd.f32 0.0, %v1031
      %v1033 = vpop.f32.mrb[0].mxu0
      %1034 = vmatprep.mubr.bf16.mxu0 0
      %1035 = vmatmul.mubr.bf16.gmra.mrb[0].mxu0 %v983
      %v1036 = vpop.f32.mrb[0].mxu0
      %v1037 = vadd.f32 0.0, %v1036
      %v1038 = vpop.f32.mrb[0].mxu0
      %v1039 = vpop.f32.mrb[0].mxu0
      %v1040 = vadd.f32 0.0, %v1039
      %v1041 = vpop.f32.mrb[0].mxu0
      %1042 = vmatprep.mubr.bf16.mxu0 0
      %1043 = vmatmul.mubr.bf16.gmra.mrb[0].mxu0 %v986
      %v1044 = vpop.f32.mrb[0].mxu0
      %v1045 = vadd.f32 0.0, %v1044
      %v1046 = vpop.f32.mrb[0].mxu0
      %v1047 = vpop.f32.mrb[0].mxu0
      %v1048 = vadd.f32 0.0, %v1047
      %v1049 = vpop.f32.mrb[0].mxu0
      %1050 = vmatprep.mubr.bf16.mxu0 0
      %1051 = vmatmul.mubr.bf16.gmra.mrb[0].mxu0 %v989
      %v1052 = vpop.f32.mrb[0].mxu0
      %v1053 = vadd.f32 0.0, %v1052
      %v1054 = vpop.f32.mrb[0].mxu0
      %v1055 = vpop.f32.mrb[0].mxu0
      %v1056 = vadd.f32 0.0, %v1055
      %v1057 = vpop.f32.mrb[0].mxu0
      %1058 = vdwg.mxu0
      %v1059 = vadd.f32 %v933, %v1029
      %v1060 = vadd.f32 %v934, %v1032
      %v1061 = vadd.f32 %v935, %v1037
      %v1062 = vadd.f32 %v936, %v1040
      %v1063 = vadd.f32 %v937, %v1045
      %v1064 = vadd.f32 %v938, %v1048
      %v1065 = vadd.f32 %v939, %v1053
      %v1066 = vadd.f32 %v940, %v1056
      %s1067 = scalar_lea.vmem [#allocation2], 32
      %v1068 = vld [vmem:[%s1067] sm:$0xff]
      %v1069 = vld [vmem:[%s1067 + $0x10] sm:$0xff]
      %v1070 = vld [vmem:[%s1067 + $0x20] sm:$0xff]
      %v1071 = vld [vmem:[%s1067 + $0x30] sm:$0xff]
      %v1072 = vld [vmem:[%s1067 + $0x40] sm:$0xff]
      %v1073 = vld [vmem:[%s1067 + $0x50] sm:$0xff]
      %v1074 = vld [vmem:[%s1067 + $0x60] sm:$0xff]
      %v1075 = vld [vmem:[%s1067 + $0x70] sm:$0xff]
      %v1076 = vpack.c.bf16 %v1068, %v1068
      %v1077 = vpack.c.bf16 %v1069, %v1069
      %v1078 = vpack.c.bf16 %v1070, %v1070
      %v1079 = vpack.c.bf16 %v1071, %v1071
      %v1080 = vpack.c.bf16 %v1072, %v1072
      %v1081 = vpack.c.bf16 %v1073, %v1073
      %v1082 = vpack.c.bf16 %v1074, %v1074
      %v1083 = vpack.c.bf16 %v1075, %v1075
      %s1084 = scalar_lea.vmem %s1, 12
      %v1085 = vld [vmem:[%s1084] sm:$0x3]
      %v1094 = vunpack.c.l.b16 %v1076
      %v1095 = vunpack.c.l.b16 %v1077
      %v1096 = vunpack.c.l.b16 %v1078
      %v1097 = vunpack.c.l.b16 %v1079
      %v1098 = vunpack.c.l.b16 %v1080
      %v1099 = vunpack.c.l.b16 %v1081
      %v1100 = vunpack.c.l.b16 %v1082
      %v1101 = vunpack.c.l.b16 %v1083
      %v1102 = vpack.c.b16 %v1095, %v1094
      %v1103 = vpack.c.b16 %v1097, %v1096
      %v1104 = vpack.c.b16 %v1099, %v1098
      %v1105 = vpack.c.b16 %v1101, %v1100
      %v1107 = vsel %vm317, %v1102, 0
      %v1110 = vsel %vm317, %v1103, 0
      %v1113 = vsel %vm317, %v1104, 0
      %v1116 = vsel %vm317, %v1105, 0
      %v1119 = vsel %vm394, %v1085, 0
      %1121 = vmatprep.subr.bf16.mxu0 0
      %1122 = vmatpush1.bf16.msra.mxu0 %v1119
      %1123 = vmatprep.subr.bf16.mxu0 0
      %1124 = vmatpush1.bf16.msra.mxu0 0
      %1125 = vmatprep.subr.bf16.mxu0 0
      %1126 = vmatpush1.bf16.msra.mxu0 0
      %1127 = vmatprep.subr.bf16.mxu0 0
      %1128 = vmatpush1.bf16.msra.mxu0 0
      %1129 = vmatprep.subr.bf16.mxu0 0
      %1130 = vmatpush1.bf16.msra.mxu0 0
      %1131 = vmatprep.subr.bf16.mxu0 0
      %1132 = vmatpush1.bf16.msra.mxu0 0
      %1133 = vmatprep.subr.bf16.mxu0 0
      %1134 = vmatpush1.bf16.msra.mxu0 0
      %1135 = vmatprep.subr.bf16.mxu0 0
      %1136 = vmatpush1.bf16.msra.mxu0 0
      %1137 = vmatprep.subr.bf16.mxu0 0
      %1138 = vmatpush1.bf16.msra.mxu0 0
      %1139 = vmatprep.subr.bf16.mxu0 0
      %1140 = vmatpush1.bf16.msra.mxu0 0
      %1141 = vmatprep.subr.bf16.mxu0 0
      %1142 = vmatpush1.bf16.msra.mxu0 0
      %1143 = vmatprep.subr.bf16.mxu0 0
      %1144 = vmatpush1.bf16.msra.mxu0 0
      %1145 = vmatprep.subr.bf16.mxu0 0
      %1146 = vmatpush1.bf16.msra.mxu0 0
      %1147 = vmatprep.subr.bf16.mxu0 0
      %1148 = vmatpush1.bf16.msra.mxu0 0
      %1149 = vmatprep.subr.bf16.mxu0 0
      %1150 = vmatpush1.bf16.msra.mxu0 0
      %1151 = vmatprep.subr.bf16.mxu0 0
      %1152 = vmatpush1.bf16.msra.mxu0 0
      %1153 = vmatprep.mubr.bf16.mxu0 0
      %1154 = vmatmul.mubr.bf16.gmra.mrb[0].mxu0 %v1107
      %v1155 = vpop.f32.mrb[0].mxu0
      %v1156 = vadd.f32 0.0, %v1155
      %v1157 = vpop.f32.mrb[0].mxu0
      %v1158 = vpop.f32.mrb[0].mxu0
      %v1159 = vadd.f32 0.0, %v1158
      %v1160 = vpop.f32.mrb[0].mxu0
      %1161 = vmatprep.mubr.bf16.mxu0 0
      %1162 = vmatmul.mubr.bf16.gmra.mrb[0].mxu0 %v1110
      %v1163 = vpop.f32.mrb[0].mxu0
      %v1164 = vadd.f32 0.0, %v1163
      %v1165 = vpop.f32.mrb[0].mxu0
      %v1166 = vpop.f32.mrb[0].mxu0
      %v1167 = vadd.f32 0.0, %v1166
      %v1168 = vpop.f32.mrb[0].mxu0
      %1169 = vmatprep.mubr.bf16.mxu0 0
      %1170 = vmatmul.mubr.bf16.gmra.mrb[0].mxu0 %v1113
      %v1171 = vpop.f32.mrb[0].mxu0
      %v1172 = vadd.f32 0.0, %v1171
      %v1173 = vpop.f32.mrb[0].mxu0
      %v1174 = vpop.f32.mrb[0].mxu0
      %v1175 = vadd.f32 0.0, %v1174
      %v1176 = vpop.f32.mrb[0].mxu0
      %1177 = vmatprep.mubr.bf16.mxu0 0
      %1178 = vmatmul.mubr.bf16.gmra.mrb[0].mxu0 %v1116
      %v1179 = vpop.f32.mrb[0].mxu0
      %v1180 = vadd.f32 0.0, %v1179
      %v1181 = vpop.f32.mrb[0].mxu0
      %v1182 = vpop.f32.mrb[0].mxu0
      %v1183 = vadd.f32 0.0, %v1182
      %v1184 = vpop.f32.mrb[0].mxu0
      %1185 = vdwg.mxu0
      %v1186 = vadd.f32 %v1059, %v1156
      %v1187 = vadd.f32 %v1060, %v1159
      %v1188 = vadd.f32 %v1061, %v1164
      %v1189 = vadd.f32 %v1062, %v1167
      %v1190 = vadd.f32 %v1063, %v1172
      %v1191 = vadd.f32 %v1064, %v1175
      %v1192 = vadd.f32 %v1065, %v1180
      %v1193 = vadd.f32 %v1066, %v1183
      %v1194 = vld [vmem:[%s1067 + $0x1] sm:$0xff]
      %v1195 = vld [vmem:[%s1067 + $0x11] sm:$0xff]
      %v1196 = vld [vmem:[%s1067 + $0x21] sm:$0xff]
      %v1197 = vld [vmem:[%s1067 + $0x31] sm:$0xff]
      %v1198 = vld [vmem:[%s1067 + $0x41] sm:$0xff]
      %v1199 = vld [vmem:[%s1067 + $0x51] sm:$0xff]
      %v1200 = vld [vmem:[%s1067 + $0x61] sm:$0xff]
      %v1201 = vld [vmem:[%s1067 + $0x71] sm:$0xff]
      %v1202 = vpack.c.bf16 %v1194, %v1194
      %v1203 = vpack.c.bf16 %v1195, %v1195
      %v1204 = vpack.c.bf16 %v1196, %v1196
      %v1205 = vpack.c.bf16 %v1197, %v1197
      %v1206 = vpack.c.bf16 %v1198, %v1198
      %v1207 = vpack.c.bf16 %v1199, %v1199
      %v1208 = vpack.c.bf16 %v1200, %v1200
      %v1209 = vpack.c.bf16 %v1201, %v1201
      %s1210 = scalar_lea.vmem %s1, 14
      %v1211 = vld [vmem:[%s1210] sm:$0x3]
      %v1220 = vunpack.c.l.b16 %v1202
      %v1221 = vunpack.c.l.b16 %v1203
      %v1222 = vunpack.c.l.b16 %v1204
      %v1223 = vunpack.c.l.b16 %v1205
      %v1224 = vunpack.c.l.b16 %v1206
      %v1225 = vunpack.c.l.b16 %v1207
      %v1226 = vunpack.c.l.b16 %v1208
      %v1227 = vunpack.c.l.b16 %v1209
      %v1228 = vpack.c.b16 %v1221, %v1220
      %v1229 = vpack.c.b16 %v1223, %v1222
      %v1230 = vpack.c.b16 %v1225, %v1224
      %v1231 = vpack.c.b16 %v1227, %v1226
      %v1233 = vsel %vm317, %v1228, 0
      %v1236 = vsel %vm317, %v1229, 0
      %v1239 = vsel %vm317, %v1230, 0
      %v1242 = vsel %vm317, %v1231, 0
      %v1245 = vsel %vm394, %v1211, 0
      %1247 = vmatprep.subr.bf16.mxu0 0
      %1248 = vmatpush1.bf16.msra.mxu0 %v1245
      %1249 = vmatprep.subr.bf16.mxu0 0
      %1250 = vmatpush1.bf16.msra.mxu0 0
      %1251 = vmatprep.subr.bf16.mxu0 0
      %1252 = vmatpush1.bf16.msra.mxu0 0
      %1253 = vmatprep.subr.bf16.mxu0 0
      %1254 = vmatpush1.bf16.msra.mxu0 0
      %1255 = vmatprep.subr.bf16.mxu0 0
      %1256 = vmatpush1.bf16.msra.mxu0 0
      %1257 = vmatprep.subr.bf16.mxu0 0
      %1258 = vmatpush1.bf16.msra.mxu0 0
      %1259 = vmatprep.subr.bf16.mxu0 0
      %1260 = vmatpush1.bf16.msra.mxu0 0
      %1261 = vmatprep.subr.bf16.mxu0 0
      %1262 = vmatpush1.bf16.msra.mxu0 0
      %1263 = vmatprep.subr.bf16.mxu0 0
      %1264 = vmatpush1.bf16.msra.mxu0 0
      %1265 = vmatprep.subr.bf16.mxu0 0
      %1266 = vmatpush1.bf16.msra.mxu0 0
      %1267 = vmatprep.subr.bf16.mxu0 0
      %1268 = vmatpush1.bf16.msra.mxu0 0
      %1269 = vmatprep.subr.bf16.mxu0 0
      %1270 = vmatpush1.bf16.msra.mxu0 0
      %1271 = vmatprep.subr.bf16.mxu0 0
      %1272 = vmatpush1.bf16.msra.mxu0 0
      %1273 = vmatprep.subr.bf16.mxu0 0
      %1274 = vmatpush1.bf16.msra.mxu0 0
      %1275 = vmatprep.subr.bf16.mxu0 0
      %1276 = vmatpush1.bf16.msra.mxu0 0
      %1277 = vmatprep.subr.bf16.mxu0 0
      %1278 = vmatpush1.bf16.msra.mxu0 0
      %1279 = vmatprep.mubr.bf16.mxu0 0
      %1280 = vmatmul.mubr.bf16.gmra.mrb[0].mxu0 %v1233
      %v1281 = vpop.f32.mrb[0].mxu0
      %v1282 = vadd.f32 0.0, %v1281
      %v1283 = vpop.f32.mrb[0].mxu0
      %v1284 = vpop.f32.mrb[0].mxu0
      %v1285 = vadd.f32 0.0, %v1284
      %v1286 = vpop.f32.mrb[0].mxu0
      %1287 = vmatprep.mubr.bf16.mxu0 0
      %1288 = vmatmul.mubr.bf16.gmra.mrb[0].mxu0 %v1236
      %v1289 = vpop.f32.mrb[0].mxu0
      %v1290 = vadd.f32 0.0, %v1289
      %v1291 = vpop.f32.mrb[0].mxu0
      %v1292 = vpop.f32.mrb[0].mxu0
      %v1293 = vadd.f32 0.0, %v1292
      %v1294 = vpop.f32.mrb[0].mxu0
      %1295 = vmatprep.mubr.bf16.mxu0 0
      %1296 = vmatmul.mubr.bf16.gmra.mrb[0].mxu0 %v1239
      %v1297 = vpop.f32.mrb[0].mxu0
      %v1298 = vadd.f32 0.0, %v1297
      %v1299 = vpop.f32.mrb[0].mxu0
      %v1300 = vpop.f32.mrb[0].mxu0
      %v1301 = vadd.f32 0.0, %v1300
      %v1302 = vpop.f32.mrb[0].mxu0
      %1303 = vmatprep.mubr.bf16.mxu0 0
      %1304 = vmatmul.mubr.bf16.gmra.mrb[0].mxu0 %v1242
      %v1305 = vpop.f32.mrb[0].mxu0
      %v1306 = vadd.f32 0.0, %v1305
      %v1307 = vpop.f32.mrb[0].mxu0
      %v1308 = vpop.f32.mrb[0].mxu0
      %v1309 = vadd.f32 0.0, %v1308
      %v1310 = vpop.f32.mrb[0].mxu0
      %1311 = vdwg.mxu0
      %v1312 = vadd.f32 %v1186, %v1282
      %v1313 = vadd.f32 %v1187, %v1285
      %v1314 = vadd.f32 %v1188, %v1290
      %v1315 = vadd.f32 %v1189, %v1293
      %v1316 = vadd.f32 %v1190, %v1298
      %v1317 = vadd.f32 %v1191, %v1301
      %v1318 = vadd.f32 %v1192, %v1306
      %v1319 = vadd.f32 %v1193, %v1309
      %v1320 = vld [vmem:[%s1067 + $0x2] sm:$0xff]
      %v1321 = vld [vmem:[%s1067 + $0x12] sm:$0xff]
      %v1322 = vld [vmem:[%s1067 + $0x22] sm:$0xff]
      %v1323 = vld [vmem:[%s1067 + $0x32] sm:$0xff]
      %v1324 = vld [vmem:[%s1067 + $0x42] sm:$0xff]
      %v1325 = vld [vmem:[%s1067 + $0x52] sm:$0xff]
      %v1326 = vld [vmem:[%s1067 + $0x62] sm:$0xff]
      %v1327 = vld [vmem:[%s1067 + $0x72] sm:$0xff]
      %v1328 = vpack.c.bf16 %v1320, %v1320
      %v1329 = vpack.c.bf16 %v1321, %v1321
      %v1330 = vpack.c.bf16 %v1322, %v1322
      %v1331 = vpack.c.bf16 %v1323, %v1323
      %v1332 = vpack.c.bf16 %v1324, %v1324
      %v1333 = vpack.c.bf16 %v1325, %v1325
      %v1334 = vpack.c.bf16 %v1326, %v1326
      %v1335 = vpack.c.bf16 %v1327, %v1327
      %s1336 = scalar_lea.vmem %s1, 16
      %v1337 = vld [vmem:[%s1336] sm:$0x3]
      %v1346 = vunpack.c.l.b16 %v1328
      %v1347 = vunpack.c.l.b16 %v1329
      %v1348 = vunpack.c.l.b16 %v1330
      %v1349 = vunpack.c.l.b16 %v1331
      %v1350 = vunpack.c.l.b16 %v1332
      %v1351 = vunpack.c.l.b16 %v1333
      %v1352 = vunpack.c.l.b16 %v1334
      %v1353 = vunpack.c.l.b16 %v1335
      %v1354 = vpack.c.b16 %v1347, %v1346
      %v1355 = vpack.c.b16 %v1349, %v1348
      %v1356 = vpack.c.b16 %v1351, %v1350
      %v1357 = vpack.c.b16 %v1353, %v1352
      %v1359 = vsel %vm317, %v1354, 0
      %v1362 = vsel %vm317, %v1355, 0
      %v1365 = vsel %vm317, %v1356, 0
      %v1368 = vsel %vm317, %v1357, 0
      %v1371 = vsel %vm394, %v1337, 0
      %1373 = vmatprep.subr.bf16.mxu0 0
      %1374 = vmatpush1.bf16.msra.mxu0 %v1371
      %1375 = vmatprep.subr.bf16.mxu0 0
      %1376 = vmatpush1.bf16.msra.mxu0 0
      %1377 = vmatprep.subr.bf16.mxu0 0
      %1378 = vmatpush1.bf16.msra.mxu0 0
      %1379 = vmatprep.subr.bf16.mxu0 0
      %1380 = vmatpush1.bf16.msra.mxu0 0
      %1381 = vmatprep.subr.bf16.mxu0 0
      %1382 = vmatpush1.bf16.msra.mxu0 0
      %1383 = vmatprep.subr.bf16.mxu0 0
      %1384 = vmatpush1.bf16.msra.mxu0 0
      %1385 = vmatprep.subr.bf16.mxu0 0
      %1386 = vmatpush1.bf16.msra.mxu0 0
      %1387 = vmatprep.subr.bf16.mxu0 0
      %1388 = vmatpush1.bf16.msra.mxu0 0
      %1389 = vmatprep.subr.bf16.mxu0 0
      %1390 = vmatpush1.bf16.msra.mxu0 0
      %1391 = vmatprep.subr.bf16.mxu0 0
      %1392 = vmatpush1.bf16.msra.mxu0 0
      %1393 = vmatprep.subr.bf16.mxu0 0
      %1394 = vmatpush1.bf16.msra.mxu0 0
      %1395 = vmatprep.subr.bf16.mxu0 0
      %1396 = vmatpush1.bf16.msra.mxu0 0
      %1397 = vmatprep.subr.bf16.mxu0 0
      %1398 = vmatpush1.bf16.msra.mxu0 0
      %1399 = vmatprep.subr.bf16.mxu0 0
      %1400 = vmatpush1.bf16.msra.mxu0 0
      %1401 = vmatprep.subr.bf16.mxu0 0
      %1402 = vmatpush1.bf16.msra.mxu0 0
      %1403 = vmatprep.subr.bf16.mxu0 0
      %1404 = vmatpush1.bf16.msra.mxu0 0
      %1405 = vmatprep.mubr.bf16.mxu0 0
      %1406 = vmatmul.mubr.bf16.gmra.mrb[0].mxu0 %v1359
      %v1407 = vpop.f32.mrb[0].mxu0
      %v1408 = vadd.f32 0.0, %v1407
      %v1409 = vpop.f32.mrb[0].mxu0
      %v1410 = vpop.f32.mrb[0].mxu0
      %v1411 = vadd.f32 0.0, %v1410
      %v1412 = vpop.f32.mrb[0].mxu0
      %1413 = vmatprep.mubr.bf16.mxu0 0
      %1414 = vmatmul.mubr.bf16.gmra.mrb[0].mxu0 %v1362
      %v1415 = vpop.f32.mrb[0].mxu0
      %v1416 = vadd.f32 0.0, %v1415
      %v1417 = vpop.f32.mrb[0].mxu0
      %v1418 = vpop.f32.mrb[0].mxu0
      %v1419 = vadd.f32 0.0, %v1418
      %v1420 = vpop.f32.mrb[0].mxu0
      %1421 = vmatprep.mubr.bf16.mxu0 0
      %1422 = vmatmul.mubr.bf16.gmra.mrb[0].mxu0 %v1365
      %v1423 = vpop.f32.mrb[0].mxu0
      %v1424 = vadd.f32 0.0, %v1423
      %v1425 = vpop.f32.mrb[0].mxu0
      %v1426 = vpop.f32.mrb[0].mxu0
      %v1427 = vadd.f32 0.0, %v1426
      %v1428 = vpop.f32.mrb[0].mxu0
      %1429 = vmatprep.mubr.bf16.mxu0 0
      %1430 = vmatmul.mubr.bf16.gmra.mrb[0].mxu0 %v1368
      %v1431 = vpop.f32.mrb[0].mxu0
      %v1432 = vadd.f32 0.0, %v1431
      %v1433 = vpop.f32.mrb[0].mxu0
      %v1434 = vpop.f32.mrb[0].mxu0
      %v1435 = vadd.f32 0.0, %v1434
      %v1436 = vpop.f32.mrb[0].mxu0
      %1437 = vdwg.mxu0
      %v1438 = vadd.f32 %v1312, %v1408
      %v1439 = vadd.f32 %v1313, %v1411
      %v1440 = vadd.f32 %v1314, %v1416
      %v1441 = vadd.f32 %v1315, %v1419
      %v1442 = vadd.f32 %v1316, %v1424
      %v1443 = vadd.f32 %v1317, %v1427
      %v1444 = vadd.f32 %v1318, %v1432
      %v1445 = vadd.f32 %v1319, %v1435
      %v1447 = vlaneseq
      %v1448 = vshrl.u32 %v1447, 7
      %v1449 = vsub.s32 0, %v1448
      %v1450 = vrot.slane %v326, %v1449
      %v1452 = vadd.f32 %v1438, %v1450
      %v1453 = vadd.f32 %v1439, %v1450
      %v1454 = vadd.f32 %v1440, %v1450
      %v1455 = vadd.f32 %v1441, %v1450
      %v1456 = vadd.f32 %v1442, %v1450
      %v1457 = vadd.f32 %v1443, %v1450
      %v1458 = vadd.f32 %v1444, %v1450
      %v1459 = vadd.f32 %v1445, %v1450
      %v1460 = vmax.f32 %v1452, 0.0
      %v1461 = vmax.f32 %v1453, 0.0
      %v1462 = vmax.f32 %v1454, 0.0
      %v1463 = vmax.f32 %v1455, 0.0
      %v1464 = vmax.f32 %v1456, 0.0
      %v1465 = vmax.f32 %v1457, 0.0
      %v1466 = vmax.f32 %v1458, 0.0
      %v1467 = vmax.f32 %v1459, 0.0
      %1468 = vst.msk [vmem:[%s316 + $0x1] sm:$0xff] %vm280, %v1460
      %1469 = vst.msk [vmem:[%s316 + $0x11] sm:$0xff] %vm280, %v1461
      %1470 = vst.msk [vmem:[%s316 + $0x21] sm:$0xff] %vm280, %v1462
      %1471 = vst.msk [vmem:[%s316 + $0x31] sm:$0xff] %vm280, %v1463
      %1472 = vst.msk [vmem:[%s316 + $0x41] sm:$0xff] %vm280, %v1464
      %1473 = vst.msk [vmem:[%s316 + $0x51] sm:$0xff] %vm280, %v1465
      %1474 = vst.msk [vmem:[%s316 + $0x61] sm:$0xff] %vm280, %v1466
      %1475 = vst.msk [vmem:[%s316 + $0x71] sm:$0xff] %vm280, %v1467
      %v1476 = vld [vmem:[%s4] sm:$0x1]
      %v1477 = vld [vmem:[#allocation2] sm:$0xff]
      %v1478 = vld [vmem:[#allocation2 + $0x10] sm:$0xff]
      %v1479 = vld [vmem:[#allocation2 + $0x20] sm:$0xff]
      %v1480 = vld [vmem:[#allocation2 + $0x30] sm:$0xff]
      %v1481 = vld [vmem:[#allocation2 + $0x40] sm:$0xff]
      %v1482 = vld [vmem:[#allocation2 + $0x50] sm:$0xff]
      %v1483 = vld [vmem:[#allocation2 + $0x60] sm:$0xff]
      %v1484 = vld [vmem:[#allocation2 + $0x70] sm:$0xff]
      %v1485 = vpack.c.bf16 %v1477, %v1477
      %v1486 = vpack.c.bf16 %v1478, %v1478
      %v1487 = vpack.c.bf16 %v1479, %v1479
      %v1488 = vpack.c.bf16 %v1480, %v1480
      %v1489 = vpack.c.bf16 %v1481, %v1481
      %v1490 = vpack.c.bf16 %v1482, %v1482
      %v1491 = vpack.c.bf16 %v1483, %v1483
      %v1492 = vpack.c.bf16 %v1484, %v1484
      %v1493 = vld [vmem:[%s3] sm:$0xf]
      %v1494 = vld [vmem:[%s3 + $0x4] sm:$0xf]
      %v1495 = vld [vmem:[#allocation2 + $0x1] sm:$0xff]
      %v1496 = vld [vmem:[#allocation2 + $0x11] sm:$0xff]
      %v1497 = vld [vmem:[#allocation2 + $0x21] sm:$0xff]
      %v1498 = vld [vmem:[#allocation2 + $0x31] sm:$0xff]
      %v1499 = vld [vmem:[#allocation2 + $0x41] sm:$0xff]
      %v1500 = vld [vmem:[#allocation2 + $0x51] sm:$0xff]
      %v1501 = vld [vmem:[#allocation2 + $0x61] sm:$0xff]
      %v1502 = vld [vmem:[#allocation2 + $0x71] sm:$0xff]
      %v1503 = vpack.c.bf16 %v1495, %v1495
      %v1504 = vpack.c.bf16 %v1496, %v1496
      %v1505 = vpack.c.bf16 %v1497, %v1497
      %v1506 = vpack.c.bf16 %v1498, %v1498
      %v1507 = vpack.c.bf16 %v1499, %v1499
      %v1508 = vpack.c.bf16 %v1500, %v1500
      %v1509 = vpack.c.bf16 %v1501, %v1501
      %v1510 = vpack.c.bf16 %v1502, %v1502
      %s1511 = scalar_lea.vmem %s3, 8
      %v1512 = vld [vmem:[%s1511] sm:$0xf]
      %v1513 = vld [vmem:[%s1511 + $0x4] sm:$0xf]
      %v1522 = vunpack.c.l.b16 %v1503
      %v1523 = vunpack.c.l.b16 %v1504
      %v1524 = vunpack.c.l.b16 %v1505
      %v1525 = vunpack.c.l.b16 %v1506
      %v1526 = vunpack.c.l.b16 %v1507
      %v1527 = vunpack.c.l.b16 %v1508
      %v1528 = vunpack.c.l.b16 %v1509
      %v1529 = vunpack.c.l.b16 %v1510
      %v1530 = vpack.c.b16 %v1523, %v1522
      %v1531 = vpack.c.b16 %v1525, %v1524
      %v1532 = vpack.c.b16 %v1527, %v1526
      %v1533 = vpack.c.b16 %v1529, %v1528
      %v1536 = vunpack.c.l.b16 %v1512
      %v1537 = vunpack.c.l.b16 %v1513
      %v1538 = vpack.c.b16 %v1537, %v1536
      %v1541 = vsel %vm280, %v1530, 0
      %v1544 = vsel %vm280, %v1531, 0
      %v1547 = vsel %vm280, %v1532, 0
      %v1550 = vsel %vm280, %v1533, 0
      %1552 = vmatprep.subr.bf16.mxu0 0
      %1553 = vmatpush1.bf16.msra.mxu0 %v1538
      %1554 = vmatprep.subr.bf16.mxu0 0
      %1555 = vmatpush1.bf16.msra.mxu0 0
      %1556 = vmatprep.subr.bf16.mxu0 0
      %1557 = vmatpush1.bf16.msra.mxu0 0
      %1558 = vmatprep.subr.bf16.mxu0 0
      %1559 = vmatpush1.bf16.msra.mxu0 0
      %1560 = vmatprep.subr.bf16.mxu0 0
      %1561 = vmatpush1.bf16.msra.mxu0 0
      %1562 = vmatprep.subr.bf16.mxu0 0
      %1563 = vmatpush1.bf16.msra.mxu0 0
      %1564 = vmatprep.subr.bf16.mxu0 0
      %1565 = vmatpush1.bf16.msra.mxu0 0
      %1566 = vmatprep.subr.bf16.mxu0 0
      %1567 = vmatpush1.bf16.msra.mxu0 0
      %1568 = vmatprep.subr.bf16.mxu0 0
      %1569 = vmatpush1.bf16.msra.mxu0 0
      %1570 = vmatprep.subr.bf16.mxu0 0
      %1571 = vmatpush1.bf16.msra.mxu0 0
      %1572 = vmatprep.subr.bf16.mxu0 0
      %1573 = vmatpush1.bf16.msra.mxu0 0
      %1574 = vmatprep.subr.bf16.mxu0 0
      %1575 = vmatpush1.bf16.msra.mxu0 0
      %1576 = vmatprep.subr.bf16.mxu0 0
      %1577 = vmatpush1.bf16.msra.mxu0 0
      %1578 = vmatprep.subr.bf16.mxu0 0
      %1579 = vmatpush1.bf16.msra.mxu0 0
      %1580 = vmatprep.subr.bf16.mxu0 0
      %1581 = vmatpush1.bf16.msra.mxu0 0
      %1582 = vmatprep.subr.bf16.mxu0 0
      %1583 = vmatpush1.bf16.msra.mxu0 0
      %1584 = vmatprep.mubr.bf16.mxu0 0
      %1585 = vmatmul.mubr.bf16.gmra.mrb[0].mxu0 %v1541
      %v1586 = vpop.f32.mrb[0].mxu0
      %v1587 = vadd.f32 0.0, %v1586
      %v1588 = vpop.f32.mrb[0].mxu0
      %v1589 = vpop.f32.mrb[0].mxu0
      %v1590 = vadd.f32 0.0, %v1589
      %v1591 = vpop.f32.mrb[0].mxu0
      %1592 = vmatprep.mubr.bf16.mxu0 0
      %1593 = vmatmul.mubr.bf16.gmra.mrb[0].mxu0 %v1544
      %v1594 = vpop.f32.mrb[0].mxu0
      %v1595 = vadd.f32 0.0, %v1594
      %v1596 = vpop.f32.mrb[0].mxu0
      %v1597 = vpop.f32.mrb[0].mxu0
      %v1598 = vadd.f32 0.0, %v1597
      %v1599 = vpop.f32.mrb[0].mxu0
      %1600 = vmatprep.mubr.bf16.mxu0 0
      %1601 = vmatmul.mubr.bf16.gmra.mrb[0].mxu0 %v1547
      %v1602 = vpop.f32.mrb[0].mxu0
      %v1603 = vadd.f32 0.0, %v1602
      %v1604 = vpop.f32.mrb[0].mxu0
      %v1605 = vpop.f32.mrb[0].mxu0
      %v1606 = vadd.f32 0.0, %v1605
      %v1607 = vpop.f32.mrb[0].mxu0
      %1608 = vmatprep.mubr.bf16.mxu0 0
      %1609 = vmatmul.mubr.bf16.gmra.mrb[0].mxu0 %v1550
      %v1610 = vpop.f32.mrb[0].mxu0
      %v1611 = vadd.f32 0.0, %v1610
      %v1612 = vpop.f32.mrb[0].mxu0
      %v1613 = vpop.f32.mrb[0].mxu0
      %v1614 = vadd.f32 0.0, %v1613
      %v1615 = vpop.f32.mrb[0].mxu0
      %1616 = vdwg.mxu0
      %v1625 = vunpack.c.l.b16 %v1485
      %v1626 = vunpack.c.l.b16 %v1486
      %v1627 = vunpack.c.l.b16 %v1487
      %v1628 = vunpack.c.l.b16 %v1488
      %v1629 = vunpack.c.l.b16 %v1489
      %v1630 = vunpack.c.l.b16 %v1490
      %v1631 = vunpack.c.l.b16 %v1491
      %v1632 = vunpack.c.l.b16 %v1492
      %v1633 = vpack.c.b16 %v1626, %v1625
      %v1634 = vpack.c.b16 %v1628, %v1627
      %v1635 = vpack.c.b16 %v1630, %v1629
      %v1636 = vpack.c.b16 %v1632, %v1631
      %v1639 = vunpack.c.l.b16 %v1493
      %v1640 = vunpack.c.l.b16 %v1494
      %v1641 = vpack.c.b16 %v1640, %v1639
      %v1644 = vsel %vm280, %v1633, 0
      %v1647 = vsel %vm280, %v1634, 0
      %v1650 = vsel %vm280, %v1635, 0
      %v1653 = vsel %vm280, %v1636, 0
      %1655 = vmatprep.subr.bf16.mxu0 0
      %1656 = vmatpush1.bf16.msra.mxu0 %v1641
      %1657 = vmatprep.subr.bf16.mxu0 0
      %1658 = vmatpush1.bf16.msra.mxu0 0
      %1659 = vmatprep.subr.bf16.mxu0 0
      %1660 = vmatpush1.bf16.msra.mxu0 0
      %1661 = vmatprep.subr.bf16.mxu0 0
      %1662 = vmatpush1.bf16.msra.mxu0 0
      %1663 = vmatprep.subr.bf16.mxu0 0
      %1664 = vmatpush1.bf16.msra.mxu0 0
      %1665 = vmatprep.subr.bf16.mxu0 0
      %1666 = vmatpush1.bf16.msra.mxu0 0
      %1667 = vmatprep.subr.bf16.mxu0 0
      %1668 = vmatpush1.bf16.msra.mxu0 0
      %1669 = vmatprep.subr.bf16.mxu0 0
      %1670 = vmatpush1.bf16.msra.mxu0 0
      %1671 = vmatprep.subr.bf16.mxu0 0
      %1672 = vmatpush1.bf16.msra.mxu0 0
      %1673 = vmatprep.subr.bf16.mxu0 0
      %1674 = vmatpush1.bf16.msra.mxu0 0
      %1675 = vmatprep.subr.bf16.mxu0 0
      %1676 = vmatpush1.bf16.msra.mxu0 0
      %1677 = vmatprep.subr.bf16.mxu0 0
      %1678 = vmatpush1.bf16.msra.mxu0 0
      %1679 = vmatprep.subr.bf16.mxu0 0
      %1680 = vmatpush1.bf16.msra.mxu0 0
      %1681 = vmatprep.subr.bf16.mxu0 0
      %1682 = vmatpush1.bf16.msra.mxu0 0
      %1683 = vmatprep.subr.bf16.mxu0 0
      %1684 = vmatpush1.bf16.msra.mxu0 0
      %1685 = vmatprep.subr.bf16.mxu0 0
      %1686 = vmatpush1.bf16.msra.mxu0 0
      %1687 = vmatprep.mubr.bf16.mxu0 0
      %1688 = vmatmul.mubr.bf16.gmra.mrb[0].mxu0 %v1644
      %v1689 = vpop.f32.mrb[0].mxu0
      %v1690 = vadd.f32 %v1587, %v1689
      %v1691 = vpop.f32.mrb[0].mxu0
      %v1692 = vpop.f32.mrb[0].mxu0
      %v1693 = vadd.f32 %v1590, %v1692
      %v1694 = vpop.f32.mrb[0].mxu0
      %1695 = vmatprep.mubr.bf16.mxu0 0
      %1696 = vmatmul.mubr.bf16.gmra.mrb[0].mxu0 %v1647
      %v1697 = vpop.f32.mrb[0].mxu0
      %v1698 = vadd.f32 %v1595, %v1697
      %v1699 = vpop.f32.mrb[0].mxu0
      %v1700 = vpop.f32.mrb[0].mxu0
      %v1701 = vadd.f32 %v1598, %v1700
      %v1702 = vpop.f32.mrb[0].mxu0
      %1703 = vmatprep.mubr.bf16.mxu0 0
      %1704 = vmatmul.mubr.bf16.gmra.mrb[0].mxu0 %v1650
      %v1705 = vpop.f32.mrb[0].mxu0
      %v1706 = vadd.f32 %v1603, %v1705
      %v1707 = vpop.f32.mrb[0].mxu0
      %v1708 = vpop.f32.mrb[0].mxu0
      %v1709 = vadd.f32 %v1606, %v1708
      %v1710 = vpop.f32.mrb[0].mxu0
      %1711 = vmatprep.mubr.bf16.mxu0 0
      %1712 = vmatmul.mubr.bf16.gmra.mrb[0].mxu0 %v1653
      %v1713 = vpop.f32.mrb[0].mxu0
      %v1714 = vadd.f32 %v1611, %v1713
      %v1715 = vpop.f32.mrb[0].mxu0
      %v1716 = vpop.f32.mrb[0].mxu0
      %v1717 = vadd.f32 %v1614, %v1716
      %v1718 = vpop.f32.mrb[0].mxu0
      %1719 = vdwg.mxu0
      %v1720 = vld [vmem:[#allocation2 + $0x2] sm:$0xff]
      %v1721 = vld [vmem:[#allocation2 + $0x12] sm:$0xff]
      %v1722 = vld [vmem:[#allocation2 + $0x22] sm:$0xff]
      %v1723 = vld [vmem:[#allocation2 + $0x32] sm:$0xff]
      %v1724 = vld [vmem:[#allocation2 + $0x42] sm:$0xff]
      %v1725 = vld [vmem:[#allocation2 + $0x52] sm:$0xff]
      %v1726 = vld [vmem:[#allocation2 + $0x62] sm:$0xff]
      %v1727 = vld [vmem:[#allocation2 + $0x72] sm:$0xff]
      %v1728 = vpack.c.bf16 %v1720, %v1720
      %v1729 = vpack.c.bf16 %v1721, %v1721
      %v1730 = vpack.c.bf16 %v1722, %v1722
      %v1731 = vpack.c.bf16 %v1723, %v1723
      %v1732 = vpack.c.bf16 %v1724, %v1724
      %v1733 = vpack.c.bf16 %v1725, %v1725
      %v1734 = vpack.c.bf16 %v1726, %v1726
      %v1735 = vpack.c.bf16 %v1727, %v1727
      %s1736 = scalar_lea.vmem %s3, 16
      %v1737 = vld [vmem:[%s1736] sm:$0xf]
      %v1738 = vld [vmem:[%s1736 + $0x4] sm:$0xf]
      %v1747 = vunpack.c.l.b16 %v1728
      %v1748 = vunpack.c.l.b16 %v1729
      %v1749 = vunpack.c.l.b16 %v1730
      %v1750 = vunpack.c.l.b16 %v1731
      %v1751 = vunpack.c.l.b16 %v1732
      %v1752 = vunpack.c.l.b16 %v1733
      %v1753 = vunpack.c.l.b16 %v1734
      %v1754 = vunpack.c.l.b16 %v1735
      %v1755 = vpack.c.b16 %v1748, %v1747
      %v1756 = vpack.c.b16 %v1750, %v1749
      %v1757 = vpack.c.b16 %v1752, %v1751
      %v1758 = vpack.c.b16 %v1754, %v1753
      %v1761 = vunpack.c.l.b16 %v1737
      %v1762 = vunpack.c.l.b16 %v1738
      %v1763 = vpack.c.b16 %v1762, %v1761
      %v1766 = vsel %vm280, %v1755, 0
      %v1769 = vsel %vm280, %v1756, 0
      %v1772 = vsel %vm280, %v1757, 0
      %v1775 = vsel %vm280, %v1758, 0
      %1777 = vmatprep.subr.bf16.mxu0 0
      %1778 = vmatpush1.bf16.msra.mxu0 %v1763
      %1779 = vmatprep.subr.bf16.mxu0 0
      %1780 = vmatpush1.bf16.msra.mxu0 0
      %1781 = vmatprep.subr.bf16.mxu0 0
      %1782 = vmatpush1.bf16.msra.mxu0 0
      %1783 = vmatprep.subr.bf16.mxu0 0
      %1784 = vmatpush1.bf16.msra.mxu0 0
      %1785 = vmatprep.subr.bf16.mxu0 0
      %1786 = vmatpush1.bf16.msra.mxu0 0
      %1787 = vmatprep.subr.bf16.mxu0 0
      %1788 = vmatpush1.bf16.msra.mxu0 0
      %1789 = vmatprep.subr.bf16.mxu0 0
      %1790 = vmatpush1.bf16.msra.mxu0 0
      %1791 = vmatprep.subr.bf16.mxu0 0
      %1792 = vmatpush1.bf16.msra.mxu0 0
      %1793 = vmatprep.subr.bf16.mxu0 0
      %1794 = vmatpush1.bf16.msra.mxu0 0
      %1795 = vmatprep.subr.bf16.mxu0 0
      %1796 = vmatpush1.bf16.msra.mxu0 0
      %1797 = vmatprep.subr.bf16.mxu0 0
      %1798 = vmatpush1.bf16.msra.mxu0 0
      %1799 = vmatprep.subr.bf16.mxu0 0
      %1800 = vmatpush1.bf16.msra.mxu0 0
      %1801 = vmatprep.subr.bf16.mxu0 0
      %1802 = vmatpush1.bf16.msra.mxu0 0
      %1803 = vmatprep.subr.bf16.mxu0 0
      %1804 = vmatpush1.bf16.msra.mxu0 0
      %1805 = vmatprep.subr.bf16.mxu0 0
      %1806 = vmatpush1.bf16.msra.mxu0 0
      %1807 = vmatprep.subr.bf16.mxu0 0
      %1808 = vmatpush1.bf16.msra.mxu0 0
      %1809 = vmatprep.mubr.bf16.mxu0 0
      %1810 = vmatmul.mubr.bf16.gmra.mrb[0].mxu0 %v1766
      %v1811 = vpop.f32.mrb[0].mxu0
      %v1812 = vadd.f32 0.0, %v1811
      %v1813 = vpop.f32.mrb[0].mxu0
      %v1814 = vpop.f32.mrb[0].mxu0
      %v1815 = vadd.f32 0.0, %v1814
      %v1816 = vpop.f32.mrb[0].mxu0
      %1817 = vmatprep.mubr.bf16.mxu0 0
      %1818 = vmatmul.mubr.bf16.gmra.mrb[0].mxu0 %v1769
      %v1819 = vpop.f32.mrb[0].mxu0
      %v1820 = vadd.f32 0.0, %v1819
      %v1821 = vpop.f32.mrb[0].mxu0
      %v1822 = vpop.f32.mrb[0].mxu0
      %v1823 = vadd.f32 0.0, %v1822
      %v1824 = vpop.f32.mrb[0].mxu0
      %1825 = vmatprep.mubr.bf16.mxu0 0
      %1826 = vmatmul.mubr.bf16.gmra.mrb[0].mxu0 %v1772
      %v1827 = vpop.f32.mrb[0].mxu0
      %v1828 = vadd.f32 0.0, %v1827
      %v1829 = vpop.f32.mrb[0].mxu0
      %v1830 = vpop.f32.mrb[0].mxu0
      %v1831 = vadd.f32 0.0, %v1830
      %v1832 = vpop.f32.mrb[0].mxu0
      %1833 = vmatprep.mubr.bf16.mxu0 0
      %1834 = vmatmul.mubr.bf16.gmra.mrb[0].mxu0 %v1775
      %v1835 = vpop.f32.mrb[0].mxu0
      %v1836 = vadd.f32 0.0, %v1835
      %v1837 = vpop.f32.mrb[0].mxu0
      %v1838 = vpop.f32.mrb[0].mxu0
      %v1839 = vadd.f32 0.0, %v1838
      %v1840 = vpop.f32.mrb[0].mxu0
      %1841 = vdwg.mxu0
      %v1842 = vadd.f32 %v1690, %v1812
      %v1843 = vadd.f32 %v1693, %v1815
      %v1844 = vadd.f32 %v1698, %v1820
      %v1845 = vadd.f32 %v1701, %v1823
      %v1846 = vadd.f32 %v1706, %v1828
      %v1847 = vadd.f32 %v1709, %v1831
      %v1848 = vadd.f32 %v1714, %v1836
      %v1849 = vadd.f32 %v1717, %v1839
      %v1850 = vld [vmem:[%s316] sm:$0xff]
      %v1851 = vld [vmem:[%s316 + $0x10] sm:$0xff]
      %v1852 = vld [vmem:[%s316 + $0x20] sm:$0xff]
      %v1853 = vld [vmem:[%s316 + $0x30] sm:$0xff]
      %v1854 = vld [vmem:[%s316 + $0x40] sm:$0xff]
      %v1855 = vld [vmem:[%s316 + $0x50] sm:$0xff]
      %v1856 = vld [vmem:[%s316 + $0x60] sm:$0xff]
      %v1857 = vld [vmem:[%s316 + $0x70] sm:$0xff]
      %v1858 = vpack.c.bf16 %v1850, %v1850
      %v1859 = vpack.c.bf16 %v1851, %v1851
      %v1860 = vpack.c.bf16 %v1852, %v1852
      %v1861 = vpack.c.bf16 %v1853, %v1853
      %v1862 = vpack.c.bf16 %v1854, %v1854
      %v1863 = vpack.c.bf16 %v1855, %v1855
      %v1864 = vpack.c.bf16 %v1856, %v1856
      %v1865 = vpack.c.bf16 %v1857, %v1857
      %s1866 = scalar_lea.vmem %s3, 24
      %v1867 = vld [vmem:[%s1866] sm:$0xf]
      %v1868 = vld [vmem:[%s1866 + $0x4] sm:$0xf]
      %v1877 = vunpack.c.l.b16 %v1858
      %v1878 = vunpack.c.l.b16 %v1859
      %v1879 = vunpack.c.l.b16 %v1860
      %v1880 = vunpack.c.l.b16 %v1861
      %v1881 = vunpack.c.l.b16 %v1862
      %v1882 = vunpack.c.l.b16 %v1863
      %v1883 = vunpack.c.l.b16 %v1864
      %v1884 = vunpack.c.l.b16 %v1865
      %v1885 = vpack.c.b16 %v1878, %v1877
      %v1886 = vpack.c.b16 %v1880, %v1879
      %v1887 = vpack.c.b16 %v1882, %v1881
      %v1888 = vpack.c.b16 %v1884, %v1883
      %v1891 = vunpack.c.l.b16 %v1867
      %v1892 = vunpack.c.l.b16 %v1868
      %v1893 = vpack.c.b16 %v1892, %v1891
      %v1896 = vsel %vm280, %v1885, 0
      %v1899 = vsel %vm280, %v1886, 0
      %v1902 = vsel %vm280, %v1887, 0
      %v1905 = vsel %vm280, %v1888, 0
      %1907 = vmatprep.subr.bf16.mxu0 0
      %1908 = vmatpush1.bf16.msra.mxu0 %v1893
      %1909 = vmatprep.subr.bf16.mxu0 0
      %1910 = vmatpush1.bf16.msra.mxu0 0
      %1911 = vmatprep.subr.bf16.mxu0 0
      %1912 = vmatpush1.bf16.msra.mxu0 0
      %1913 = vmatprep.subr.bf16.mxu0 0
      %1914 = vmatpush1.bf16.msra.mxu0 0
      %1915 = vmatprep.subr.bf16.mxu0 0
      %1916 = vmatpush1.bf16.msra.mxu0 0
      %1917 = vmatprep.subr.bf16.mxu0 0
      %1918 = vmatpush1.bf16.msra.mxu0 0
      %1919 = vmatprep.subr.bf16.mxu0 0
      %1920 = vmatpush1.bf16.msra.mxu0 0
      %1921 = vmatprep.subr.bf16.mxu0 0
      %1922 = vmatpush1.bf16.msra.mxu0 0
      %1923 = vmatprep.subr.bf16.mxu0 0
      %1924 = vmatpush1.bf16.msra.mxu0 0
      %1925 = vmatprep.subr.bf16.mxu0 0
      %1926 = vmatpush1.bf16.msra.mxu0 0
      %1927 = vmatprep.subr.bf16.mxu0 0
      %1928 = vmatpush1.bf16.msra.mxu0 0
      %1929 = vmatprep.subr.bf16.mxu0 0
      %1930 = vmatpush1.bf16.msra.mxu0 0
      %1931 = vmatprep.subr.bf16.mxu0 0
      %1932 = vmatpush1.bf16.msra.mxu0 0
      %1933 = vmatprep.subr.bf16.mxu0 0
      %1934 = vmatpush1.bf16.msra.mxu0 0
      %1935 = vmatprep.subr.bf16.mxu0 0
      %1936 = vmatpush1.bf16.msra.mxu0 0
      %1937 = vmatprep.subr.bf16.mxu0 0
      %1938 = vmatpush1.bf16.msra.mxu0 0
      %1939 = vmatprep.mubr.bf16.mxu0 0
      %1940 = vmatmul.mubr.bf16.gmra.mrb[0].mxu0 %v1896
      %v1941 = vpop.f32.mrb[0].mxu0
      %v1942 = vadd.f32 0.0, %v1941
      %v1943 = vpop.f32.mrb[0].mxu0
      %v1944 = vpop.f32.mrb[0].mxu0
      %v1945 = vadd.f32 0.0, %v1944
      %v1946 = vpop.f32.mrb[0].mxu0
      %1947 = vmatprep.mubr.bf16.mxu0 0
      %1948 = vmatmul.mubr.bf16.gmra.mrb[0].mxu0 %v1899
      %v1949 = vpop.f32.mrb[0].mxu0
      %v1950 = vadd.f32 0.0, %v1949
      %v1951 = vpop.f32.mrb[0].mxu0
      %v1952 = vpop.f32.mrb[0].mxu0
      %v1953 = vadd.f32 0.0, %v1952
      %v1954 = vpop.f32.mrb[0].mxu0
      %1955 = vmatprep.mubr.bf16.mxu0 0
      %1956 = vmatmul.mubr.bf16.gmra.mrb[0].mxu0 %v1902
      %v1957 = vpop.f32.mrb[0].mxu0
      %v1958 = vadd.f32 0.0, %v1957
      %v1959 = vpop.f32.mrb[0].mxu0
      %v1960 = vpop.f32.mrb[0].mxu0
      %v1961 = vadd.f32 0.0, %v1960
      %v1962 = vpop.f32.mrb[0].mxu0
      %1963 = vmatprep.mubr.bf16.mxu0 0
      %1964 = vmatmul.mubr.bf16.gmra.mrb[0].mxu0 %v1905
      %v1965 = vpop.f32.mrb[0].mxu0
      %v1966 = vadd.f32 0.0, %v1965
      %v1967 = vpop.f32.mrb[0].mxu0
      %v1968 = vpop.f32.mrb[0].mxu0
      %v1969 = vadd.f32 0.0, %v1968
      %v1970 = vpop.f32.mrb[0].mxu0
      %1971 = vdwg.mxu0
      %v1972 = vadd.f32 %v1842, %v1942
      %v1973 = vadd.f32 %v1843, %v1945
      %v1974 = vadd.f32 %v1844, %v1950
      %v1975 = vadd.f32 %v1845, %v1953
      %v1976 = vadd.f32 %v1846, %v1958
      %v1977 = vadd.f32 %v1847, %v1961
      %v1978 = vadd.f32 %v1848, %v1966
      %v1979 = vadd.f32 %v1849, %v1969
      %v1980 = vld [vmem:[%s316 + $0x1] sm:$0xff]
      %v1981 = vld [vmem:[%s316 + $0x11] sm:$0xff]
      %v1982 = vld [vmem:[%s316 + $0x21] sm:$0xff]
      %v1983 = vld [vmem:[%s316 + $0x31] sm:$0xff]
      %v1984 = vld [vmem:[%s316 + $0x41] sm:$0xff]
      %v1985 = vld [vmem:[%s316 + $0x51] sm:$0xff]
      %v1986 = vld [vmem:[%s316 + $0x61] sm:$0xff]
      %v1987 = vld [vmem:[%s316 + $0x71] sm:$0xff]
      %v1988 = vpack.c.bf16 %v1980, %v1980
      %v1989 = vpack.c.bf16 %v1981, %v1981
      %v1990 = vpack.c.bf16 %v1982, %v1982
      %v1991 = vpack.c.bf16 %v1983, %v1983
      %v1992 = vpack.c.bf16 %v1984, %v1984
      %v1993 = vpack.c.bf16 %v1985, %v1985
      %v1994 = vpack.c.bf16 %v1986, %v1986
      %v1995 = vpack.c.bf16 %v1987, %v1987
      %s1996 = scalar_lea.vmem %s3, 32
      %v1997 = vld [vmem:[%s1996] sm:$0xf]
      %v1998 = vld [vmem:[%s1996 + $0x4] sm:$0xf]
      %v2007 = vunpack.c.l.b16 %v1988
      %v2008 = vunpack.c.l.b16 %v1989
      %v2009 = vunpack.c.l.b16 %v1990
      %v2010 = vunpack.c.l.b16 %v1991
      %v2011 = vunpack.c.l.b16 %v1992
      %v2012 = vunpack.c.l.b16 %v1993
      %v2013 = vunpack.c.l.b16 %v1994
      %v2014 = vunpack.c.l.b16 %v1995
      %v2015 = vpack.c.b16 %v2008, %v2007
      %v2016 = vpack.c.b16 %v2010, %v2009
      %v2017 = vpack.c.b16 %v2012, %v2011
      %v2018 = vpack.c.b16 %v2014, %v2013
      %v2021 = vunpack.c.l.b16 %v1997
      %v2022 = vunpack.c.l.b16 %v1998
      %v2023 = vpack.c.b16 %v2022, %v2021
      %v2026 = vsel %vm280, %v2015, 0
      %v2029 = vsel %vm280, %v2016, 0
      %v2032 = vsel %vm280, %v2017, 0
      %v2035 = vsel %vm280, %v2018, 0
      %2037 = vmatprep.subr.bf16.mxu0 0
      %2038 = vmatpush1.bf16.msra.mxu0 %v2023
      %2039 = vmatprep.subr.bf16.mxu0 0
      %2040 = vmatpush1.bf16.msra.mxu0 0
      %2041 = vmatprep.subr.bf16.mxu0 0
      %2042 = vmatpush1.bf16.msra.mxu0 0
      %2043 = vmatprep.subr.bf16.mxu0 0
      %2044 = vmatpush1.bf16.msra.mxu0 0
      %2045 = vmatprep.subr.bf16.mxu0 0
      %2046 = vmatpush1.bf16.msra.mxu0 0
      %2047 = vmatprep.subr.bf16.mxu0 0
      %2048 = vmatpush1.bf16.msra.mxu0 0
      %2049 = vmatprep.subr.bf16.mxu0 0
      %2050 = vmatpush1.bf16.msra.mxu0 0
      %2051 = vmatprep.subr.bf16.mxu0 0
      %2052 = vmatpush1.bf16.msra.mxu0 0
      %2053 = vmatprep.subr.bf16.mxu0 0
      %2054 = vmatpush1.bf16.msra.mxu0 0
      %2055 = vmatprep.subr.bf16.mxu0 0
      %2056 = vmatpush1.bf16.msra.mxu0 0
      %2057 = vmatprep.subr.bf16.mxu0 0
      %2058 = vmatpush1.bf16.msra.mxu0 0
      %2059 = vmatprep.subr.bf16.mxu0 0
      %2060 = vmatpush1.bf16.msra.mxu0 0
      %2061 = vmatprep.subr.bf16.mxu0 0
      %2062 = vmatpush1.bf16.msra.mxu0 0
      %2063 = vmatprep.subr.bf16.mxu0 0
      %2064 = vmatpush1.bf16.msra.mxu0 0
      %2065 = vmatprep.subr.bf16.mxu0 0
      %2066 = vmatpush1.bf16.msra.mxu0 0
      %2067 = vmatprep.subr.bf16.mxu0 0
      %2068 = vmatpush1.bf16.msra.mxu0 0
      %2069 = vmatprep.mubr.bf16.mxu0 0
      %2070 = vmatmul.mubr.bf16.gmra.mrb[0].mxu0 %v2026
      %v2071 = vpop.f32.mrb[0].mxu0
      %v2072 = vadd.f32 0.0, %v2071
      %v2073 = vpop.f32.mrb[0].mxu0
      %v2074 = vpop.f32.mrb[0].mxu0
      %v2075 = vadd.f32 0.0, %v2074
      %v2076 = vpop.f32.mrb[0].mxu0
      %2077 = vmatprep.mubr.bf16.mxu0 0
      %2078 = vmatmul.mubr.bf16.gmra.mrb[0].mxu0 %v2029
      %v2079 = vpop.f32.mrb[0].mxu0
      %v2080 = vadd.f32 0.0, %v2079
      %v2081 = vpop.f32.mrb[0].mxu0
      %v2082 = vpop.f32.mrb[0].mxu0
      %v2083 = vadd.f32 0.0, %v2082
      %v2084 = vpop.f32.mrb[0].mxu0
      %2085 = vmatprep.mubr.bf16.mxu0 0
      %2086 = vmatmul.mubr.bf16.gmra.mrb[0].mxu0 %v2032
      %v2087 = vpop.f32.mrb[0].mxu0
      %v2088 = vadd.f32 0.0, %v2087
      %v2089 = vpop.f32.mrb[0].mxu0
      %v2090 = vpop.f32.mrb[0].mxu0
      %v2091 = vadd.f32 0.0, %v2090
      %v2092 = vpop.f32.mrb[0].mxu0
      %2093 = vmatprep.mubr.bf16.mxu0 0
      %2094 = vmatmul.mubr.bf16.gmra.mrb[0].mxu0 %v2035
      %v2095 = vpop.f32.mrb[0].mxu0
      %v2096 = vadd.f32 0.0, %v2095
      %v2097 = vpop.f32.mrb[0].mxu0
      %v2098 = vpop.f32.mrb[0].mxu0
      %v2099 = vadd.f32 0.0, %v2098
      %v2100 = vpop.f32.mrb[0].mxu0
      %2101 = vdwg.mxu0
      %v2102 = vadd.f32 %v1972, %v2072
      %v2103 = vadd.f32 %v1973, %v2075
      %v2104 = vadd.f32 %v1974, %v2080
      %v2105 = vadd.f32 %v1975, %v2083
      %v2106 = vadd.f32 %v1976, %v2088
      %v2107 = vadd.f32 %v1977, %v2091
      %v2108 = vadd.f32 %v1978, %v2096
      %v2109 = vadd.f32 %v1979, %v2099
      %v2110 = vld [vmem:[%s316 + $0x2] sm:$0xff]
      %v2111 = vld [vmem:[%s316 + $0x12] sm:$0xff]
      %v2112 = vld [vmem:[%s316 + $0x22] sm:$0xff]
      %v2113 = vld [vmem:[%s316 + $0x32] sm:$0xff]
      %v2114 = vld [vmem:[%s316 + $0x42] sm:$0xff]
      %v2115 = vld [vmem:[%s316 + $0x52] sm:$0xff]
      %v2116 = vld [vmem:[%s316 + $0x62] sm:$0xff]
      %v2117 = vld [vmem:[%s316 + $0x72] sm:$0xff]
      %v2118 = vpack.c.bf16 %v2110, %v2110
      %v2119 = vpack.c.bf16 %v2111, %v2111
      %v2120 = vpack.c.bf16 %v2112, %v2112
      %v2121 = vpack.c.bf16 %v2113, %v2113
      %v2122 = vpack.c.bf16 %v2114, %v2114
      %v2123 = vpack.c.bf16 %v2115, %v2115
      %v2124 = vpack.c.bf16 %v2116, %v2116
      %v2125 = vpack.c.bf16 %v2117, %v2117
      %s2126 = scalar_lea.vmem %s3, 40
      %v2127 = vld [vmem:[%s2126] sm:$0xf]
      %v2128 = vld [vmem:[%s2126 + $0x4] sm:$0xf]
      %v2137 = vunpack.c.l.b16 %v2118
      %v2138 = vunpack.c.l.b16 %v2119
      %v2139 = vunpack.c.l.b16 %v2120
      %v2140 = vunpack.c.l.b16 %v2121
      %v2141 = vunpack.c.l.b16 %v2122
      %v2142 = vunpack.c.l.b16 %v2123
      %v2143 = vunpack.c.l.b16 %v2124
      %v2144 = vunpack.c.l.b16 %v2125
      %v2145 = vpack.c.b16 %v2138, %v2137
      %v2146 = vpack.c.b16 %v2140, %v2139
      %v2147 = vpack.c.b16 %v2142, %v2141
      %v2148 = vpack.c.b16 %v2144, %v2143
      %v2151 = vunpack.c.l.b16 %v2127
      %v2152 = vunpack.c.l.b16 %v2128
      %v2153 = vpack.c.b16 %v2152, %v2151
      %v2156 = vsel %vm280, %v2145, 0
      %v2159 = vsel %vm280, %v2146, 0
      %v2162 = vsel %vm280, %v2147, 0
      %v2165 = vsel %vm280, %v2148, 0
      %2167 = vmatprep.subr.bf16.mxu0 0
      %2168 = vmatpush1.bf16.msra.mxu0 %v2153
      %2169 = vmatprep.subr.bf16.mxu0 0
      %2170 = vmatpush1.bf16.msra.mxu0 0
      %2171 = vmatprep.subr.bf16.mxu0 0
      %2172 = vmatpush1.bf16.msra.mxu0 0
      %2173 = vmatprep.subr.bf16.mxu0 0
      %2174 = vmatpush1.bf16.msra.mxu0 0
      %2175 = vmatprep.subr.bf16.mxu0 0
      %2176 = vmatpush1.bf16.msra.mxu0 0
      %2177 = vmatprep.subr.bf16.mxu0 0
      %2178 = vmatpush1.bf16.msra.mxu0 0
      %2179 = vmatprep.subr.bf16.mxu0 0
      %2180 = vmatpush1.bf16.msra.mxu0 0
      %2181 = vmatprep.subr.bf16.mxu0 0
      %2182 = vmatpush1.bf16.msra.mxu0 0
      %2183 = vmatprep.subr.bf16.mxu0 0
      %2184 = vmatpush1.bf16.msra.mxu0 0
      %2185 = vmatprep.subr.bf16.mxu0 0
      %2186 = vmatpush1.bf16.msra.mxu0 0
      %2187 = vmatprep.subr.bf16.mxu0 0
      %2188 = vmatpush1.bf16.msra.mxu0 0
      %2189 = vmatprep.subr.bf16.mxu0 0
      %2190 = vmatpush1.bf16.msra.mxu0 0
      %2191 = vmatprep.subr.bf16.mxu0 0
      %2192 = vmatpush1.bf16.msra.mxu0 0
      %2193 = vmatprep.subr.bf16.mxu0 0
      %2194 = vmatpush1.bf16.msra.mxu0 0
      %2195 = vmatprep.subr.bf16.mxu0 0
      %2196 = vmatpush1.bf16.msra.mxu0 0
      %2197 = vmatprep.subr.bf16.mxu0 0
      %2198 = vmatpush1.bf16.msra.mxu0 0
      %2199 = vmatprep.mubr.bf16.mxu0 0
      %2200 = vmatmul.mubr.bf16.gmra.mrb[0].mxu0 %v2156
      %v2201 = vpop.f32.mrb[0].mxu0
      %v2202 = vadd.f32 0.0, %v2201
      %v2203 = vpop.f32.mrb[0].mxu0
      %v2204 = vpop.f32.mrb[0].mxu0
      %v2205 = vadd.f32 0.0, %v2204
      %v2206 = vpop.f32.mrb[0].mxu0
      %2207 = vmatprep.mubr.bf16.mxu0 0
      %2208 = vmatmul.mubr.bf16.gmra.mrb[0].mxu0 %v2159
      %v2209 = vpop.f32.mrb[0].mxu0
      %v2210 = vadd.f32 0.0, %v2209
      %v2211 = vpop.f32.mrb[0].mxu0
      %v2212 = vpop.f32.mrb[0].mxu0
      %v2213 = vadd.f32 0.0, %v2212
      %v2214 = vpop.f32.mrb[0].mxu0
      %2215 = vmatprep.mubr.bf16.mxu0 0
      %2216 = vmatmul.mubr.bf16.gmra.mrb[0].mxu0 %v2162
      %v2217 = vpop.f32.mrb[0].mxu0
      %v2218 = vadd.f32 0.0, %v2217
      %v2219 = vpop.f32.mrb[0].mxu0
      %v2220 = vpop.f32.mrb[0].mxu0
      %v2221 = vadd.f32 0.0, %v2220
      %v2222 = vpop.f32.mrb[0].mxu0
      %2223 = vmatprep.mubr.bf16.mxu0 0
      %2224 = vmatmul.mubr.bf16.gmra.mrb[0].mxu0 %v2165
      %v2225 = vpop.f32.mrb[0].mxu0
      %v2226 = vadd.f32 0.0, %v2225
      %v2227 = vpop.f32.mrb[0].mxu0
      %v2228 = vpop.f32.mrb[0].mxu0
      %v2229 = vadd.f32 0.0, %v2228
      %v2230 = vpop.f32.mrb[0].mxu0
      %2231 = vdwg.mxu0
      %v2232 = vadd.f32 %v2102, %v2202
      %v2233 = vadd.f32 %v2103, %v2205
      %v2234 = vadd.f32 %v2104, %v2210
      %v2235 = vadd.f32 %v2105, %v2213
      %v2236 = vadd.f32 %v2106, %v2218
      %v2237 = vadd.f32 %v2107, %v2221
      %v2238 = vadd.f32 %v2108, %v2226
      %v2239 = vadd.f32 %v2109, %v2229
      %v2240 = vld [vmem:[%s1067] sm:$0xff]
      %v2241 = vld [vmem:[%s1067 + $0x10] sm:$0xff]
      %v2242 = vld [vmem:[%s1067 + $0x20] sm:$0xff]
      %v2243 = vld [vmem:[%s1067 + $0x30] sm:$0xff]
      %v2244 = vld [vmem:[%s1067 + $0x40] sm:$0xff]
      %v2245 = vld [vmem:[%s1067 + $0x50] sm:$0xff]
      %v2246 = vld [vmem:[%s1067 + $0x60] sm:$0xff]
      %v2247 = vld [vmem:[%s1067 + $0x70] sm:$0xff]
      %v2248 = vpack.c.bf16 %v2240, %v2240
      %v2249 = vpack.c.bf16 %v2241, %v2241
      %v2250 = vpack.c.bf16 %v2242, %v2242
      %v2251 = vpack.c.bf16 %v2243, %v2243
      %v2252 = vpack.c.bf16 %v2244, %v2244
      %v2253 = vpack.c.bf16 %v2245, %v2245
      %v2254 = vpack.c.bf16 %v2246, %v2246
      %v2255 = vpack.c.bf16 %v2247, %v2247
      %s2256 = scalar_lea.vmem %s3, 48
      %v2257 = vld [vmem:[%s2256] sm:$0xf]
      %v2258 = vld [vmem:[%s2256 + $0x4] sm:$0xf]
      %v2267 = vunpack.c.l.b16 %v2248
      %v2268 = vunpack.c.l.b16 %v2249
      %v2269 = vunpack.c.l.b16 %v2250
      %v2270 = vunpack.c.l.b16 %v2251
      %v2271 = vunpack.c.l.b16 %v2252
      %v2272 = vunpack.c.l.b16 %v2253
      %v2273 = vunpack.c.l.b16 %v2254
      %v2274 = vunpack.c.l.b16 %v2255
      %v2275 = vpack.c.b16 %v2268, %v2267
      %v2276 = vpack.c.b16 %v2270, %v2269
      %v2277 = vpack.c.b16 %v2272, %v2271
      %v2278 = vpack.c.b16 %v2274, %v2273
      %v2281 = vunpack.c.l.b16 %v2257
      %v2282 = vunpack.c.l.b16 %v2258
      %v2283 = vpack.c.b16 %v2282, %v2281
      %v2286 = vsel %vm280, %v2275, 0
      %v2289 = vsel %vm280, %v2276, 0
      %v2292 = vsel %vm280, %v2277, 0
      %v2295 = vsel %vm280, %v2278, 0
      %2297 = vmatprep.subr.bf16.mxu0 0
      %2298 = vmatpush1.bf16.msra.mxu0 %v2283
      %2299 = vmatprep.subr.bf16.mxu0 0
      %2300 = vmatpush1.bf16.msra.mxu0 0
      %2301 = vmatprep.subr.bf16.mxu0 0
      %2302 = vmatpush1.bf16.msra.mxu0 0
      %2303 = vmatprep.subr.bf16.mxu0 0
      %2304 = vmatpush1.bf16.msra.mxu0 0
      %2305 = vmatprep.subr.bf16.mxu0 0
      %2306 = vmatpush1.bf16.msra.mxu0 0
      %2307 = vmatprep.subr.bf16.mxu0 0
      %2308 = vmatpush1.bf16.msra.mxu0 0
      %2309 = vmatprep.subr.bf16.mxu0 0
      %2310 = vmatpush1.bf16.msra.mxu0 0
      %2311 = vmatprep.subr.bf16.mxu0 0
      %2312 = vmatpush1.bf16.msra.mxu0 0
      %2313 = vmatprep.subr.bf16.mxu0 0
      %2314 = vmatpush1.bf16.msra.mxu0 0
      %2315 = vmatprep.subr.bf16.mxu0 0
      %2316 = vmatpush1.bf16.msra.mxu0 0
      %2317 = vmatprep.subr.bf16.mxu0 0
      %2318 = vmatpush1.bf16.msra.mxu0 0
      %2319 = vmatprep.subr.bf16.mxu0 0
      %2320 = vmatpush1.bf16.msra.mxu0 0
      %2321 = vmatprep.subr.bf16.mxu0 0
      %2322 = vmatpush1.bf16.msra.mxu0 0
      %2323 = vmatprep.subr.bf16.mxu0 0
      %2324 = vmatpush1.bf16.msra.mxu0 0
      %2325 = vmatprep.subr.bf16.mxu0 0
      %2326 = vmatpush1.bf16.msra.mxu0 0
      %2327 = vmatprep.subr.bf16.mxu0 0
      %2328 = vmatpush1.bf16.msra.mxu0 0
      %2329 = vmatprep.mubr.bf16.mxu0 0
      %2330 = vmatmul.mubr.bf16.gmra.mrb[0].mxu0 %v2286
      %v2331 = vpop.f32.mrb[0].mxu0
      %v2332 = vadd.f32 0.0, %v2331
      %v2333 = vpop.f32.mrb[0].mxu0
      %v2334 = vpop.f32.mrb[0].mxu0
      %v2335 = vadd.f32 0.0, %v2334
      %v2336 = vpop.f32.mrb[0].mxu0
      %2337 = vmatprep.mubr.bf16.mxu0 0
      %2338 = vmatmul.mubr.bf16.gmra.mrb[0].mxu0 %v2289
      %v2339 = vpop.f32.mrb[0].mxu0
      %v2340 = vadd.f32 0.0, %v2339
      %v2341 = vpop.f32.mrb[0].mxu0
      %v2342 = vpop.f32.mrb[0].mxu0
      %v2343 = vadd.f32 0.0, %v2342
      %v2344 = vpop.f32.mrb[0].mxu0
      %2345 = vmatprep.mubr.bf16.mxu0 0
      %2346 = vmatmul.mubr.bf16.gmra.mrb[0].mxu0 %v2292
      %v2347 = vpop.f32.mrb[0].mxu0
      %v2348 = vadd.f32 0.0, %v2347
      %v2349 = vpop.f32.mrb[0].mxu0
      %v2350 = vpop.f32.mrb[0].mxu0
      %v2351 = vadd.f32 0.0, %v2350
      %v2352 = vpop.f32.mrb[0].mxu0
      %2353 = vmatprep.mubr.bf16.mxu0 0
      %2354 = vmatmul.mubr.bf16.gmra.mrb[0].mxu0 %v2295
      %v2355 = vpop.f32.mrb[0].mxu0
      %v2356 = vadd.f32 0.0, %v2355
      %v2357 = vpop.f32.mrb[0].mxu0
      %v2358 = vpop.f32.mrb[0].mxu0
      %v2359 = vadd.f32 0.0, %v2358
      %v2360 = vpop.f32.mrb[0].mxu0
      %2361 = vdwg.mxu0
      %v2362 = vadd.f32 %v2232, %v2332
      %v2363 = vadd.f32 %v2233, %v2335
      %v2364 = vadd.f32 %v2234, %v2340
      %v2365 = vadd.f32 %v2235, %v2343
      %v2366 = vadd.f32 %v2236, %v2348
      %v2367 = vadd.f32 %v2237, %v2351
      %v2368 = vadd.f32 %v2238, %v2356
      %v2369 = vadd.f32 %v2239, %v2359
      %v2370 = vld [vmem:[%s1067 + $0x1] sm:$0xff]
      %v2371 = vld [vmem:[%s1067 + $0x11] sm:$0xff]
      %v2372 = vld [vmem:[%s1067 + $0x21] sm:$0xff]
      %v2373 = vld [vmem:[%s1067 + $0x31] sm:$0xff]
      %v2374 = vld [vmem:[%s1067 + $0x41] sm:$0xff]
      %v2375 = vld [vmem:[%s1067 + $0x51] sm:$0xff]
      %v2376 = vld [vmem:[%s1067 + $0x61] sm:$0xff]
      %v2377 = vld [vmem:[%s1067 + $0x71] sm:$0xff]
      %v2378 = vpack.c.bf16 %v2370, %v2370
      %v2379 = vpack.c.bf16 %v2371, %v2371
      %v2380 = vpack.c.bf16 %v2372, %v2372
      %v2381 = vpack.c.bf16 %v2373, %v2373
      %v2382 = vpack.c.bf16 %v2374, %v2374
      %v2383 = vpack.c.bf16 %v2375, %v2375
      %v2384 = vpack.c.bf16 %v2376, %v2376
      %v2385 = vpack.c.bf16 %v2377, %v2377
      %s2386 = scalar_lea.vmem %s3, 56
      %v2387 = vld [vmem:[%s2386] sm:$0xf]
      %v2388 = vld [vmem:[%s2386 + $0x4] sm:$0xf]
      %v2397 = vunpack.c.l.b16 %v2378
      %v2398 = vunpack.c.l.b16 %v2379
      %v2399 = vunpack.c.l.b16 %v2380
      %v2400 = vunpack.c.l.b16 %v2381
      %v2401 = vunpack.c.l.b16 %v2382
      %v2402 = vunpack.c.l.b16 %v2383
      %v2403 = vunpack.c.l.b16 %v2384
      %v2404 = vunpack.c.l.b16 %v2385
      %v2405 = vpack.c.b16 %v2398, %v2397
      %v2406 = vpack.c.b16 %v2400, %v2399
      %v2407 = vpack.c.b16 %v2402, %v2401
      %v2408 = vpack.c.b16 %v2404, %v2403
      %v2411 = vunpack.c.l.b16 %v2387
      %v2412 = vunpack.c.l.b16 %v2388
      %v2413 = vpack.c.b16 %v2412, %v2411
      %v2416 = vsel %vm280, %v2405, 0
      %v2419 = vsel %vm280, %v2406, 0
      %v2422 = vsel %vm280, %v2407, 0
      %v2425 = vsel %vm280, %v2408, 0
      %2427 = vmatprep.subr.bf16.mxu0 0
      %2428 = vmatpush1.bf16.msra.mxu0 %v2413
      %2429 = vmatprep.subr.bf16.mxu0 0
      %2430 = vmatpush1.bf16.msra.mxu0 0
      %2431 = vmatprep.subr.bf16.mxu0 0
      %2432 = vmatpush1.bf16.msra.mxu0 0
      %2433 = vmatprep.subr.bf16.mxu0 0
      %2434 = vmatpush1.bf16.msra.mxu0 0
      %2435 = vmatprep.subr.bf16.mxu0 0
      %2436 = vmatpush1.bf16.msra.mxu0 0
      %2437 = vmatprep.subr.bf16.mxu0 0
      %2438 = vmatpush1.bf16.msra.mxu0 0
      %2439 = vmatprep.subr.bf16.mxu0 0
      %2440 = vmatpush1.bf16.msra.mxu0 0
      %2441 = vmatprep.subr.bf16.mxu0 0
      %2442 = vmatpush1.bf16.msra.mxu0 0
      %2443 = vmatprep.subr.bf16.mxu0 0
      %2444 = vmatpush1.bf16.msra.mxu0 0
      %2445 = vmatprep.subr.bf16.mxu0 0
      %2446 = vmatpush1.bf16.msra.mxu0 0
      %2447 = vmatprep.subr.bf16.mxu0 0
      %2448 = vmatpush1.bf16.msra.mxu0 0
      %2449 = vmatprep.subr.bf16.mxu0 0
      %2450 = vmatpush1.bf16.msra.mxu0 0
      %2451 = vmatprep.subr.bf16.mxu0 0
      %2452 = vmatpush1.bf16.msra.mxu0 0
      %2453 = vmatprep.subr.bf16.mxu0 0
      %2454 = vmatpush1.bf16.msra.mxu0 0
      %2455 = vmatprep.subr.bf16.mxu0 0
      %2456 = vmatpush1.bf16.msra.mxu0 0
      %2457 = vmatprep.subr.bf16.mxu0 0
      %2458 = vmatpush1.bf16.msra.mxu0 0
      %2459 = vmatprep.mubr.bf16.mxu0 0
      %2460 = vmatmul.mubr.bf16.gmra.mrb[0].mxu0 %v2416
      %v2461 = vpop.f32.mrb[0].mxu0
      %v2462 = vadd.f32 0.0, %v2461
      %v2463 = vpop.f32.mrb[0].mxu0
      %v2464 = vpop.f32.mrb[0].mxu0
      %v2465 = vadd.f32 0.0, %v2464
      %v2466 = vpop.f32.mrb[0].mxu0
      %2467 = vmatprep.mubr.bf16.mxu0 0
      %2468 = vmatmul.mubr.bf16.gmra.mrb[0].mxu0 %v2419
      %v2469 = vpop.f32.mrb[0].mxu0
      %v2470 = vadd.f32 0.0, %v2469
      %v2471 = vpop.f32.mrb[0].mxu0
      %v2472 = vpop.f32.mrb[0].mxu0
      %v2473 = vadd.f32 0.0, %v2472
      %v2474 = vpop.f32.mrb[0].mxu0
      %2475 = vmatprep.mubr.bf16.mxu0 0
      %2476 = vmatmul.mubr.bf16.gmra.mrb[0].mxu0 %v2422
      %v2477 = vpop.f32.mrb[0].mxu0
      %v2478 = vadd.f32 0.0, %v2477
      %v2479 = vpop.f32.mrb[0].mxu0
      %v2480 = vpop.f32.mrb[0].mxu0
      %v2481 = vadd.f32 0.0, %v2480
      %v2482 = vpop.f32.mrb[0].mxu0
      %2483 = vmatprep.mubr.bf16.mxu0 0
      %2484 = vmatmul.mubr.bf16.gmra.mrb[0].mxu0 %v2425
      %v2485 = vpop.f32.mrb[0].mxu0
      %v2486 = vadd.f32 0.0, %v2485
      %v2487 = vpop.f32.mrb[0].mxu0
      %v2488 = vpop.f32.mrb[0].mxu0
      %v2489 = vadd.f32 0.0, %v2488
      %v2490 = vpop.f32.mrb[0].mxu0
      %2491 = vdwg.mxu0
      %v2492 = vadd.f32 %v2362, %v2462
      %v2493 = vadd.f32 %v2363, %v2465
      %v2494 = vadd.f32 %v2364, %v2470
      %v2495 = vadd.f32 %v2365, %v2473
      %v2496 = vadd.f32 %v2366, %v2478
      %v2497 = vadd.f32 %v2367, %v2481
      %v2498 = vadd.f32 %v2368, %v2486
      %v2499 = vadd.f32 %v2369, %v2489
      %v2500 = vld [vmem:[%s1067 + $0x2] sm:$0xff]
      %v2501 = vld [vmem:[%s1067 + $0x12] sm:$0xff]
      %v2502 = vld [vmem:[%s1067 + $0x22] sm:$0xff]
      %v2503 = vld [vmem:[%s1067 + $0x32] sm:$0xff]
      %v2504 = vld [vmem:[%s1067 + $0x42] sm:$0xff]
      %v2505 = vld [vmem:[%s1067 + $0x52] sm:$0xff]
      %v2506 = vld [vmem:[%s1067 + $0x62] sm:$0xff]
      %v2507 = vld [vmem:[%s1067 + $0x72] sm:$0xff]
      %v2508 = vpack.c.bf16 %v2500, %v2500
      %v2509 = vpack.c.bf16 %v2501, %v2501
      %v2510 = vpack.c.bf16 %v2502, %v2502
      %v2511 = vpack.c.bf16 %v2503, %v2503
      %v2512 = vpack.c.bf16 %v2504, %v2504
      %v2513 = vpack.c.bf16 %v2505, %v2505
      %v2514 = vpack.c.bf16 %v2506, %v2506
      %v2515 = vpack.c.bf16 %v2507, %v2507
      %s2516 = scalar_lea.vmem %s3, 64
      %v2517 = vld [vmem:[%s2516] sm:$0xf]
      %v2518 = vld [vmem:[%s2516 + $0x4] sm:$0xf]
      %v2527 = vunpack.c.l.b16 %v2508
      %v2528 = vunpack.c.l.b16 %v2509
      %v2529 = vunpack.c.l.b16 %v2510
      %v2530 = vunpack.c.l.b16 %v2511
      %v2531 = vunpack.c.l.b16 %v2512
      %v2532 = vunpack.c.l.b16 %v2513
      %v2533 = vunpack.c.l.b16 %v2514
      %v2534 = vunpack.c.l.b16 %v2515
      %v2535 = vpack.c.b16 %v2528, %v2527
      %v2536 = vpack.c.b16 %v2530, %v2529
      %v2537 = vpack.c.b16 %v2532, %v2531
      %v2538 = vpack.c.b16 %v2534, %v2533
      %v2541 = vunpack.c.l.b16 %v2517
      %v2542 = vunpack.c.l.b16 %v2518
      %v2543 = vpack.c.b16 %v2542, %v2541
      %v2546 = vsel %vm280, %v2535, 0
      %v2549 = vsel %vm280, %v2536, 0
      %v2552 = vsel %vm280, %v2537, 0
      %v2555 = vsel %vm280, %v2538, 0
      %2557 = vmatprep.subr.bf16.mxu0 0
      %2558 = vmatpush1.bf16.msra.mxu0 %v2543
      %2559 = vmatprep.subr.bf16.mxu0 0
      %2560 = vmatpush1.bf16.msra.mxu0 0
      %2561 = vmatprep.subr.bf16.mxu0 0
      %2562 = vmatpush1.bf16.msra.mxu0 0
      %2563 = vmatprep.subr.bf16.mxu0 0
      %2564 = vmatpush1.bf16.msra.mxu0 0
      %2565 = vmatprep.subr.bf16.mxu0 0
      %2566 = vmatpush1.bf16.msra.mxu0 0
      %2567 = vmatprep.subr.bf16.mxu0 0
      %2568 = vmatpush1.bf16.msra.mxu0 0
      %2569 = vmatprep.subr.bf16.mxu0 0
      %2570 = vmatpush1.bf16.msra.mxu0 0
      %2571 = vmatprep.subr.bf16.mxu0 0
      %2572 = vmatpush1.bf16.msra.mxu0 0
      %2573 = vmatprep.subr.bf16.mxu0 0
      %2574 = vmatpush1.bf16.msra.mxu0 0
      %2575 = vmatprep.subr.bf16.mxu0 0
      %2576 = vmatpush1.bf16.msra.mxu0 0
      %2577 = vmatprep.subr.bf16.mxu0 0
      %2578 = vmatpush1.bf16.msra.mxu0 0
      %2579 = vmatprep.subr.bf16.mxu0 0
      %2580 = vmatpush1.bf16.msra.mxu0 0
      %2581 = vmatprep.subr.bf16.mxu0 0
      %2582 = vmatpush1.bf16.msra.mxu0 0
      %2583 = vmatprep.subr.bf16.mxu0 0
      %2584 = vmatpush1.bf16.msra.mxu0 0
      %2585 = vmatprep.subr.bf16.mxu0 0
      %2586 = vmatpush1.bf16.msra.mxu0 0
      %2587 = vmatprep.subr.bf16.mxu0 0
      %2588 = vmatpush1.bf16.msra.mxu0 0
      %2589 = vmatprep.mubr.bf16.mxu0 0
      %2590 = vmatmul.mubr.bf16.gmra.mrb[0].mxu0 %v2546
      %v2591 = vpop.f32.mrb[0].mxu0
      %v2592 = vadd.f32 0.0, %v2591
      %v2593 = vpop.f32.mrb[0].mxu0
      %v2594 = vpop.f32.mrb[0].mxu0
      %v2595 = vadd.f32 0.0, %v2594
      %v2596 = vpop.f32.mrb[0].mxu0
      %2597 = vmatprep.mubr.bf16.mxu0 0
      %2598 = vmatmul.mubr.bf16.gmra.mrb[0].mxu0 %v2549
      %v2599 = vpop.f32.mrb[0].mxu0
      %v2600 = vadd.f32 0.0, %v2599
      %v2601 = vpop.f32.mrb[0].mxu0
      %v2602 = vpop.f32.mrb[0].mxu0
      %v2603 = vadd.f32 0.0, %v2602
      %v2604 = vpop.f32.mrb[0].mxu0
      %2605 = vmatprep.mubr.bf16.mxu0 0
      %2606 = vmatmul.mubr.bf16.gmra.mrb[0].mxu0 %v2552
      %v2607 = vpop.f32.mrb[0].mxu0
      %v2608 = vadd.f32 0.0, %v2607
      %v2609 = vpop.f32.mrb[0].mxu0
      %v2610 = vpop.f32.mrb[0].mxu0
      %v2611 = vadd.f32 0.0, %v2610
      %v2612 = vpop.f32.mrb[0].mxu0
      %2613 = vmatprep.mubr.bf16.mxu0 0
      %2614 = vmatmul.mubr.bf16.gmra.mrb[0].mxu0 %v2555
      %v2615 = vpop.f32.mrb[0].mxu0
      %v2616 = vadd.f32 0.0, %v2615
      %v2617 = vpop.f32.mrb[0].mxu0
      %v2618 = vpop.f32.mrb[0].mxu0
      %v2619 = vadd.f32 0.0, %v2618
      %v2620 = vpop.f32.mrb[0].mxu0
      %2621 = vdwg.mxu0
      %v2622 = vadd.f32 %v2492, %v2592
      %v2623 = vadd.f32 %v2493, %v2595
      %v2624 = vadd.f32 %v2494, %v2600
      %v2625 = vadd.f32 %v2495, %v2603
      %v2626 = vadd.f32 %v2496, %v2608
      %v2627 = vadd.f32 %v2497, %v2611
      %v2628 = vadd.f32 %v2498, %v2616
      %v2629 = vadd.f32 %v2499, %v2619
      %v2631 = vlaneseq
      %v2632 = vshrl.u32 %v2631, 7
      %v2633 = vsub.s32 0, %v2632
      %v2634 = vrot.slane %v1476, %v2633
      %v2636 = vadd.f32 %v2622, %v2634
      %v2637 = vadd.f32 %v2623, %v2634
      %v2638 = vadd.f32 %v2624, %v2634
      %v2639 = vadd.f32 %v2625, %v2634
      %v2640 = vadd.f32 %v2626, %v2634
      %v2641 = vadd.f32 %v2627, %v2634
      %v2642 = vadd.f32 %v2628, %v2634
      %v2643 = vadd.f32 %v2629, %v2634
      %v2644 = vmax.f32 %v2636, 0.0
      %v2645 = vmax.f32 %v2637, 0.0
      %v2646 = vmax.f32 %v2638, 0.0
      %v2647 = vmax.f32 %v2639, 0.0
      %v2648 = vmax.f32 %v2640, 0.0
      %v2649 = vmax.f32 %v2641, 0.0
      %v2650 = vmax.f32 %v2642, 0.0
      %v2651 = vmax.f32 %v2643, 0.0
      %2652 = vst.msk [vmem:[%s316 + $0x1] sm:$0xff] %vm280, %v2644
      %2653 = vst.msk [vmem:[%s316 + $0x11] sm:$0xff] %vm280, %v2645
      %2654 = vst.msk [vmem:[%s316 + $0x21] sm:$0xff] %vm280, %v2646
      %2655 = vst.msk [vmem:[%s316 + $0x31] sm:$0xff] %vm280, %v2647
      %2656 = vst.msk [vmem:[%s316 + $0x41] sm:$0xff] %vm280, %v2648
      %2657 = vst.msk [vmem:[%s316 + $0x51] sm:$0xff] %vm280, %v2649
      %2658 = vst.msk [vmem:[%s316 + $0x61] sm:$0xff] %vm280, %v2650
      %2659 = vst.msk [vmem:[%s316 + $0x71] sm:$0xff] %vm280, %v2651
      %v2660 = vld [vmem:[%s6] sm:$0x1]
      %v2661 = vld [vmem:[#allocation2] sm:$0xff]
      %v2662 = vld [vmem:[#allocation2 + $0x10] sm:$0xff]
      %v2663 = vld [vmem:[#allocation2 + $0x20] sm:$0xff]
      %v2664 = vld [vmem:[#allocation2 + $0x30] sm:$0xff]
      %v2665 = vld [vmem:[#allocation2 + $0x40] sm:$0xff]
      %v2666 = vld [vmem:[#allocation2 + $0x50] sm:$0xff]
      %v2667 = vld [vmem:[#allocation2 + $0x60] sm:$0xff]
      %v2668 = vld [vmem:[#allocation2 + $0x70] sm:$0xff]
      %v2669 = vpack.c.bf16 %v2661, %v2661
      %v2670 = vpack.c.bf16 %v2662, %v2662
      %v2671 = vpack.c.bf16 %v2663, %v2663
      %v2672 = vpack.c.bf16 %v2664, %v2664
      %v2673 = vpack.c.bf16 %v2665, %v2665
      %v2674 = vpack.c.bf16 %v2666, %v2666
      %v2675 = vpack.c.bf16 %v2667, %v2667
      %v2676 = vpack.c.bf16 %v2668, %v2668
      %v2677 = vld [vmem:[%s5] sm:$0xf]
      %v2678 = vld [vmem:[%s5 + $0x4] sm:$0xf]
      %v2679 = vld [vmem:[#allocation2 + $0x1] sm:$0xff]
      %v2680 = vld [vmem:[#allocation2 + $0x11] sm:$0xff]
      %v2681 = vld [vmem:[#allocation2 + $0x21] sm:$0xff]
      %v2682 = vld [vmem:[#allocation2 + $0x31] sm:$0xff]
      %v2683 = vld [vmem:[#allocation2 + $0x41] sm:$0xff]
      %v2684 = vld [vmem:[#allocation2 + $0x51] sm:$0xff]
      %v2685 = vld [vmem:[#allocation2 + $0x61] sm:$0xff]
      %v2686 = vld [vmem:[#allocation2 + $0x71] sm:$0xff]
      %v2687 = vpack.c.bf16 %v2679, %v2679
      %v2688 = vpack.c.bf16 %v2680, %v2680
      %v2689 = vpack.c.bf16 %v2681, %v2681
      %v2690 = vpack.c.bf16 %v2682, %v2682
      %v2691 = vpack.c.bf16 %v2683, %v2683
      %v2692 = vpack.c.bf16 %v2684, %v2684
      %v2693 = vpack.c.bf16 %v2685, %v2685
      %v2694 = vpack.c.bf16 %v2686, %v2686
      %s2695 = scalar_lea.vmem %s5, 8
      %v2696 = vld [vmem:[%s2695] sm:$0xf]
      %v2697 = vld [vmem:[%s2695 + $0x4] sm:$0xf]
      %v2706 = vunpack.c.l.b16 %v2687
      %v2707 = vunpack.c.l.b16 %v2688
      %v2708 = vunpack.c.l.b16 %v2689
      %v2709 = vunpack.c.l.b16 %v2690
      %v2710 = vunpack.c.l.b16 %v2691
      %v2711 = vunpack.c.l.b16 %v2692
      %v2712 = vunpack.c.l.b16 %v2693
      %v2713 = vunpack.c.l.b16 %v2694
      %v2714 = vpack.c.b16 %v2707, %v2706
      %v2715 = vpack.c.b16 %v2709, %v2708
      %v2716 = vpack.c.b16 %v2711, %v2710
      %v2717 = vpack.c.b16 %v2713, %v2712
      %v2720 = vunpack.c.l.b16 %v2696
      %v2721 = vunpack.c.l.b16 %v2697
      %v2722 = vpack.c.b16 %v2721, %v2720
      %v2725 = vsel %vm280, %v2714, 0
      %v2728 = vsel %vm280, %v2715, 0
      %v2731 = vsel %vm280, %v2716, 0
      %v2734 = vsel %vm280, %v2717, 0
      %2736 = vmatprep.subr.bf16.mxu0 0
      %2737 = vmatpush1.bf16.msra.mxu0 %v2722
      %2738 = vmatprep.subr.bf16.mxu0 0
      %2739 = vmatpush1.bf16.msra.mxu0 0
      %2740 = vmatprep.subr.bf16.mxu0 0
      %2741 = vmatpush1.bf16.msra.mxu0 0
      %2742 = vmatprep.subr.bf16.mxu0 0
      %2743 = vmatpush1.bf16.msra.mxu0 0
      %2744 = vmatprep.subr.bf16.mxu0 0
      %2745 = vmatpush1.bf16.msra.mxu0 0
      %2746 = vmatprep.subr.bf16.mxu0 0
      %2747 = vmatpush1.bf16.msra.mxu0 0
      %2748 = vmatprep.subr.bf16.mxu0 0
      %2749 = vmatpush1.bf16.msra.mxu0 0
      %2750 = vmatprep.subr.bf16.mxu0 0
      %2751 = vmatpush1.bf16.msra.mxu0 0
      %2752 = vmatprep.subr.bf16.mxu0 0
      %2753 = vmatpush1.bf16.msra.mxu0 0
      %2754 = vmatprep.subr.bf16.mxu0 0
      %2755 = vmatpush1.bf16.msra.mxu0 0
      %2756 = vmatprep.subr.bf16.mxu0 0
      %2757 = vmatpush1.bf16.msra.mxu0 0
      %2758 = vmatprep.subr.bf16.mxu0 0
      %2759 = vmatpush1.bf16.msra.mxu0 0
      %2760 = vmatprep.subr.bf16.mxu0 0
      %2761 = vmatpush1.bf16.msra.mxu0 0
      %2762 = vmatprep.subr.bf16.mxu0 0
      %2763 = vmatpush1.bf16.msra.mxu0 0
      %2764 = vmatprep.subr.bf16.mxu0 0
      %2765 = vmatpush1.bf16.msra.mxu0 0
      %2766 = vmatprep.subr.bf16.mxu0 0
      %2767 = vmatpush1.bf16.msra.mxu0 0
      %2768 = vmatprep.mubr.bf16.mxu0 0
      %2769 = vmatmul.mubr.bf16.gmra.mrb[0].mxu0 %v2725
      %v2770 = vpop.f32.mrb[0].mxu0
      %v2771 = vadd.f32 0.0, %v2770
      %v2772 = vpop.f32.mrb[0].mxu0
      %v2773 = vpop.f32.mrb[0].mxu0
      %v2774 = vadd.f32 0.0, %v2773
      %v2775 = vpop.f32.mrb[0].mxu0
      %2776 = vmatprep.mubr.bf16.mxu0 0
      %2777 = vmatmul.mubr.bf16.gmra.mrb[0].mxu0 %v2728
      %v2778 = vpop.f32.mrb[0].mxu0
      %v2779 = vadd.f32 0.0, %v2778
      %v2780 = vpop.f32.mrb[0].mxu0
      %v2781 = vpop.f32.mrb[0].mxu0
      %v2782 = vadd.f32 0.0, %v2781
      %v2783 = vpop.f32.mrb[0].mxu0
      %2784 = vmatprep.mubr.bf16.mxu0 0
      %2785 = vmatmul.mubr.bf16.gmra.mrb[0].mxu0 %v2731
      %v2786 = vpop.f32.mrb[0].mxu0
      %v2787 = vadd.f32 0.0, %v2786
      %v2788 = vpop.f32.mrb[0].mxu0
      %v2789 = vpop.f32.mrb[0].mxu0
      %v2790 = vadd.f32 0.0, %v2789
      %v2791 = vpop.f32.mrb[0].mxu0
      %2792 = vmatprep.mubr.bf16.mxu0 0
      %2793 = vmatmul.mubr.bf16.gmra.mrb[0].mxu0 %v2734
      %v2794 = vpop.f32.mrb[0].mxu0
      %v2795 = vadd.f32 0.0, %v2794
      %v2796 = vpop.f32.mrb[0].mxu0
      %v2797 = vpop.f32.mrb[0].mxu0
      %v2798 = vadd.f32 0.0, %v2797
      %v2799 = vpop.f32.mrb[0].mxu0
      %2800 = vdwg.mxu0
      %v2809 = vunpack.c.l.b16 %v2669
      %v2810 = vunpack.c.l.b16 %v2670
      %v2811 = vunpack.c.l.b16 %v2671
      %v2812 = vunpack.c.l.b16 %v2672
      %v2813 = vunpack.c.l.b16 %v2673
      %v2814 = vunpack.c.l.b16 %v2674
      %v2815 = vunpack.c.l.b16 %v2675
      %v2816 = vunpack.c.l.b16 %v2676
      %v2817 = vpack.c.b16 %v2810, %v2809
      %v2818 = vpack.c.b16 %v2812, %v2811
      %v2819 = vpack.c.b16 %v2814, %v2813
      %v2820 = vpack.c.b16 %v2816, %v2815
      %v2823 = vunpack.c.l.b16 %v2677
      %v2824 = vunpack.c.l.b16 %v2678
      %v2825 = vpack.c.b16 %v2824, %v2823
      %v2828 = vsel %vm280, %v2817, 0
      %v2831 = vsel %vm280, %v2818, 0
      %v2834 = vsel %vm280, %v2819, 0
      %v2837 = vsel %vm280, %v2820, 0
      %2839 = vmatprep.subr.bf16.mxu0 0
      %2840 = vmatpush1.bf16.msra.mxu0 %v2825
      %2841 = vmatprep.subr.bf16.mxu0 0
      %2842 = vmatpush1.bf16.msra.mxu0 0
      %2843 = vmatprep.subr.bf16.mxu0 0
      %2844 = vmatpush1.bf16.msra.mxu0 0
      %2845 = vmatprep.subr.bf16.mxu0 0
      %2846 = vmatpush1.bf16.msra.mxu0 0
      %2847 = vmatprep.subr.bf16.mxu0 0
      %2848 = vmatpush1.bf16.msra.mxu0 0
      %2849 = vmatprep.subr.bf16.mxu0 0
      %2850 = vmatpush1.bf16.msra.mxu0 0
      %2851 = vmatprep.subr.bf16.mxu0 0
      %2852 = vmatpush1.bf16.msra.mxu0 0
      %2853 = vmatprep.subr.bf16.mxu0 0
      %2854 = vmatpush1.bf16.msra.mxu0 0
      %2855 = vmatprep.subr.bf16.mxu0 0
      %2856 = vmatpush1.bf16.msra.mxu0 0
      %2857 = vmatprep.subr.bf16.mxu0 0
      %2858 = vmatpush1.bf16.msra.mxu0 0
      %2859 = vmatprep.subr.bf16.mxu0 0
      %2860 = vmatpush1.bf16.msra.mxu0 0
      %2861 = vmatprep.subr.bf16.mxu0 0
      %2862 = vmatpush1.bf16.msra.mxu0 0
      %2863 = vmatprep.subr.bf16.mxu0 0
      %2864 = vmatpush1.bf16.msra.mxu0 0
      %2865 = vmatprep.subr.bf16.mxu0 0
      %2866 = vmatpush1.bf16.msra.mxu0 0
      %2867 = vmatprep.subr.bf16.mxu0 0
      %2868 = vmatpush1.bf16.msra.mxu0 0
      %2869 = vmatprep.subr.bf16.mxu0 0
      %2870 = vmatpush1.bf16.msra.mxu0 0
      %2871 = vmatprep.mubr.bf16.mxu0 0
      %2872 = vmatmul.mubr.bf16.gmra.mrb[0].mxu0 %v2828
      %v2873 = vpop.f32.mrb[0].mxu0
      %v2874 = vadd.f32 %v2771, %v2873
      %v2875 = vpop.f32.mrb[0].mxu0
      %v2876 = vpop.f32.mrb[0].mxu0
      %v2877 = vadd.f32 %v2774, %v2876
      %v2878 = vpop.f32.mrb[0].mxu0
      %2879 = vmatprep.mubr.bf16.mxu0 0
      %2880 = vmatmul.mubr.bf16.gmra.mrb[0].mxu0 %v2831
      %v2881 = vpop.f32.mrb[0].mxu0
      %v2882 = vadd.f32 %v2779, %v2881
      %v2883 = vpop.f32.mrb[0].mxu0
      %v2884 = vpop.f32.mrb[0].mxu0
      %v2885 = vadd.f32 %v2782, %v2884
      %v2886 = vpop.f32.mrb[0].mxu0
      %2887 = vmatprep.mubr.bf16.mxu0 0
      %2888 = vmatmul.mubr.bf16.gmra.mrb[0].mxu0 %v2834
      %v2889 = vpop.f32.mrb[0].mxu0
      %v2890 = vadd.f32 %v2787, %v2889
      %v2891 = vpop.f32.mrb[0].mxu0
      %v2892 = vpop.f32.mrb[0].mxu0
      %v2893 = vadd.f32 %v2790, %v2892
      %v2894 = vpop.f32.mrb[0].mxu0
      %2895 = vmatprep.mubr.bf16.mxu0 0
      %2896 = vmatmul.mubr.bf16.gmra.mrb[0].mxu0 %v2837
      %v2897 = vpop.f32.mrb[0].mxu0
      %v2898 = vadd.f32 %v2795, %v2897
      %v2899 = vpop.f32.mrb[0].mxu0
      %v2900 = vpop.f32.mrb[0].mxu0
      %v2901 = vadd.f32 %v2798, %v2900
      %v2902 = vpop.f32.mrb[0].mxu0
      %2903 = vdwg.mxu0
      %v2904 = vld [vmem:[#allocation2 + $0x2] sm:$0xff]
      %v2905 = vld [vmem:[#allocation2 + $0x12] sm:$0xff]
      %v2906 = vld [vmem:[#allocation2 + $0x22] sm:$0xff]
      %v2907 = vld [vmem:[#allocation2 + $0x32] sm:$0xff]
      %v2908 = vld [vmem:[#allocation2 + $0x42] sm:$0xff]
      %v2909 = vld [vmem:[#allocation2 + $0x52] sm:$0xff]
      %v2910 = vld [vmem:[#allocation2 + $0x62] sm:$0xff]
      %v2911 = vld [vmem:[#allocation2 + $0x72] sm:$0xff]
      %v2912 = vpack.c.bf16 %v2904, %v2904
      %v2913 = vpack.c.bf16 %v2905, %v2905
      %v2914 = vpack.c.bf16 %v2906, %v2906
      %v2915 = vpack.c.bf16 %v2907, %v2907
      %v2916 = vpack.c.bf16 %v2908, %v2908
      %v2917 = vpack.c.bf16 %v2909, %v2909
      %v2918 = vpack.c.bf16 %v2910, %v2910
      %v2919 = vpack.c.bf16 %v2911, %v2911
      %s2920 = scalar_lea.vmem %s5, 16
      %v2921 = vld [vmem:[%s2920] sm:$0xf]
      %v2922 = vld [vmem:[%s2920 + $0x4] sm:$0xf]
      %v2931 = vunpack.c.l.b16 %v2912
      %v2932 = vunpack.c.l.b16 %v2913
      %v2933 = vunpack.c.l.b16 %v2914
      %v2934 = vunpack.c.l.b16 %v2915
      %v2935 = vunpack.c.l.b16 %v2916
      %v2936 = vunpack.c.l.b16 %v2917
      %v2937 = vunpack.c.l.b16 %v2918
      %v2938 = vunpack.c.l.b16 %v2919
      %v2939 = vpack.c.b16 %v2932, %v2931
      %v2940 = vpack.c.b16 %v2934, %v2933
      %v2941 = vpack.c.b16 %v2936, %v2935
      %v2942 = vpack.c.b16 %v2938, %v2937
      %v2945 = vunpack.c.l.b16 %v2921
      %v2946 = vunpack.c.l.b16 %v2922
      %v2947 = vpack.c.b16 %v2946, %v2945
      %v2950 = vsel %vm280, %v2939, 0
      %v2953 = vsel %vm280, %v2940, 0
      %v2956 = vsel %vm280, %v2941, 0
      %v2959 = vsel %vm280, %v2942, 0
      %2961 = vmatprep.subr.bf16.mxu0 0
      %2962 = vmatpush1.bf16.msra.mxu0 %v2947
      %2963 = vmatprep.subr.bf16.mxu0 0
      %2964 = vmatpush1.bf16.msra.mxu0 0
      %2965 = vmatprep.subr.bf16.mxu0 0
      %2966 = vmatpush1.bf16.msra.mxu0 0
      %2967 = vmatprep.subr.bf16.mxu0 0
      %2968 = vmatpush1.bf16.msra.mxu0 0
      %2969 = vmatprep.subr.bf16.mxu0 0
      %2970 = vmatpush1.bf16.msra.mxu0 0
      %2971 = vmatprep.subr.bf16.mxu0 0
      %2972 = vmatpush1.bf16.msra.mxu0 0
      %2973 = vmatprep.subr.bf16.mxu0 0
      %2974 = vmatpush1.bf16.msra.mxu0 0
      %2975 = vmatprep.subr.bf16.mxu0 0
      %2976 = vmatpush1.bf16.msra.mxu0 0
      %2977 = vmatprep.subr.bf16.mxu0 0
      %2978 = vmatpush1.bf16.msra.mxu0 0
      %2979 = vmatprep.subr.bf16.mxu0 0
      %2980 = vmatpush1.bf16.msra.mxu0 0
      %2981 = vmatprep.subr.bf16.mxu0 0
      %2982 = vmatpush1.bf16.msra.mxu0 0
      %2983 = vmatprep.subr.bf16.mxu0 0
      %2984 = vmatpush1.bf16.msra.mxu0 0
      %2985 = vmatprep.subr.bf16.mxu0 0
      %2986 = vmatpush1.bf16.msra.mxu0 0
      %2987 = vmatprep.subr.bf16.mxu0 0
      %2988 = vmatpush1.bf16.msra.mxu0 0
      %2989 = vmatprep.subr.bf16.mxu0 0
      %2990 = vmatpush1.bf16.msra.mxu0 0
      %2991 = vmatprep.subr.bf16.mxu0 0
      %2992 = vmatpush1.bf16.msra.mxu0 0
      %2993 = vmatprep.mubr.bf16.mxu0 0
      %2994 = vmatmul.mubr.bf16.gmra.mrb[0].mxu0 %v2950
      %v2995 = vpop.f32.mrb[0].mxu0
      %v2996 = vadd.f32 0.0, %v2995
      %v2997 = vpop.f32.mrb[0].mxu0
      %v2998 = vpop.f32.mrb[0].mxu0
      %v2999 = vadd.f32 0.0, %v2998
      %v3000 = vpop.f32.mrb[0].mxu0
      %3001 = vmatprep.mubr.bf16.mxu0 0
      %3002 = vmatmul.mubr.bf16.gmra.mrb[0].mxu0 %v2953
      %v3003 = vpop.f32.mrb[0].mxu0
      %v3004 = vadd.f32 0.0, %v3003
      %v3005 = vpop.f32.mrb[0].mxu0
      %v3006 = vpop.f32.mrb[0].mxu0
      %v3007 = vadd.f32 0.0, %v3006
      %v3008 = vpop.f32.mrb[0].mxu0
      %3009 = vmatprep.mubr.bf16.mxu0 0
      %3010 = vmatmul.mubr.bf16.gmra.mrb[0].mxu0 %v2956
      %v3011 = vpop.f32.mrb[0].mxu0
      %v3012 = vadd.f32 0.0, %v3011
      %v3013 = vpop.f32.mrb[0].mxu0
      %v3014 = vpop.f32.mrb[0].mxu0
      %v3015 = vadd.f32 0.0, %v3014
      %v3016 = vpop.f32.mrb[0].mxu0
      %3017 = vmatprep.mubr.bf16.mxu0 0
      %3018 = vmatmul.mubr.bf16.gmra.mrb[0].mxu0 %v2959
      %v3019 = vpop.f32.mrb[0].mxu0
      %v3020 = vadd.f32 0.0, %v3019
      %v3021 = vpop.f32.mrb[0].mxu0
      %v3022 = vpop.f32.mrb[0].mxu0
      %v3023 = vadd.f32 0.0, %v3022
      %v3024 = vpop.f32.mrb[0].mxu0
      %3025 = vdwg.mxu0
      %v3026 = vadd.f32 %v2874, %v2996
      %v3027 = vadd.f32 %v2877, %v2999
      %v3028 = vadd.f32 %v2882, %v3004
      %v3029 = vadd.f32 %v2885, %v3007
      %v3030 = vadd.f32 %v2890, %v3012
      %v3031 = vadd.f32 %v2893, %v3015
      %v3032 = vadd.f32 %v2898, %v3020
      %v3033 = vadd.f32 %v2901, %v3023
      %v3034 = vld [vmem:[%s316] sm:$0xff]
      %v3035 = vld [vmem:[%s316 + $0x10] sm:$0xff]
      %v3036 = vld [vmem:[%s316 + $0x20] sm:$0xff]
      %v3037 = vld [vmem:[%s316 + $0x30] sm:$0xff]
      %v3038 = vld [vmem:[%s316 + $0x40] sm:$0xff]
      %v3039 = vld [vmem:[%s316 + $0x50] sm:$0xff]
      %v3040 = vld [vmem:[%s316 + $0x60] sm:$0xff]
      %v3041 = vld [vmem:[%s316 + $0x70] sm:$0xff]
      %v3042 = vpack.c.bf16 %v3034, %v3034
      %v3043 = vpack.c.bf16 %v3035, %v3035
      %v3044 = vpack.c.bf16 %v3036, %v3036
      %v3045 = vpack.c.bf16 %v3037, %v3037
      %v3046 = vpack.c.bf16 %v3038, %v3038
      %v3047 = vpack.c.bf16 %v3039, %v3039
      %v3048 = vpack.c.bf16 %v3040, %v3040
      %v3049 = vpack.c.bf16 %v3041, %v3041
      %s3050 = scalar_lea.vmem %s5, 24
      %v3051 = vld [vmem:[%s3050] sm:$0xf]
      %v3052 = vld [vmem:[%s3050 + $0x4] sm:$0xf]
      %v3061 = vunpack.c.l.b16 %v3042
      %v3062 = vunpack.c.l.b16 %v3043
      %v3063 = vunpack.c.l.b16 %v3044
      %v3064 = vunpack.c.l.b16 %v3045
      %v3065 = vunpack.c.l.b16 %v3046
      %v3066 = vunpack.c.l.b16 %v3047
      %v3067 = vunpack.c.l.b16 %v3048
      %v3068 = vunpack.c.l.b16 %v3049
      %v3069 = vpack.c.b16 %v3062, %v3061
      %v3070 = vpack.c.b16 %v3064, %v3063
      %v3071 = vpack.c.b16 %v3066, %v3065
      %v3072 = vpack.c.b16 %v3068, %v3067
      %v3075 = vunpack.c.l.b16 %v3051
      %v3076 = vunpack.c.l.b16 %v3052
      %v3077 = vpack.c.b16 %v3076, %v3075
      %v3080 = vsel %vm280, %v3069, 0
      %v3083 = vsel %vm280, %v3070, 0
      %v3086 = vsel %vm280, %v3071, 0
      %v3089 = vsel %vm280, %v3072, 0
      %3091 = vmatprep.subr.bf16.mxu0 0
      %3092 = vmatpush1.bf16.msra.mxu0 %v3077
      %3093 = vmatprep.subr.bf16.mxu0 0
      %3094 = vmatpush1.bf16.msra.mxu0 0
      %3095 = vmatprep.subr.bf16.mxu0 0
      %3096 = vmatpush1.bf16.msra.mxu0 0
      %3097 = vmatprep.subr.bf16.mxu0 0
      %3098 = vmatpush1.bf16.msra.mxu0 0
      %3099 = vmatprep.subr.bf16.mxu0 0
      %3100 = vmatpush1.bf16.msra.mxu0 0
      %3101 = vmatprep.subr.bf16.mxu0 0
      %3102 = vmatpush1.bf16.msra.mxu0 0
      %3103 = vmatprep.subr.bf16.mxu0 0
      %3104 = vmatpush1.bf16.msra.mxu0 0
      %3105 = vmatprep.subr.bf16.mxu0 0
      %3106 = vmatpush1.bf16.msra.mxu0 0
      %3107 = vmatprep.subr.bf16.mxu0 0
      %3108 = vmatpush1.bf16.msra.mxu0 0
      %3109 = vmatprep.subr.bf16.mxu0 0
      %3110 = vmatpush1.bf16.msra.mxu0 0
      %3111 = vmatprep.subr.bf16.mxu0 0
      %3112 = vmatpush1.bf16.msra.mxu0 0
      %3113 = vmatprep.subr.bf16.mxu0 0
      %3114 = vmatpush1.bf16.msra.mxu0 0
      %3115 = vmatprep.subr.bf16.mxu0 0
      %3116 = vmatpush1.bf16.msra.mxu0 0
      %3117 = vmatprep.subr.bf16.mxu0 0
      %3118 = vmatpush1.bf16.msra.mxu0 0
      %3119 = vmatprep.subr.bf16.mxu0 0
      %3120 = vmatpush1.bf16.msra.mxu0 0
      %3121 = vmatprep.subr.bf16.mxu0 0
      %3122 = vmatpush1.bf16.msra.mxu0 0
      %3123 = vmatprep.mubr.bf16.mxu0 0
      %3124 = vmatmul.mubr.bf16.gmra.mrb[0].mxu0 %v3080
      %v3125 = vpop.f32.mrb[0].mxu0
      %v3126 = vadd.f32 0.0, %v3125
      %v3127 = vpop.f32.mrb[0].mxu0
      %v3128 = vpop.f32.mrb[0].mxu0
      %v3129 = vadd.f32 0.0, %v3128
      %v3130 = vpop.f32.mrb[0].mxu0
      %3131 = vmatprep.mubr.bf16.mxu0 0
      %3132 = vmatmul.mubr.bf16.gmra.mrb[0].mxu0 %v3083
      %v3133 = vpop.f32.mrb[0].mxu0
      %v3134 = vadd.f32 0.0, %v3133
      %v3135 = vpop.f32.mrb[0].mxu0
      %v3136 = vpop.f32.mrb[0].mxu0
      %v3137 = vadd.f32 0.0, %v3136
      %v3138 = vpop.f32.mrb[0].mxu0
      %3139 = vmatprep.mubr.bf16.mxu0 0
      %3140 = vmatmul.mubr.bf16.gmra.mrb[0].mxu0 %v3086
      %v3141 = vpop.f32.mrb[0].mxu0
      %v3142 = vadd.f32 0.0, %v3141
      %v3143 = vpop.f32.mrb[0].mxu0
      %v3144 = vpop.f32.mrb[0].mxu0
      %v3145 = vadd.f32 0.0, %v3144
      %v3146 = vpop.f32.mrb[0].mxu0
      %3147 = vmatprep.mubr.bf16.mxu0 0
      %3148 = vmatmul.mubr.bf16.gmra.mrb[0].mxu0 %v3089
      %v3149 = vpop.f32.mrb[0].mxu0
      %v3150 = vadd.f32 0.0, %v3149
      %v3151 = vpop.f32.mrb[0].mxu0
      %v3152 = vpop.f32.mrb[0].mxu0
      %v3153 = vadd.f32 0.0, %v3152
      %v3154 = vpop.f32.mrb[0].mxu0
      %3155 = vdwg.mxu0
      %v3156 = vadd.f32 %v3026, %v3126
      %v3157 = vadd.f32 %v3027, %v3129
      %v3158 = vadd.f32 %v3028, %v3134
      %v3159 = vadd.f32 %v3029, %v3137
      %v3160 = vadd.f32 %v3030, %v3142
      %v3161 = vadd.f32 %v3031, %v3145
      %v3162 = vadd.f32 %v3032, %v3150
      %v3163 = vadd.f32 %v3033, %v3153
      %v3164 = vld [vmem:[%s316 + $0x1] sm:$0xff]
      %v3165 = vld [vmem:[%s316 + $0x11] sm:$0xff]
      %v3166 = vld [vmem:[%s316 + $0x21] sm:$0xff]
      %v3167 = vld [vmem:[%s316 + $0x31] sm:$0xff]
      %v3168 = vld [vmem:[%s316 + $0x41] sm:$0xff]
      %v3169 = vld [vmem:[%s316 + $0x51] sm:$0xff]
      %v3170 = vld [vmem:[%s316 + $0x61] sm:$0xff]
      %v3171 = vld [vmem:[%s316 + $0x71] sm:$0xff]
      %v3172 = vpack.c.bf16 %v3164, %v3164
      %v3173 = vpack.c.bf16 %v3165, %v3165
      %v3174 = vpack.c.bf16 %v3166, %v3166
      %v3175 = vpack.c.bf16 %v3167, %v3167
      %v3176 = vpack.c.bf16 %v3168, %v3168
      %v3177 = vpack.c.bf16 %v3169, %v3169
      %v3178 = vpack.c.bf16 %v3170, %v3170
      %v3179 = vpack.c.bf16 %v3171, %v3171
      %s3180 = scalar_lea.vmem %s5, 32
      %v3181 = vld [vmem:[%s3180] sm:$0xf]
      %v3182 = vld [vmem:[%s3180 + $0x4] sm:$0xf]
      %v3191 = vunpack.c.l.b16 %v3172
      %v3192 = vunpack.c.l.b16 %v3173
      %v3193 = vunpack.c.l.b16 %v3174
      %v3194 = vunpack.c.l.b16 %v3175
      %v3195 = vunpack.c.l.b16 %v3176
      %v3196 = vunpack.c.l.b16 %v3177
      %v3197 = vunpack.c.l.b16 %v3178
      %v3198 = vunpack.c.l.b16 %v3179
      %v3199 = vpack.c.b16 %v3192, %v3191
      %v3200 = vpack.c.b16 %v3194, %v3193
      %v3201 = vpack.c.b16 %v3196, %v3195
      %v3202 = vpack.c.b16 %v3198, %v3197
      %v3205 = vunpack.c.l.b16 %v3181
      %v3206 = vunpack.c.l.b16 %v3182
      %v3207 = vpack.c.b16 %v3206, %v3205
      %v3210 = vsel %vm280, %v3199, 0
      %v3213 = vsel %vm280, %v3200, 0
      %v3216 = vsel %vm280, %v3201, 0
      %v3219 = vsel %vm280, %v3202, 0
      %3221 = vmatprep.subr.bf16.mxu0 0
      %3222 = vmatpush1.bf16.msra.mxu0 %v3207
      %3223 = vmatprep.subr.bf16.mxu0 0
      %3224 = vmatpush1.bf16.msra.mxu0 0
      %3225 = vmatprep.subr.bf16.mxu0 0
      %3226 = vmatpush1.bf16.msra.mxu0 0
      %3227 = vmatprep.subr.bf16.mxu0 0
      %3228 = vmatpush1.bf16.msra.mxu0 0
      %3229 = vmatprep.subr.bf16.mxu0 0
      %3230 = vmatpush1.bf16.msra.mxu0 0
      %3231 = vmatprep.subr.bf16.mxu0 0
      %3232 = vmatpush1.bf16.msra.mxu0 0
      %3233 = vmatprep.subr.bf16.mxu0 0
      %3234 = vmatpush1.bf16.msra.mxu0 0
      %3235 = vmatprep.subr.bf16.mxu0 0
      %3236 = vmatpush1.bf16.msra.mxu0 0
      %3237 = vmatprep.subr.bf16.mxu0 0
      %3238 = vmatpush1.bf16.msra.mxu0 0
      %3239 = vmatprep.subr.bf16.mxu0 0
      %3240 = vmatpush1.bf16.msra.mxu0 0
      %3241 = vmatprep.subr.bf16.mxu0 0
      %3242 = vmatpush1.bf16.msra.mxu0 0
      %3243 = vmatprep.subr.bf16.mxu0 0
      %3244 = vmatpush1.bf16.msra.mxu0 0
      %3245 = vmatprep.subr.bf16.mxu0 0
      %3246 = vmatpush1.bf16.msra.mxu0 0
      %3247 = vmatprep.subr.bf16.mxu0 0
      %3248 = vmatpush1.bf16.msra.mxu0 0
      %3249 = vmatprep.subr.bf16.mxu0 0
      %3250 = vmatpush1.bf16.msra.mxu0 0
      %3251 = vmatprep.subr.bf16.mxu0 0
      %3252 = vmatpush1.bf16.msra.mxu0 0
      %3253 = vmatprep.mubr.bf16.mxu0 0
      %3254 = vmatmul.mubr.bf16.gmra.mrb[0].mxu0 %v3210
      %v3255 = vpop.f32.mrb[0].mxu0
      %v3256 = vadd.f32 0.0, %v3255
      %v3257 = vpop.f32.mrb[0].mxu0
      %v3258 = vpop.f32.mrb[0].mxu0
      %v3259 = vadd.f32 0.0, %v3258
      %v3260 = vpop.f32.mrb[0].mxu0
      %3261 = vmatprep.mubr.bf16.mxu0 0
      %3262 = vmatmul.mubr.bf16.gmra.mrb[0].mxu0 %v3213
      %v3263 = vpop.f32.mrb[0].mxu0
      %v3264 = vadd.f32 0.0, %v3263
      %v3265 = vpop.f32.mrb[0].mxu0
      %v3266 = vpop.f32.mrb[0].mxu0
      %v3267 = vadd.f32 0.0, %v3266
      %v3268 = vpop.f32.mrb[0].mxu0
      %3269 = vmatprep.mubr.bf16.mxu0 0
      %3270 = vmatmul.mubr.bf16.gmra.mrb[0].mxu0 %v3216
      %v3271 = vpop.f32.mrb[0].mxu0
      %v3272 = vadd.f32 0.0, %v3271
      %v3273 = vpop.f32.mrb[0].mxu0
      %v3274 = vpop.f32.mrb[0].mxu0
      %v3275 = vadd.f32 0.0, %v3274
      %v3276 = vpop.f32.mrb[0].mxu0
      %3277 = vmatprep.mubr.bf16.mxu0 0
      %3278 = vmatmul.mubr.bf16.gmra.mrb[0].mxu0 %v3219
      %v3279 = vpop.f32.mrb[0].mxu0
      %v3280 = vadd.f32 0.0, %v3279
      %v3281 = vpop.f32.mrb[0].mxu0
      %v3282 = vpop.f32.mrb[0].mxu0
      %v3283 = vadd.f32 0.0, %v3282
      %v3284 = vpop.f32.mrb[0].mxu0
      %3285 = vdwg.mxu0
      %v3286 = vadd.f32 %v3156, %v3256
      %v3287 = vadd.f32 %v3157, %v3259
      %v3288 = vadd.f32 %v3158, %v3264
      %v3289 = vadd.f32 %v3159, %v3267
      %v3290 = vadd.f32 %v3160, %v3272
      %v3291 = vadd.f32 %v3161, %v3275
      %v3292 = vadd.f32 %v3162, %v3280
      %v3293 = vadd.f32 %v3163, %v3283
      %v3294 = vld [vmem:[%s316 + $0x2] sm:$0xff]
      %v3295 = vld [vmem:[%s316 + $0x12] sm:$0xff]
      %v3296 = vld [vmem:[%s316 + $0x22] sm:$0xff]
      %v3297 = vld [vmem:[%s316 + $0x32] sm:$0xff]
      %v3298 = vld [vmem:[%s316 + $0x42] sm:$0xff]
      %v3299 = vld [vmem:[%s316 + $0x52] sm:$0xff]
      %v3300 = vld [vmem:[%s316 + $0x62] sm:$0xff]
      %v3301 = vld [vmem:[%s316 + $0x72] sm:$0xff]
      %v3302 = vpack.c.bf16 %v3294, %v3294
      %v3303 = vpack.c.bf16 %v3295, %v3295
      %v3304 = vpack.c.bf16 %v3296, %v3296
      %v3305 = vpack.c.bf16 %v3297, %v3297
      %v3306 = vpack.c.bf16 %v3298, %v3298
      %v3307 = vpack.c.bf16 %v3299, %v3299
      %v3308 = vpack.c.bf16 %v3300, %v3300
      %v3309 = vpack.c.bf16 %v3301, %v3301
      %s3310 = scalar_lea.vmem %s5, 40
      %v3311 = vld [vmem:[%s3310] sm:$0xf]
      %v3312 = vld [vmem:[%s3310 + $0x4] sm:$0xf]
      %v3321 = vunpack.c.l.b16 %v3302
      %v3322 = vunpack.c.l.b16 %v3303
      %v3323 = vunpack.c.l.b16 %v3304
      %v3324 = vunpack.c.l.b16 %v3305
      %v3325 = vunpack.c.l.b16 %v3306
      %v3326 = vunpack.c.l.b16 %v3307
      %v3327 = vunpack.c.l.b16 %v3308
      %v3328 = vunpack.c.l.b16 %v3309
      %v3329 = vpack.c.b16 %v3322, %v3321
      %v3330 = vpack.c.b16 %v3324, %v3323
      %v3331 = vpack.c.b16 %v3326, %v3325
      %v3332 = vpack.c.b16 %v3328, %v3327
      %v3335 = vunpack.c.l.b16 %v3311
      %v3336 = vunpack.c.l.b16 %v3312
      %v3337 = vpack.c.b16 %v3336, %v3335
      %v3340 = vsel %vm280, %v3329, 0
      %v3343 = vsel %vm280, %v3330, 0
      %v3346 = vsel %vm280, %v3331, 0
      %v3349 = vsel %vm280, %v3332, 0
      %3351 = vmatprep.subr.bf16.mxu0 0
      %3352 = vmatpush1.bf16.msra.mxu0 %v3337
      %3353 = vmatprep.subr.bf16.mxu0 0
      %3354 = vmatpush1.bf16.msra.mxu0 0
      %3355 = vmatprep.subr.bf16.mxu0 0
      %3356 = vmatpush1.bf16.msra.mxu0 0
      %3357 = vmatprep.subr.bf16.mxu0 0
      %3358 = vmatpush1.bf16.msra.mxu0 0
      %3359 = vmatprep.subr.bf16.mxu0 0
      %3360 = vmatpush1.bf16.msra.mxu0 0
      %3361 = vmatprep.subr.bf16.mxu0 0
      %3362 = vmatpush1.bf16.msra.mxu0 0
      %3363 = vmatprep.subr.bf16.mxu0 0
      %3364 = vmatpush1.bf16.msra.mxu0 0
      %3365 = vmatprep.subr.bf16.mxu0 0
      %3366 = vmatpush1.bf16.msra.mxu0 0
      %3367 = vmatprep.subr.bf16.mxu0 0
      %3368 = vmatpush1.bf16.msra.mxu0 0
      %3369 = vmatprep.subr.bf16.mxu0 0
      %3370 = vmatpush1.bf16.msra.mxu0 0
      %3371 = vmatprep.subr.bf16.mxu0 0
      %3372 = vmatpush1.bf16.msra.mxu0 0
      %3373 = vmatprep.subr.bf16.mxu0 0
      %3374 = vmatpush1.bf16.msra.mxu0 0
      %3375 = vmatprep.subr.bf16.mxu0 0
      %3376 = vmatpush1.bf16.msra.mxu0 0
      %3377 = vmatprep.subr.bf16.mxu0 0
      %3378 = vmatpush1.bf16.msra.mxu0 0
      %3379 = vmatprep.subr.bf16.mxu0 0
      %3380 = vmatpush1.bf16.msra.mxu0 0
      %3381 = vmatprep.subr.bf16.mxu0 0
      %3382 = vmatpush1.bf16.msra.mxu0 0
      %3383 = vmatprep.mubr.bf16.mxu0 0
      %3384 = vmatmul.mubr.bf16.gmra.mrb[0].mxu0 %v3340
      %v3385 = vpop.f32.mrb[0].mxu0
      %v3386 = vadd.f32 0.0, %v3385
      %v3387 = vpop.f32.mrb[0].mxu0
      %v3388 = vpop.f32.mrb[0].mxu0
      %v3389 = vadd.f32 0.0, %v3388
      %v3390 = vpop.f32.mrb[0].mxu0
      %3391 = vmatprep.mubr.bf16.mxu0 0
      %3392 = vmatmul.mubr.bf16.gmra.mrb[0].mxu0 %v3343
      %v3393 = vpop.f32.mrb[0].mxu0
      %v3394 = vadd.f32 0.0, %v3393
      %v3395 = vpop.f32.mrb[0].mxu0
      %v3396 = vpop.f32.mrb[0].mxu0
      %v3397 = vadd.f32 0.0, %v3396
      %v3398 = vpop.f32.mrb[0].mxu0
      %3399 = vmatprep.mubr.bf16.mxu0 0
      %3400 = vmatmul.mubr.bf16.gmra.mrb[0].mxu0 %v3346
      %v3401 = vpop.f32.mrb[0].mxu0
      %v3402 = vadd.f32 0.0, %v3401
      %v3403 = vpop.f32.mrb[0].mxu0
      %v3404 = vpop.f32.mrb[0].mxu0
      %v3405 = vadd.f32 0.0, %v3404
      %v3406 = vpop.f32.mrb[0].mxu0
      %3407 = vmatprep.mubr.bf16.mxu0 0
      %3408 = vmatmul.mubr.bf16.gmra.mrb[0].mxu0 %v3349
      %v3409 = vpop.f32.mrb[0].mxu0
      %v3410 = vadd.f32 0.0, %v3409
      %v3411 = vpop.f32.mrb[0].mxu0
      %v3412 = vpop.f32.mrb[0].mxu0
      %v3413 = vadd.f32 0.0, %v3412
      %v3414 = vpop.f32.mrb[0].mxu0
      %3415 = vdwg.mxu0
      %v3416 = vadd.f32 %v3286, %v3386
      %v3417 = vadd.f32 %v3287, %v3389
      %v3418 = vadd.f32 %v3288, %v3394
      %v3419 = vadd.f32 %v3289, %v3397
      %v3420 = vadd.f32 %v3290, %v3402
      %v3421 = vadd.f32 %v3291, %v3405
      %v3422 = vadd.f32 %v3292, %v3410
      %v3423 = vadd.f32 %v3293, %v3413
      %v3424 = vld [vmem:[%s1067] sm:$0xff]
      %v3425 = vld [vmem:[%s1067 + $0x10] sm:$0xff]
      %v3426 = vld [vmem:[%s1067 + $0x20] sm:$0xff]
      %v3427 = vld [vmem:[%s1067 + $0x30] sm:$0xff]
      %v3428 = vld [vmem:[%s1067 + $0x40] sm:$0xff]
      %v3429 = vld [vmem:[%s1067 + $0x50] sm:$0xff]
      %v3430 = vld [vmem:[%s1067 + $0x60] sm:$0xff]
      %v3431 = vld [vmem:[%s1067 + $0x70] sm:$0xff]
      %v3432 = vpack.c.bf16 %v3424, %v3424
      %v3433 = vpack.c.bf16 %v3425, %v3425
      %v3434 = vpack.c.bf16 %v3426, %v3426
      %v3435 = vpack.c.bf16 %v3427, %v3427
      %v3436 = vpack.c.bf16 %v3428, %v3428
      %v3437 = vpack.c.bf16 %v3429, %v3429
      %v3438 = vpack.c.bf16 %v3430, %v3430
      %v3439 = vpack.c.bf16 %v3431, %v3431
      %s3440 = scalar_lea.vmem %s5, 48
      %v3441 = vld [vmem:[%s3440] sm:$0xf]
      %v3442 = vld [vmem:[%s3440 + $0x4] sm:$0xf]
      %v3451 = vunpack.c.l.b16 %v3432
      %v3452 = vunpack.c.l.b16 %v3433
      %v3453 = vunpack.c.l.b16 %v3434
      %v3454 = vunpack.c.l.b16 %v3435
      %v3455 = vunpack.c.l.b16 %v3436
      %v3456 = vunpack.c.l.b16 %v3437
      %v3457 = vunpack.c.l.b16 %v3438
      %v3458 = vunpack.c.l.b16 %v3439
      %v3459 = vpack.c.b16 %v3452, %v3451
      %v3460 = vpack.c.b16 %v3454, %v3453
      %v3461 = vpack.c.b16 %v3456, %v3455
      %v3462 = vpack.c.b16 %v3458, %v3457
      %v3465 = vunpack.c.l.b16 %v3441
      %v3466 = vunpack.c.l.b16 %v3442
      %v3467 = vpack.c.b16 %v3466, %v3465
      %v3470 = vsel %vm280, %v3459, 0
      %v3473 = vsel %vm280, %v3460, 0
      %v3476 = vsel %vm280, %v3461, 0
      %v3479 = vsel %vm280, %v3462, 0
      %3481 = vmatprep.subr.bf16.mxu0 0
      %3482 = vmatpush1.bf16.msra.mxu0 %v3467
      %3483 = vmatprep.subr.bf16.mxu0 0
      %3484 = vmatpush1.bf16.msra.mxu0 0
      %3485 = vmatprep.subr.bf16.mxu0 0
      %3486 = vmatpush1.bf16.msra.mxu0 0
      %3487 = vmatprep.subr.bf16.mxu0 0
      %3488 = vmatpush1.bf16.msra.mxu0 0
      %3489 = vmatprep.subr.bf16.mxu0 0
      %3490 = vmatpush1.bf16.msra.mxu0 0
      %3491 = vmatprep.subr.bf16.mxu0 0
      %3492 = vmatpush1.bf16.msra.mxu0 0
      %3493 = vmatprep.subr.bf16.mxu0 0
      %3494 = vmatpush1.bf16.msra.mxu0 0
      %3495 = vmatprep.subr.bf16.mxu0 0
      %3496 = vmatpush1.bf16.msra.mxu0 0
      %3497 = vmatprep.subr.bf16.mxu0 0
      %3498 = vmatpush1.bf16.msra.mxu0 0
      %3499 = vmatprep.subr.bf16.mxu0 0
      %3500 = vmatpush1.bf16.msra.mxu0 0
      %3501 = vmatprep.subr.bf16.mxu0 0
      %3502 = vmatpush1.bf16.msra.mxu0 0
      %3503 = vmatprep.subr.bf16.mxu0 0
      %3504 = vmatpush1.bf16.msra.mxu0 0
      %3505 = vmatprep.subr.bf16.mxu0 0
      %3506 = vmatpush1.bf16.msra.mxu0 0
      %3507 = vmatprep.subr.bf16.mxu0 0
      %3508 = vmatpush1.bf16.msra.mxu0 0
      %3509 = vmatprep.subr.bf16.mxu0 0
      %3510 = vmatpush1.bf16.msra.mxu0 0
      %3511 = vmatprep.subr.bf16.mxu0 0
      %3512 = vmatpush1.bf16.msra.mxu0 0
      %3513 = vmatprep.mubr.bf16.mxu0 0
      %3514 = vmatmul.mubr.bf16.gmra.mrb[0].mxu0 %v3470
      %v3515 = vpop.f32.mrb[0].mxu0
      %v3516 = vadd.f32 0.0, %v3515
      %v3517 = vpop.f32.mrb[0].mxu0
      %v3518 = vpop.f32.mrb[0].mxu0
      %v3519 = vadd.f32 0.0, %v3518
      %v3520 = vpop.f32.mrb[0].mxu0
      %3521 = vmatprep.mubr.bf16.mxu0 0
      %3522 = vmatmul.mubr.bf16.gmra.mrb[0].mxu0 %v3473
      %v3523 = vpop.f32.mrb[0].mxu0
      %v3524 = vadd.f32 0.0, %v3523
      %v3525 = vpop.f32.mrb[0].mxu0
      %v3526 = vpop.f32.mrb[0].mxu0
      %v3527 = vadd.f32 0.0, %v3526
      %v3528 = vpop.f32.mrb[0].mxu0
      %3529 = vmatprep.mubr.bf16.mxu0 0
      %3530 = vmatmul.mubr.bf16.gmra.mrb[0].mxu0 %v3476
      %v3531 = vpop.f32.mrb[0].mxu0
      %v3532 = vadd.f32 0.0, %v3531
      %v3533 = vpop.f32.mrb[0].mxu0
      %v3534 = vpop.f32.mrb[0].mxu0
      %v3535 = vadd.f32 0.0, %v3534
      %v3536 = vpop.f32.mrb[0].mxu0
      %3537 = vmatprep.mubr.bf16.mxu0 0
      %3538 = vmatmul.mubr.bf16.gmra.mrb[0].mxu0 %v3479
      %v3539 = vpop.f32.mrb[0].mxu0
      %v3540 = vadd.f32 0.0, %v3539
      %v3541 = vpop.f32.mrb[0].mxu0
      %v3542 = vpop.f32.mrb[0].mxu0
      %v3543 = vadd.f32 0.0, %v3542
      %v3544 = vpop.f32.mrb[0].mxu0
      %3545 = vdwg.mxu0
      %v3546 = vadd.f32 %v3416, %v3516
      %v3547 = vadd.f32 %v3417, %v3519
      %v3548 = vadd.f32 %v3418, %v3524
      %v3549 = vadd.f32 %v3419, %v3527
      %v3550 = vadd.f32 %v3420, %v3532
      %v3551 = vadd.f32 %v3421, %v3535
      %v3552 = vadd.f32 %v3422, %v3540
      %v3553 = vadd.f32 %v3423, %v3543
      %v3554 = vld [vmem:[%s1067 + $0x1] sm:$0xff]
      %v3555 = vld [vmem:[%s1067 + $0x11] sm:$0xff]
      %v3556 = vld [vmem:[%s1067 + $0x21] sm:$0xff]
      %v3557 = vld [vmem:[%s1067 + $0x31] sm:$0xff]
      %v3558 = vld [vmem:[%s1067 + $0x41] sm:$0xff]
      %v3559 = vld [vmem:[%s1067 + $0x51] sm:$0xff]
      %v3560 = vld [vmem:[%s1067 + $0x61] sm:$0xff]
      %v3561 = vld [vmem:[%s1067 + $0x71] sm:$0xff]
      %v3562 = vpack.c.bf16 %v3554, %v3554
      %v3563 = vpack.c.bf16 %v3555, %v3555
      %v3564 = vpack.c.bf16 %v3556, %v3556
      %v3565 = vpack.c.bf16 %v3557, %v3557
      %v3566 = vpack.c.bf16 %v3558, %v3558
      %v3567 = vpack.c.bf16 %v3559, %v3559
      %v3568 = vpack.c.bf16 %v3560, %v3560
      %v3569 = vpack.c.bf16 %v3561, %v3561
      %s3570 = scalar_lea.vmem %s5, 56
      %v3571 = vld [vmem:[%s3570] sm:$0xf]
      %v3572 = vld [vmem:[%s3570 + $0x4] sm:$0xf]
      %v3581 = vunpack.c.l.b16 %v3562
      %v3582 = vunpack.c.l.b16 %v3563
      %v3583 = vunpack.c.l.b16 %v3564
      %v3584 = vunpack.c.l.b16 %v3565
      %v3585 = vunpack.c.l.b16 %v3566
      %v3586 = vunpack.c.l.b16 %v3567
      %v3587 = vunpack.c.l.b16 %v3568
      %v3588 = vunpack.c.l.b16 %v3569
      %v3589 = vpack.c.b16 %v3582, %v3581
      %v3590 = vpack.c.b16 %v3584, %v3583
      %v3591 = vpack.c.b16 %v3586, %v3585
      %v3592 = vpack.c.b16 %v3588, %v3587
      %v3595 = vunpack.c.l.b16 %v3571
      %v3596 = vunpack.c.l.b16 %v3572
      %v3597 = vpack.c.b16 %v3596, %v3595
      %v3600 = vsel %vm280, %v3589, 0
      %v3603 = vsel %vm280, %v3590, 0
      %v3606 = vsel %vm280, %v3591, 0
      %v3609 = vsel %vm280, %v3592, 0
      %3611 = vmatprep.subr.bf16.mxu0 0
      %3612 = vmatpush1.bf16.msra.mxu0 %v3597
      %3613 = vmatprep.subr.bf16.mxu0 0
      %3614 = vmatpush1.bf16.msra.mxu0 0
      %3615 = vmatprep.subr.bf16.mxu0 0
      %3616 = vmatpush1.bf16.msra.mxu0 0
      %3617 = vmatprep.subr.bf16.mxu0 0
      %3618 = vmatpush1.bf16.msra.mxu0 0
      %3619 = vmatprep.subr.bf16.mxu0 0
      %3620 = vmatpush1.bf16.msra.mxu0 0
      %3621 = vmatprep.subr.bf16.mxu0 0
      %3622 = vmatpush1.bf16.msra.mxu0 0
      %3623 = vmatprep.subr.bf16.mxu0 0
      %3624 = vmatpush1.bf16.msra.mxu0 0
      %3625 = vmatprep.subr.bf16.mxu0 0
      %3626 = vmatpush1.bf16.msra.mxu0 0
      %3627 = vmatprep.subr.bf16.mxu0 0
      %3628 = vmatpush1.bf16.msra.mxu0 0
      %3629 = vmatprep.subr.bf16.mxu0 0
      %3630 = vmatpush1.bf16.msra.mxu0 0
      %3631 = vmatprep.subr.bf16.mxu0 0
      %3632 = vmatpush1.bf16.msra.mxu0 0
      %3633 = vmatprep.subr.bf16.mxu0 0
      %3634 = vmatpush1.bf16.msra.mxu0 0
      %3635 = vmatprep.subr.bf16.mxu0 0
      %3636 = vmatpush1.bf16.msra.mxu0 0
      %3637 = vmatprep.subr.bf16.mxu0 0
      %3638 = vmatpush1.bf16.msra.mxu0 0
      %3639 = vmatprep.subr.bf16.mxu0 0
      %3640 = vmatpush1.bf16.msra.mxu0 0
      %3641 = vmatprep.subr.bf16.mxu0 0
      %3642 = vmatpush1.bf16.msra.mxu0 0
      %3643 = vmatprep.mubr.bf16.mxu0 0
      %3644 = vmatmul.mubr.bf16.gmra.mrb[0].mxu0 %v3600
      %v3645 = vpop.f32.mrb[0].mxu0
      %v3646 = vadd.f32 0.0, %v3645
      %v3647 = vpop.f32.mrb[0].mxu0
      %v3648 = vpop.f32.mrb[0].mxu0
      %v3649 = vadd.f32 0.0, %v3648
      %v3650 = vpop.f32.mrb[0].mxu0
      %3651 = vmatprep.mubr.bf16.mxu0 0
      %3652 = vmatmul.mubr.bf16.gmra.mrb[0].mxu0 %v3603
      %v3653 = vpop.f32.mrb[0].mxu0
      %v3654 = vadd.f32 0.0, %v3653
      %v3655 = vpop.f32.mrb[0].mxu0
      %v3656 = vpop.f32.mrb[0].mxu0
      %v3657 = vadd.f32 0.0, %v3656
      %v3658 = vpop.f32.mrb[0].mxu0
      %3659 = vmatprep.mubr.bf16.mxu0 0
      %3660 = vmatmul.mubr.bf16.gmra.mrb[0].mxu0 %v3606
      %v3661 = vpop.f32.mrb[0].mxu0
      %v3662 = vadd.f32 0.0, %v3661
      %v3663 = vpop.f32.mrb[0].mxu0
      %v3664 = vpop.f32.mrb[0].mxu0
      %v3665 = vadd.f32 0.0, %v3664
      %v3666 = vpop.f32.mrb[0].mxu0
      %3667 = vmatprep.mubr.bf16.mxu0 0
      %3668 = vmatmul.mubr.bf16.gmra.mrb[0].mxu0 %v3609
      %v3669 = vpop.f32.mrb[0].mxu0
      %v3670 = vadd.f32 0.0, %v3669
      %v3671 = vpop.f32.mrb[0].mxu0
      %v3672 = vpop.f32.mrb[0].mxu0
      %v3673 = vadd.f32 0.0, %v3672
      %v3674 = vpop.f32.mrb[0].mxu0
      %3675 = vdwg.mxu0
      %v3676 = vadd.f32 %v3546, %v3646
      %v3677 = vadd.f32 %v3547, %v3649
      %v3678 = vadd.f32 %v3548, %v3654
      %v3679 = vadd.f32 %v3549, %v3657
      %v3680 = vadd.f32 %v3550, %v3662
      %v3681 = vadd.f32 %v3551, %v3665
      %v3682 = vadd.f32 %v3552, %v3670
      %v3683 = vadd.f32 %v3553, %v3673
      %v3684 = vld [vmem:[%s1067 + $0x2] sm:$0xff]
      %v3685 = vld [vmem:[%s1067 + $0x12] sm:$0xff]
      %v3686 = vld [vmem:[%s1067 + $0x22] sm:$0xff]
      %v3687 = vld [vmem:[%s1067 + $0x32] sm:$0xff]
      %v3688 = vld [vmem:[%s1067 + $0x42] sm:$0xff]
      %v3689 = vld [vmem:[%s1067 + $0x52] sm:$0xff]
      %v3690 = vld [vmem:[%s1067 + $0x62] sm:$0xff]
      %v3691 = vld [vmem:[%s1067 + $0x72] sm:$0xff]
      %v3692 = vpack.c.bf16 %v3684, %v3684
      %v3693 = vpack.c.bf16 %v3685, %v3685
      %v3694 = vpack.c.bf16 %v3686, %v3686
      %v3695 = vpack.c.bf16 %v3687, %v3687
      %v3696 = vpack.c.bf16 %v3688, %v3688
      %v3697 = vpack.c.bf16 %v3689, %v3689
      %v3698 = vpack.c.bf16 %v3690, %v3690
      %v3699 = vpack.c.bf16 %v3691, %v3691
      %s3700 = scalar_lea.vmem %s5, 64
      %v3701 = vld [vmem:[%s3700] sm:$0xf]
      %v3702 = vld [vmem:[%s3700 + $0x4] sm:$0xf]
      %v3711 = vunpack.c.l.b16 %v3692
      %v3712 = vunpack.c.l.b16 %v3693
      %v3713 = vunpack.c.l.b16 %v3694
      %v3714 = vunpack.c.l.b16 %v3695
      %v3715 = vunpack.c.l.b16 %v3696
      %v3716 = vunpack.c.l.b16 %v3697
      %v3717 = vunpack.c.l.b16 %v3698
      %v3718 = vunpack.c.l.b16 %v3699
      %v3719 = vpack.c.b16 %v3712, %v3711
      %v3720 = vpack.c.b16 %v3714, %v3713
      %v3721 = vpack.c.b16 %v3716, %v3715
      %v3722 = vpack.c.b16 %v3718, %v3717
      %v3725 = vunpack.c.l.b16 %v3701
      %v3726 = vunpack.c.l.b16 %v3702
      %v3727 = vpack.c.b16 %v3726, %v3725
      %v3730 = vsel %vm280, %v3719, 0
      %v3733 = vsel %vm280, %v3720, 0
      %v3736 = vsel %vm280, %v3721, 0
      %v3739 = vsel %vm280, %v3722, 0
      %3741 = vmatprep.subr.bf16.mxu0 0
      %3742 = vmatpush1.bf16.msra.mxu0 %v3727
      %3743 = vmatprep.subr.bf16.mxu0 0
      %3744 = vmatpush1.bf16.msra.mxu0 0
      %3745 = vmatprep.subr.bf16.mxu0 0
      %3746 = vmatpush1.bf16.msra.mxu0 0
      %3747 = vmatprep.subr.bf16.mxu0 0
      %3748 = vmatpush1.bf16.msra.mxu0 0
      %3749 = vmatprep.subr.bf16.mxu0 0
      %3750 = vmatpush1.bf16.msra.mxu0 0
      %3751 = vmatprep.subr.bf16.mxu0 0
      %3752 = vmatpush1.bf16.msra.mxu0 0
      %3753 = vmatprep.subr.bf16.mxu0 0
      %3754 = vmatpush1.bf16.msra.mxu0 0
      %3755 = vmatprep.subr.bf16.mxu0 0
      %3756 = vmatpush1.bf16.msra.mxu0 0
      %3757 = vmatprep.subr.bf16.mxu0 0
      %3758 = vmatpush1.bf16.msra.mxu0 0
      %3759 = vmatprep.subr.bf16.mxu0 0
      %3760 = vmatpush1.bf16.msra.mxu0 0
      %3761 = vmatprep.subr.bf16.mxu0 0
      %3762 = vmatpush1.bf16.msra.mxu0 0
      %3763 = vmatprep.subr.bf16.mxu0 0
      %3764 = vmatpush1.bf16.msra.mxu0 0
      %3765 = vmatprep.subr.bf16.mxu0 0
      %3766 = vmatpush1.bf16.msra.mxu0 0
      %3767 = vmatprep.subr.bf16.mxu0 0
      %3768 = vmatpush1.bf16.msra.mxu0 0
      %3769 = vmatprep.subr.bf16.mxu0 0
      %3770 = vmatpush1.bf16.msra.mxu0 0
      %3771 = vmatprep.subr.bf16.mxu0 0
      %3772 = vmatpush1.bf16.msra.mxu0 0
      %3773 = vmatprep.mubr.bf16.mxu0 0
      %3774 = vmatmul.mubr.bf16.gmra.mrb[0].mxu0 %v3730
      %v3775 = vpop.f32.mrb[0].mxu0
      %v3776 = vadd.f32 0.0, %v3775
      %v3777 = vpop.f32.mrb[0].mxu0
      %v3778 = vpop.f32.mrb[0].mxu0
      %v3779 = vadd.f32 0.0, %v3778
      %v3780 = vpop.f32.mrb[0].mxu0
      %3781 = vmatprep.mubr.bf16.mxu0 0
      %3782 = vmatmul.mubr.bf16.gmra.mrb[0].mxu0 %v3733
      %v3783 = vpop.f32.mrb[0].mxu0
      %v3784 = vadd.f32 0.0, %v3783
      %v3785 = vpop.f32.mrb[0].mxu0
      %v3786 = vpop.f32.mrb[0].mxu0
      %v3787 = vadd.f32 0.0, %v3786
      %v3788 = vpop.f32.mrb[0].mxu0
      %3789 = vmatprep.mubr.bf16.mxu0 0
      %3790 = vmatmul.mubr.bf16.gmra.mrb[0].mxu0 %v3736
      %v3791 = vpop.f32.mrb[0].mxu0
      %v3792 = vadd.f32 0.0, %v3791
      %v3793 = vpop.f32.mrb[0].mxu0
      %v3794 = vpop.f32.mrb[0].mxu0
      %v3795 = vadd.f32 0.0, %v3794
      %v3796 = vpop.f32.mrb[0].mxu0
      %3797 = vmatprep.mubr.bf16.mxu0 0
      %3798 = vmatmul.mubr.bf16.gmra.mrb[0].mxu0 %v3739
      %v3799 = vpop.f32.mrb[0].mxu0
      %v3800 = vadd.f32 0.0, %v3799
      %v3801 = vpop.f32.mrb[0].mxu0
      %v3802 = vpop.f32.mrb[0].mxu0
      %v3803 = vadd.f32 0.0, %v3802
      %v3804 = vpop.f32.mrb[0].mxu0
      %3805 = vdwg.mxu0
      %v3806 = vadd.f32 %v3676, %v3776
      %v3807 = vadd.f32 %v3677, %v3779
      %v3808 = vadd.f32 %v3678, %v3784
      %v3809 = vadd.f32 %v3679, %v3787
      %v3810 = vadd.f32 %v3680, %v3792
      %v3811 = vadd.f32 %v3681, %v3795
      %v3812 = vadd.f32 %v3682, %v3800
      %v3813 = vadd.f32 %v3683, %v3803
      %v3815 = vlaneseq
      %v3816 = vshrl.u32 %v3815, 7
      %v3817 = vsub.s32 0, %v3816
      %v3818 = vrot.slane %v2660, %v3817
      %v3820 = vadd.f32 %v3806, %v3818
      %v3821 = vadd.f32 %v3807, %v3818
      %v3822 = vadd.f32 %v3808, %v3818
      %v3823 = vadd.f32 %v3809, %v3818
      %v3824 = vadd.f32 %v3810, %v3818
      %v3825 = vadd.f32 %v3811, %v3818
      %v3826 = vadd.f32 %v3812, %v3818
      %v3827 = vadd.f32 %v3813, %v3818
      %v3828 = vadd.f32 %v3820, %v308
      %v3829 = vadd.f32 %v3821, %v309
      %v3830 = vadd.f32 %v3822, %v310
      %v3831 = vadd.f32 %v3823, %v311
      %v3832 = vadd.f32 %v3824, %v312
      %v3833 = vadd.f32 %v3825, %v313
      %v3834 = vadd.f32 %v3826, %v314
      %v3835 = vadd.f32 %v3827, %v315
      %3836 = vst.msk [vmem:[%s278] sm:$0xff] %vm317, %v3828
      %3837 = vst.msk [vmem:[%s278 + $0x8] sm:$0xff] %vm317, %v3829
      %3838 = vst.msk [vmem:[%s278 + $0x10] sm:$0xff] %vm317, %v3830
      %3839 = vst.msk [vmem:[%s278 + $0x18] sm:$0xff] %vm317, %v3831
      %3840 = vst.msk [vmem:[%s278 + $0x20] sm:$0xff] %vm317, %v3832
      %3841 = vst.msk [vmem:[%s278 + $0x28] sm:$0xff] %vm317, %v3833
      %3842 = vst.msk [vmem:[%s278 + $0x30] sm:$0xff] %vm317, %v3834
      %3843 = vst.msk [vmem:[%s278 + $0x38] sm:$0xff] %vm317, %v3835
      %p3844 = scmp.lt.s32.totalorder %s18, 5
      %s3845 = scalar_select %p3844, %s18, 5
      %s3846 = smul.addr %s3845, 8
      %s3847 = smul.addr %s3846, 8
      %s3848 = scalar_lea.vmem %s7, %s3847
      // Predicated region
      $region49: #{tpu_custom_call.1} parent=47 // pred_check
        %p3849 = pneg %p188
      $region50: #{tpu_custom_call.1} parent=47 // pred_check_branch
        %3851 = sbr.rel (%p3849) target = $region52
      $region51: #{tpu_custom_call.1} parent=47 // pred_region
        _
      $region52: #{tpu_custom_call.1} parent=47 // pred_fallthru
        _
    $region48: #{tpu_custom_call.1} parent=5 // pred_fallthru
      _
    %p3852 = scmp.le.s32.totalorder 2, %s13
    // Predicated region
    $region53: #{tpu_custom_call.1} parent=5 // pred_check
      %p3853 = pneg %p3852
    $region54: #{tpu_custom_call.1} parent=5 // pred_check_branch
      %3855 = sbr.rel (%p3853) target = $region56
    $region55: #{tpu_custom_call.1} parent=5 // pred_region
      %s3856 = ssub.s32 %s13, 2
      // Predicated region
      $region57: #{tpu_custom_call.1} parent=55 // pred_check
        %p3857 = pneg %p194
      $region58: #{tpu_custom_call.1} parent=55 // pred_check_branch
        %3859 = sbr.rel (%p3857) target = $region60
      $region59: #{tpu_custom_call.1} parent=55 // pred_region
        %p3860 = scmp.lt.s32.totalorder %s19, 5
        %s3861 = scalar_select %p3860, %s19, 5
        %s3862 = smul.addr %s3861, 8
        %s3863 = smul.addr %s3862, 8
        %s3864 = scalar_lea.vmem %s7, %s3863
      $region60: #{tpu_custom_call.1} parent=55 // pred_fallthru
        _
    $region56: #{tpu_custom_call.1} parent=5 // pred_fallthru
      _
  $region6: #{tpu_custom_call.1} parent=0 // loop_footer
    %s17 = sadd.s32 1, %s13
  $region7: #{tpu_custom_call.1} parent=0 // loop_footer_branch
    %12 = sbr.rel target = $region3
  $region8: #{tpu_custom_call.1} parent=0 // loop_exit
    _

</llo_original>
